<compile_context>
chip_gen: v7x
topology: tpu7x:2x2x1
jax: 0.10.0
libtpu: 0.0.40
codegen_flags: <defaults>
</compile_context>

<pallas_src>
import jax
import jax.numpy as jnp
from jax import lax
from jax.experimental import pallas as pl
from jax.experimental.pallas import tpu as pltpu

# ----------------------------- configuration --------------------------------
D = 128            # embed dim (multiple of num_heads)
MLP_D = 256        # mlp hidden dim
H = 8              # attention heads
DH = D // H        # head dim (16)
NUM_CENTER = 7     # -> N = 8 tokens (1 cls + 7 centers)
N = NUM_CENTER + 1
M = 8              # condition tokens
L = N + M          # concatenated sequence length (16)
DEPTH = 2
B = 2
LN_EPS = 1e-5
NEG = -1e30
SCALE = 1.0 / float(DH) ** 0.5
VEC_ROWS = 4       # rows of the packed "vector params" slab

assert N % 8 == 0 and L % 8 == 0 and D % 128 == 0 and H * L == 128


# ----------------------------- in-kernel helpers -----------------------------
def _erf(z):
    # Abramowitz & Stegun 7.1.26 polynomial (|err| < 1.5e-7).
    a1, a2, a3, a4, a5 = 0.254829592, -0.284496736, 1.421413741, -1.453152027, 1.061405429
    p = 0.3275911
    sgn = jnp.where(z >= 0.0, 1.0, -1.0)
    za = jnp.abs(z)
    t = 1.0 / (1.0 + p * za)
    poly = ((((a5 * t + a4) * t + a3) * t + a2) * t + a1) * t
    return sgn * (1.0 - poly * jnp.exp(-za * za))


def _gelu(x):
    # exact (erf-based) GELU, matching nn.GELU() defaults
    return 0.5 * x * (1.0 + _erf(x * 0.7071067811865476))


def _layernorm(x, g, b):
    mu = jnp.mean(x, axis=-1, keepdims=True)
    xc = x - mu
    var = jnp.mean(xc * xc, axis=-1, keepdims=True)
    return xc * lax.rsqrt(var + LN_EPS) * g + b


def _abT(a, b):
    # a @ b.T via dot_general (no explicit transpose)
    return lax.dot_general(a, b, (((1,), (1,)), ((), ())),
                           preferred_element_type=jnp.float32)


def _rep_rows(a, reps):
    # sublane-tile (Lk, D) -> (reps*Lk, D); axis-0 concat is a plain sublane copy
    return jnp.concatenate([a] * reps, axis=0)


def _mha_wide(q2d, k2d, v2d, hm_ref, add_mask):
    """Multi-head attention in lane-wide form.

    q2d: (Lq, D), k2d/v2d: (Lk, D), hm_ref: (H*Lk, D) block-diagonal head mask
    (1.0 where lane-group == head of the row, 0.0 elsewhere), add_mask:
    (1, H*Lk) additive key-padding mask or None.  Per-head scores are laid out
    side-by-side along lanes -> one scores matmul, one 128-lane softmax, one
    denominator matmul, one PV matmul, zero transposes.
    """
    hm = hm_ref[...]                                    # (H*Lk, D) f32
    kb = _rep_rows(k2d, H) * hm                         # (H*Lk, D) block-diag K
    vb = (_rep_rows(v2d, H) * hm).astype(jnp.bfloat16)  # (H*Lk, D) block-diag V
    s = _abT(q2d, kb) * SCALE                           # (Lq, H*Lk) per-head scores
    if add_mask is not None:
        s = s + add_mask
    # TODO(synk): a shared per-row max stabilizer is exact per-head softmax as
    # long as no head's whole segment underflows (>~85 nats spread) — safe for
    # LayerNormed activations.
    s = s - jnp.max(s, axis=-1, keepdims=True)
    p = jnp.exp(s)
    den = jnp.dot(p, hm, preferred_element_type=jnp.float32)        # (Lq, D)
    o = jnp.dot(p.astype(jnp.bfloat16), vb,
                preferred_element_type=jnp.float32)                 # (Lq, D)
    return o * pl.reciprocal(den, approx=True)


# ------------------------------- the kernel ----------------------------------
def vipcf_encoder_kernel(x_ref, c_ref, amv_ref, amu_ref, qvm_ref, qum_ref,
                         hmn_ref, hml_ref,
                         wqkv0_ref, wqkv12_ref, wout_ref, wm1_ref, wm2_ref,
                         vec_ref, wtok_ref, out_ref):
    x = x_ref[0]                      # (N, D) f32
    c = c_ref[0]                      # (M, D) f32
    am_vis = amv_ref[0]               # (1, H*L) additive key mask (visible)
    am_unv = amu_ref[0]               # (1, H*L) additive key mask (unvisible)
    q_vis_m = qvm_ref[0]              # (N, 1) query keep multiplier (visible)
    q_unv_m = qum_ref[0]              # (N, 1) query keep multiplier (unvisible)

    for d in range(DEPTH):            # depth fused inside one launch (unrolled)
        b_qkv_vu = vec_ref[d, 0:1, :]                     # (1, 6D)
        b_qkv0 = vec_ref[d, 1:2, 0:3 * D]                 # (1, 3D)
        bout0 = vec_ref[d, 1:2, 3 * D:4 * D]
        bout1 = vec_ref[d, 1:2, 4 * D:5 * D]
        bout2 = vec_ref[d, 1:2, 5 * D:6 * D]
        ln1_g = vec_ref[d, 2:3, 0:D]
        ln1_b = vec_ref[d, 2:3, D:2 * D]
        ln2_g = vec_ref[d, 2:3, 2 * D:3 * D]
        ln2_b = vec_ref[d, 2:3, 3 * D:4 * D]
        ln3_g = vec_ref[d, 2:3, 4 * D:5 * D]
        ln3_b = vec_ref[d, 2:3, 5 * D:6 * D]
        b_mlp1 = vec_ref[d, 3:4, 0:MLP_D]
        b_mlp2 = vec_ref[d, 3:4, MLP_D:MLP_D + D]
        w_tok = wtok_ref[d]                               # (N, 1)

        # ---- x = x + mha(norm1(x)) ----
        h1 = _layernorm(x, ln1_g, ln1_b)
        qkv = jnp.dot(h1.astype(jnp.bfloat16), wqkv0_ref[d],
                      preferred_element_type=jnp.float32) + b_qkv0   # (N, 3D)
        o0 = _mha_wide(qkv[:, 0:D], qkv[:, D:2 * D], qkv[:, 2 * D:3 * D],
                       hmn_ref, None)
        x = x + jnp.dot(o0.astype(jnp.bfloat16), wout_ref[d, 0],
                        preferred_element_type=jnp.float32) + bout0

        # ---- x = norm2(x) ----
        x = _layernorm(x, ln2_g, ln2_b)

        # ---- visible / unvisible attention over cat([x, c]) ----
        cat = jnp.concatenate([x, c], axis=0)             # (L, D)
        qkv6 = jnp.dot(cat.astype(jnp.bfloat16), wqkv12_ref[d],
                       preferred_element_type=jnp.float32) + b_qkv_vu  # (L, 6D)
        # only the first N query rows are ever used by the block output
        o_vis = _mha_wide(qkv6[0:N, 0:D], qkv6[:, D:2 * D], qkv6[:, 2 * D:3 * D],
                          hml_ref, am_vis)
        o_unv = _mha_wide(qkv6[0:N, 3 * D:4 * D], qkv6[:, 4 * D:5 * D],
                          qkv6[:, 5 * D:6 * D], hml_ref, am_unv)
        av = jnp.dot(o_vis.astype(jnp.bfloat16), wout_ref[d, 1],
                     preferred_element_type=jnp.float32) + bout1
        au = jnp.dot(o_unv.astype(jnp.bfloat16), wout_ref[d, 2],
                     preferred_element_type=jnp.float32) + bout2
        x = x + av * q_vis_m + w_tok * (au * q_unv_m)

        # ---- x = x + mlp(norm3(x)) ----
        h3 = _layernorm(x, ln3_g, ln3_b)
        hid = _gelu(jnp.dot(h3.astype(jnp.bfloat16), wm1_ref[d],
                            preferred_element_type=jnp.float32) + b_mlp1)
        x = x + jnp.dot(hid.astype(jnp.bfloat16), wm2_ref[d],
                        preferred_element_type=jnp.float32) + b_mlp2

    out_ref[0] = x


# ------------------------------ wrapper / glue --------------------------------
def build_encoder_call():
    c2 = lambda b: (0, 0)
    c3 = lambda b: (0, 0, 0)
    c4 = lambda b: (0, 0, 0, 0)
    bsel = lambda b: (b, 0, 0)
    in_specs = [
        pl.BlockSpec((1, N, D), bsel),                 # x
        pl.BlockSpec((1, M, D), bsel),                 # condition
        pl.BlockSpec((1, 1, H * L), bsel),             # additive key mask (visible)
        pl.BlockSpec((1, 1, H * L), bsel),             # additive key mask (unvisible)
        pl.BlockSpec((1, N, 1), bsel),                 # query keep mult (visible)
        pl.BlockSpec((1, N, 1), bsel),                 # query keep mult (unvisible)
        pl.BlockSpec((H * N, D), c2),                  # head block-diag mask, Lk=N
        pl.BlockSpec((H * L, D), c2),                  # head block-diag mask, Lk=L
        pl.BlockSpec((DEPTH, D, 3 * D), c3),           # self-attn QKV weights (bf16)
        pl.BlockSpec((DEPTH, D, 6 * D), c3),           # fused vis|unv QKV weights (bf16)
        pl.BlockSpec((DEPTH, 3, D, D), c4),            # out-proj weights (bf16)
        pl.BlockSpec((DEPTH, D, MLP_D), c3),           # mlp w1 (bf16)
        pl.BlockSpec((DEPTH, MLP_D, D), c3),           # mlp w2 (bf16)
        pl.BlockSpec((DEPTH, VEC_ROWS, 6 * D), c3),    # packed biases / LN params (f32)
        pl.BlockSpec((DEPTH, N, 1), c3),               # per-token w
    ]
    return pl.pallas_call(
        vipcf_encoder_kernel,
        out_shape=jax.ShapeDtypeStruct((B, N, D), jnp.float32),
        grid_spec=pltpu.PrefetchScalarGridSpec(
            num_scalar_prefetch=0,
            grid=(B,),
            in_specs=in_specs,
            out_specs=pl.BlockSpec((1, N, D), bsel),
        ),
        compiler_params=pltpu.CompilerParams(
            dimension_semantics=("parallel",)),
    )


def make_head_mask(lk):
    """(H*lk, D) block-diagonal mask: 1.0 where lane's head == row's head."""
    r = jnp.arange(H * lk, dtype=jnp.int32)[:, None] // lk
    d_ = jnp.arange(D, dtype=jnp.int32)[None, :] // DH
    return (r == d_).astype(jnp.float32)


def init_block_params(key):
    ks = jax.random.split(key, 16)
    s = 0.05

    def nrm(k, shape, scale=s):
        return scale * jax.random.normal(k, shape, jnp.float32)

    return {
        "ln1_g": 1.0 + 0.1 * jax.random.normal(ks[0], (D,), jnp.float32),
        "ln1_b": 0.1 * jax.random.normal(ks[1], (D,), jnp.float32),
        "ln2_g": 1.0 + 0.1 * jax.random.normal(ks[2], (D,), jnp.float32),
        "ln2_b": 0.1 * jax.random.normal(ks[3], (D,), jnp.float32),
        "ln3_g": 1.0 + 0.1 * jax.random.normal(ks[4], (D,), jnp.float32),
        "ln3_b": 0.1 * jax.random.normal(ks[5], (D,), jnp.float32),
        # attention index 0 = self.mha, 1 = visible_attention, 2 = unvisible_attention
        "qkv_w": nrm(ks[6], (3, D, 3 * D)).astype(jnp.bfloat16),
        "qkv_b": nrm(ks[7], (3, 3 * D)),
        "out_w": nrm(ks[8], (3, D, D)).astype(jnp.bfloat16),
        "out_b": nrm(ks[9], (3, D)),
        "mlp_w1": nrm(ks[10], (D, MLP_D)).astype(jnp.bfloat16),
        "mlp_b1": nrm(ks[11], (MLP_D,)),
        "mlp_w2": nrm(ks[12], (MLP_D, D)).astype(jnp.bfloat16),
        "mlp_b2": nrm(ks[13], (D,)),
        # PyTorch inits self.w to zeros; random here to exercise the path.
        "w_tok": 0.1 * jax.random.normal(ks[14], (N,), jnp.float32),
    }


def pack_params(blocks):
    wqkv0 = jnp.stack([p["qkv_w"][0] for p in blocks])             # (DEPTH,D,3D)
    wqkv12 = jnp.stack([jnp.concatenate([p["qkv_w"][1], p["qkv_w"][2]], axis=1)
                        for p in blocks])                          # (DEPTH,D,6D)
    wout = jnp.stack([p["out_w"] for p in blocks])                 # (DEPTH,3,D,D)
    wm1 = jnp.stack([p["mlp_w1"] for p in blocks])                 # (DEPTH,D,MLP_D)
    wm2 = jnp.stack([p["mlp_w2"] for p in blocks])                 # (DEPTH,MLP_D,D)
    vecs = []
    for p in blocks:
        v = jnp.zeros((VEC_ROWS, 6 * D), jnp.float32)
        v = v.at[0].set(jnp.concatenate([p["qkv_b"][1], p["qkv_b"][2]]))   # fused vis|unv qkv bias
        v = v.at[1].set(jnp.concatenate([p["qkv_b"][0], p["out_b"][0],
                                         p["out_b"][1], p["out_b"][2]]))
        v = v.at[2].set(jnp.concatenate([p["ln1_g"], p["ln1_b"], p["ln2_g"],
                                         p["ln2_b"], p["ln3_g"], p["ln3_b"]]))
        v = v.at[3, 0:MLP_D + D].set(jnp.concatenate([p["mlp_b1"], p["mlp_b2"]]))
        vecs.append(v)
    vec_all = jnp.stack(vecs)                                      # (DEPTH,4,768)
    w_tok = jnp.stack([p["w_tok"].reshape(N, 1) for p in blocks])  # (DEPTH,N,1)
    return wqkv0, wqkv12, wout, wm1, wm2, vec_all, w_tok


# ----------------------- pure-JAX reference (validation) ----------------------
def ref_mha(inp, qkv_w, qkv_b, out_w, out_b, key_keep=None):
    qkv = inp @ qkv_w.astype(jnp.float32) + qkv_b              # (B, Lq, 3D)

    def heads(t):
        return t.reshape(t.shape[0], t.shape[1], H, DH).transpose(0, 2, 1, 3)

    q, k, v = heads(qkv[..., 0:D]), heads(qkv[..., D:2 * D]), heads(qkv[..., 2 * D:])
    s = jnp.einsum("bhqe,bhke->bhqk", q, k) * SCALE
    if key_keep is not None:
        s = jnp.where(key_keep[:, None, None, :], s, NEG)
    p = jax.nn.softmax(s, axis=-1)
    o = jnp.einsum("bhqk,bhke->bhqe", p, v)
    o = o.transpose(0, 2, 1, 3).reshape(inp.shape[0], inp.shape[1], D)
    return o @ out_w.astype(jnp.float32) + out_b


def ref_block(x, c, vc, p):
    def ln(h, g, b):
        mu = h.mean(-1, keepdims=True)
        var = ((h - mu) ** 2).mean(-1, keepdims=True)
        return (h - mu) / jnp.sqrt(var + LN_EPS) * g + b

    x = x + ref_mha(ln(x, p["ln1_g"], p["ln1_b"]),
                    p["qkv_w"][0], p["qkv_b"][0], p["out_w"][0], p["out_b"][0])
    x = ln(x, p["ln2_g"], p["ln2_b"])
    vis_group = x[:, 1:, :] * vc[:, :, None]
    vis_mask = vis_group.sum(-1) == 0
    unv_mask = ~vis_mask
    ones_b1 = jnp.ones((B, 1), bool)
    ones_bm = jnp.ones((B, M), bool)
    vis_full = jnp.concatenate([ones_b1, vis_mask, ones_bm], axis=1)
    unv_full = jnp.concatenate([ones_b1, unv_mask, ones_bm], axis=1)
    cat = jnp.concatenate([x, c], axis=1)
    va = ref_mha(cat, p["qkv_w"][1], p["qkv_b"][1], p["out_w"][1], p["out_b"][1], vis_full)
    ua = ref_mha(cat, p["qkv_w"][2], p["qkv_b"][2], p["out_w"][2], p["out_b"][2], unv_full)
    va = jnp.where(vis_full[:, :, None], va, 0.0)
    ua = jnp.where(unv_full[:, :, None], ua, 0.0)
    x = x + va[:, :N, :] + p["w_tok"][None, :, None] * ua[:, :N, :]
    h = ln(x, p["ln3_g"], p["ln3_b"])
    h = jax.nn.gelu(h @ p["mlp_w1"].astype(jnp.float32) + p["mlp_b1"], approximate=False)
    h = h @ p["mlp_w2"].astype(jnp.float32) + p["mlp_b2"]
    return x + h


# ---------------------------------- main --------------------------------------
if __name__ == "__main__":
    key = jax.random.PRNGKey(0)
    k_x, k_c, k_vc, k_p = jax.random.split(key, 4)

    x = jax.random.normal(k_x, (B, N, D), jnp.float32)
    condition = jax.random.normal(k_c, (B, M, D), jnp.float32)
    visible_center = (jax.random.uniform(k_vc, (B, NUM_CENTER)) < 0.5
                      ).astype(jnp.float32)

    blocks = [init_block_params(k) for k in jax.random.split(k_p, DEPTH)]
    packed = pack_params(blocks)
    hm_n = make_head_mask(N)          # (H*N, D)
    hm_l = make_head_mask(L)          # (H*L, D)
    encoder_call = build_encoder_call()

    @jax.jit
    def encoder_forward(x, condition, visible_center, packed, hm_n, hm_l):
        wqkv0, wqkv12, wout, wm1, wm2, vec_all, w_tok = packed
        ones1 = jnp.ones((x.shape[0], 1), bool)
        onesm = jnp.ones((x.shape[0], M), bool)
        keep_vis = jnp.concatenate([ones1, visible_center == 0.0, onesm], axis=1)  # (B,L)
        keep_unv = jnp.concatenate([ones1, visible_center != 0.0, onesm], axis=1)
        # additive key masks tiled across heads along lanes: (B, 1, H*L)
        am_vis = jnp.where(jnp.tile(keep_vis, (1, H)), 0.0, NEG
                           ).astype(jnp.float32)[:, None, :]
        am_unv = jnp.where(jnp.tile(keep_unv, (1, H)), 0.0, NEG
                           ).astype(jnp.float32)[:, None, :]
        # multiplicative query-keep masks for the first N rows: (B, N, 1)
        q_vis = keep_vis[:, :N].astype(jnp.float32)[:, :, None]
        q_unv = keep_unv[:, :N].astype(jnp.float32)[:, :, None]
        return encoder_call(x, condition, am_vis, am_unv, q_vis, q_unv,
                            hm_n, hm_l,
                            wqkv0, wqkv12, wout, wm1, wm2, vec_all, w_tok)

    out = jax.block_until_ready(
        encoder_forward(x, condition, visible_center, packed, hm_n, hm_l))

    # validate against a pure-JAX f32 reference of the original module math
    ref = x
    for p in blocks:
        ref = ref_block(ref, condition, visible_center, p)
    ref = jax.block_until_ready(ref)

    max_diff = float(jnp.max(jnp.abs(out - ref)))
    ref_scale = float(jnp.max(jnp.abs(ref)))
    assert out.shape == (B, N, D)
    # kernel uses bf16 MXU operands (weights, activations, softmax probs, V);
    # allow bf16-level error
    assert max_diff <= 3e-2 * (1.0 + ref_scale), (
        f"mismatch vs reference: max|diff|={max_diff}, max|ref|={ref_scale}")
    print("KERNEL_OK")
</pallas_src>

<mosaic_0001>
module attributes {stable_mosaic.version = 11 : i64} {
  func.func @vipcf_encoder_kernel(%arg0: i32, %arg1: memref<1x8x128xf32, #tpu.memory_space<vmem>>, %arg2: memref<1x8x128xf32, #tpu.memory_space<vmem>>, %arg3: memref<1x1x128xf32, #tpu.memory_space<vmem>>, %arg4: memref<1x1x128xf32, #tpu.memory_space<vmem>>, %arg5: memref<1x8x1xf32, #tpu.memory_space<vmem>>, %arg6: memref<1x8x1xf32, #tpu.memory_space<vmem>>, %arg7: memref<64x128xf32, #tpu.memory_space<vmem>>, %arg8: memref<128x128xf32, #tpu.memory_space<vmem>>, %arg9: memref<2x128x384xbf16, #tpu.memory_space<vmem>>, %arg10: memref<2x128x768xbf16, #tpu.memory_space<vmem>>, %arg11: memref<2x3x128x128xbf16, #tpu.memory_space<vmem>>, %arg12: memref<2x128x256xbf16, #tpu.memory_space<vmem>>, %arg13: memref<2x256x128xbf16, #tpu.memory_space<vmem>>, %arg14: memref<2x4x768xf32, #tpu.memory_space<vmem>>, %arg15: memref<2x8x1xf32, #tpu.memory_space<vmem>>, %arg16: memref<1x8x128xf32, #tpu.memory_space<vmem>>) attributes {dimension_semantics = [#tpu.dimension_semantics<parallel>], iteration_bounds = array<i64: 2>, scalar_prefetch = 0 : i64, scratch_operands = 0 : i64, tpu.core_type = #tpu.core_type<tc>, window_params = [{transform_indices = @transform_0, window_bounds = array<i64: 1, 8, 128>}, {transform_indices = @transform_1, window_bounds = array<i64: 1, 8, 128>}, {transform_indices = @transform_2, window_bounds = array<i64: 1, 1, 128>}, {transform_indices = @transform_3, window_bounds = array<i64: 1, 1, 128>}, {transform_indices = @transform_4, window_bounds = array<i64: 1, 8, 1>}, {transform_indices = @transform_5, window_bounds = array<i64: 1, 8, 1>}, {pipeline_mode = #tpu.pipeline_mode<synchronous>, transform_indices = @transform_6, window_bounds = array<i64: 64, 128>}, {pipeline_mode = #tpu.pipeline_mode<synchronous>, transform_indices = @transform_7, window_bounds = array<i64: 128, 128>}, {pipeline_mode = #tpu.pipeline_mode<synchronous>, transform_indices = @transform_8, window_bounds = array<i64: 2, 128, 384>}, {pipeline_mode = #tpu.pipeline_mode<synchronous>, transform_indices = @transform_9, window_bounds = array<i64: 2, 128, 768>}, {pipeline_mode = #tpu.pipeline_mode<synchronous>, transform_indices = @transform_10, window_bounds = array<i64: 2, 3, 128, 128>}, {pipeline_mode = #tpu.pipeline_mode<synchronous>, transform_indices = @transform_11, window_bounds = array<i64: 2, 128, 256>}, {pipeline_mode = #tpu.pipeline_mode<synchronous>, transform_indices = @transform_12, window_bounds = array<i64: 2, 256, 128>}, {pipeline_mode = #tpu.pipeline_mode<synchronous>, transform_indices = @transform_13, window_bounds = array<i64: 2, 4, 768>}, {pipeline_mode = #tpu.pipeline_mode<synchronous>, transform_indices = @transform_14, window_bounds = array<i64: 2, 8, 1>}, {transform_indices = @transform_15, window_bounds = array<i64: 1, 8, 128>}]} {
    %c0 = arith.constant 0 : index
    %c0_0 = arith.constant 0 : index
    %c0_1 = arith.constant 0 : index
    %0 = vector.load %arg1[%c0, %c0_0, %c0_1] : memref<1x8x128xf32, #tpu.memory_space<vmem>>, vector<1x8x128xf32>
    %1 = vector.shape_cast %0 : vector<1x8x128xf32> to vector<8x128xf32>
    %c0_2 = arith.constant 0 : index
    %c0_3 = arith.constant 0 : index
    %c0_4 = arith.constant 0 : index
    %2 = vector.load %arg2[%c0_2, %c0_3, %c0_4] : memref<1x8x128xf32, #tpu.memory_space<vmem>>, vector<1x8x128xf32>
    %3 = vector.shape_cast %2 : vector<1x8x128xf32> to vector<8x128xf32>
    %c0_5 = arith.constant 0 : index
    %c0_6 = arith.constant 0 : index
    %c0_7 = arith.constant 0 : index
    %4 = vector.load %arg3[%c0_5, %c0_6, %c0_7] : memref<1x1x128xf32, #tpu.memory_space<vmem>>, vector<1x1x128xf32>
    %5 = vector.shape_cast %4 : vector<1x1x128xf32> to vector<1x128xf32>
    %c0_8 = arith.constant 0 : index
    %c0_9 = arith.constant 0 : index
    %c0_10 = arith.constant 0 : index
    %6 = vector.load %arg4[%c0_8, %c0_9, %c0_10] : memref<1x1x128xf32, #tpu.memory_space<vmem>>, vector<1x1x128xf32>
    %7 = vector.shape_cast %6 : vector<1x1x128xf32> to vector<1x128xf32>
    %c0_11 = arith.constant 0 : index
    %c0_12 = arith.constant 0 : index
    %c0_13 = arith.constant 0 : index
    %8 = vector.load %arg5[%c0_11, %c0_12, %c0_13] : memref<1x8x1xf32, #tpu.memory_space<vmem>>, vector<1x8x1xf32>
    %9 = vector.shape_cast %8 : vector<1x8x1xf32> to vector<8x1xf32>
    %c0_14 = arith.constant 0 : index
    %c0_15 = arith.constant 0 : index
    %c0_16 = arith.constant 0 : index
    %10 = vector.load %arg6[%c0_14, %c0_15, %c0_16] : memref<1x8x1xf32, #tpu.memory_space<vmem>>, vector<1x8x1xf32>
    %11 = vector.shape_cast %10 : vector<1x8x1xf32> to vector<8x1xf32>
    %c0_17 = arith.constant 0 : index
    %c0_18 = arith.constant 0 : index
    %c0_19 = arith.constant 0 : index
    %12 = vector.load %arg14[%c0_17, %c0_18, %c0_19] : memref<2x4x768xf32, #tpu.memory_space<vmem>>, vector<1x1x768xf32>
    %13 = vector.shape_cast %12 : vector<1x1x768xf32> to vector<1x768xf32>
    %c0_20 = arith.constant 0 : index
    %c1 = arith.constant 1 : index
    %c0_21 = arith.constant 0 : index
    %14 = vector.load %arg14[%c0_20, %c1, %c0_21] : memref<2x4x768xf32, #tpu.memory_space<vmem>>, vector<1x1x384xf32>
    %15 = vector.shape_cast %14 : vector<1x1x384xf32> to vector<1x384xf32>
    %c0_22 = arith.constant 0 : index
    %c1_23 = arith.constant 1 : index
    %c384 = arith.constant 384 : index
    %16 = vector.load %arg14[%c0_22, %c1_23, %c384] : memref<2x4x768xf32, #tpu.memory_space<vmem>>, vector<1x1x128xf32>
    %17 = vector.shape_cast %16 : vector<1x1x128xf32> to vector<1x128xf32>
    %c0_24 = arith.constant 0 : index
    %c1_25 = arith.constant 1 : index
    %c512 = arith.constant 512 : index
    %18 = vector.load %arg14[%c0_24, %c1_25, %c512] : memref<2x4x768xf32, #tpu.memory_space<vmem>>, vector<1x1x128xf32>
    %19 = vector.shape_cast %18 : vector<1x1x128xf32> to vector<1x128xf32>
    %c0_26 = arith.constant 0 : index
    %c1_27 = arith.constant 1 : index
    %c640 = arith.constant 640 : index
    %20 = vector.load %arg14[%c0_26, %c1_27, %c640] : memref<2x4x768xf32, #tpu.memory_space<vmem>>, vector<1x1x128xf32>
    %21 = vector.shape_cast %20 : vector<1x1x128xf32> to vector<1x128xf32>
    %c0_28 = arith.constant 0 : index
    %c2 = arith.constant 2 : index
    %c0_29 = arith.constant 0 : index
    %22 = vector.load %arg14[%c0_28, %c2, %c0_29] : memref<2x4x768xf32, #tpu.memory_space<vmem>>, vector<1x1x128xf32>
    %23 = vector.shape_cast %22 : vector<1x1x128xf32> to vector<1x128xf32>
    %c0_30 = arith.constant 0 : index
    %c2_31 = arith.constant 2 : index
    %c128 = arith.constant 128 : index
    %24 = vector.load %arg14[%c0_30, %c2_31, %c128] : memref<2x4x768xf32, #tpu.memory_space<vmem>>, vector<1x1x128xf32>
    %25 = vector.shape_cast %24 : vector<1x1x128xf32> to vector<1x128xf32>
    %c0_32 = arith.constant 0 : index
    %c2_33 = arith.constant 2 : index
    %c256 = arith.constant 256 : index
    %26 = vector.load %arg14[%c0_32, %c2_33, %c256] : memref<2x4x768xf32, #tpu.memory_space<vmem>>, vector<1x1x128xf32>
    %27 = vector.shape_cast %26 : vector<1x1x128xf32> to vector<1x128xf32>
    %c0_34 = arith.constant 0 : index
    %c2_35 = arith.constant 2 : index
    %c384_36 = arith.constant 384 : index
    %28 = vector.load %arg14[%c0_34, %c2_35, %c384_36] : memref<2x4x768xf32, #tpu.memory_space<vmem>>, vector<1x1x128xf32>
    %29 = vector.shape_cast %28 : vector<1x1x128xf32> to vector<1x128xf32>
    %c0_37 = arith.constant 0 : index
    %c2_38 = arith.constant 2 : index
    %c512_39 = arith.constant 512 : index
    %30 = vector.load %arg14[%c0_37, %c2_38, %c512_39] : memref<2x4x768xf32, #tpu.memory_space<vmem>>, vector<1x1x128xf32>
    %31 = vector.shape_cast %30 : vector<1x1x128xf32> to vector<1x128xf32>
    %c0_40 = arith.constant 0 : index
    %c2_41 = arith.constant 2 : index
    %c640_42 = arith.constant 640 : index
    %32 = vector.load %arg14[%c0_40, %c2_41, %c640_42] : memref<2x4x768xf32, #tpu.memory_space<vmem>>, vector<1x1x128xf32>
    %33 = vector.shape_cast %32 : vector<1x1x128xf32> to vector<1x128xf32>
    %c0_43 = arith.constant 0 : index
    %c3 = arith.constant 3 : index
    %c0_44 = arith.constant 0 : index
    %34 = vector.load %arg14[%c0_43, %c3, %c0_44] : memref<2x4x768xf32, #tpu.memory_space<vmem>>, vector<1x1x256xf32>
    %35 = vector.shape_cast %34 : vector<1x1x256xf32> to vector<1x256xf32>
    %c0_45 = arith.constant 0 : index
    %c3_46 = arith.constant 3 : index
    %c256_47 = arith.constant 256 : index
    %36 = vector.load %arg14[%c0_45, %c3_46, %c256_47] : memref<2x4x768xf32, #tpu.memory_space<vmem>>, vector<1x1x128xf32>
    %37 = vector.shape_cast %36 : vector<1x1x128xf32> to vector<1x128xf32>
    %c0_48 = arith.constant 0 : index
    %c0_49 = arith.constant 0 : index
    %c0_50 = arith.constant 0 : index
    %38 = vector.load %arg15[%c0_48, %c0_49, %c0_50] : memref<2x8x1xf32, #tpu.memory_space<vmem>>, vector<1x8x1xf32>
    %39 = vector.shape_cast %38 : vector<1x8x1xf32> to vector<8x1xf32>
    %cst = arith.constant dense<0.000000e+00> : vector<8xf32>
    %40 = vector.multi_reduction <add>, %1, %cst [1] : vector<8x128xf32> to vector<8xf32>
    %41 = vector.shape_cast %40 : vector<8xf32> to vector<8x1xf32>
    %cst_51 = arith.constant 1.280000e+02 : f32
    %42 = vector.broadcast %cst_51 : f32 to vector<8x1xf32>
    %43 = arith.divf %41, %42 : vector<8x1xf32>
    %44 = vector.broadcast %43 : vector<8x1xf32> to vector<8x128xf32>
    %45 = arith.subf %1, %44 : vector<8x128xf32>
    %46 = arith.mulf %45, %45 : vector<8x128xf32>
    %cst_52 = arith.constant dense<0.000000e+00> : vector<8xf32>
    %47 = vector.multi_reduction <add>, %46, %cst_52 [1] : vector<8x128xf32> to vector<8xf32>
    %48 = vector.shape_cast %47 : vector<8xf32> to vector<8x1xf32>
    %cst_53 = arith.constant 1.280000e+02 : f32
    %49 = vector.broadcast %cst_53 : f32 to vector<8x1xf32>
    %50 = arith.divf %48, %49 : vector<8x1xf32>
    %cst_54 = arith.constant 9.99999974E-6 : f32
    %51 = vector.broadcast %cst_54 : f32 to vector<8x1xf32>
    %52 = arith.addf %50, %51 : vector<8x1xf32>
    %53 = math.rsqrt %52 : vector<8x1xf32>
    %54 = vector.broadcast %53 : vector<8x1xf32> to vector<8x128xf32>
    %55 = arith.mulf %45, %54 : vector<8x128xf32>
    %56 = vector.broadcast %23 : vector<1x128xf32> to vector<8x128xf32>
    %57 = arith.mulf %55, %56 : vector<8x128xf32>
    %58 = vector.broadcast %25 : vector<1x128xf32> to vector<8x128xf32>
    %59 = arith.addf %57, %58 : vector<8x128xf32>
    %60 = arith.truncf %59 : vector<8x128xf32> to vector<8x128xbf16>
    %c0_55 = arith.constant 0 : index
    %c0_56 = arith.constant 0 : index
    %c0_57 = arith.constant 0 : index
    %61 = vector.load %arg9[%c0_55, %c0_56, %c0_57] : memref<2x128x384xbf16, #tpu.memory_space<vmem>>, vector<1x128x384xbf16>
    %62 = vector.shape_cast %61 : vector<1x128x384xbf16> to vector<128x384xbf16>
    %cst_58 = arith.constant dense<0.000000e+00> : vector<8x384xf32>
    %63 = tpu.matmul %60, %62, %cst_58 {dimension_numbers = #tpu.dot_dimension_numbers<[1], [0], [0], [1], [0, 0, 1, 1], [], []>} : vector<8x128xbf16>, vector<128x384xbf16>, vector<8x384xf32> -> vector<8x384xf32>
    %64 = vector.broadcast %15 : vector<1x384xf32> to vector<8x384xf32>
    %65 = arith.addf %63, %64 : vector<8x384xf32>
    %66 = vector.extract_strided_slice %65 {offsets = [0, 0], sizes = [8, 128], strides = [1, 1]} : vector<8x384xf32> to vector<8x128xf32>
    %67 = vector.extract_strided_slice %65 {offsets = [0, 128], sizes = [8, 128], strides = [1, 1]} : vector<8x384xf32> to vector<8x128xf32>
    %68 = vector.extract_strided_slice %65 {offsets = [0, 256], sizes = [8, 128], strides = [1, 1]} : vector<8x384xf32> to vector<8x128xf32>
    %c0_59 = arith.constant 0 : index
    %c0_60 = arith.constant 0 : index
    %69 = vector.load %arg7[%c0_59, %c0_60] : memref<64x128xf32, #tpu.memory_space<vmem>>, vector<64x128xf32>
    %70 = tpu.concatenate %67, %67, %67, %67, %67, %67, %67, %67 in 0 : vector<8x128xf32>, vector<8x128xf32>, vector<8x128xf32>, vector<8x128xf32>, vector<8x128xf32>, vector<8x128xf32>, vector<8x128xf32>, vector<8x128xf32> -> vector<64x128xf32>
    %71 = arith.mulf %70, %69 : vector<64x128xf32>
    %72 = tpu.concatenate %68, %68, %68, %68, %68, %68, %68, %68 in 0 : vector<8x128xf32>, vector<8x128xf32>, vector<8x128xf32>, vector<8x128xf32>, vector<8x128xf32>, vector<8x128xf32>, vector<8x128xf32>, vector<8x128xf32> -> vector<64x128xf32>
    %73 = arith.mulf %72, %69 : vector<64x128xf32>
    %74 = arith.truncf %73 : vector<64x128xf32> to vector<64x128xbf16>
    %cst_61 = arith.constant dense<0.000000e+00> : vector<8x64xf32>
    %75 = tpu.matmul %66, %71, %cst_61 {dimension_numbers = #tpu.dot_dimension_numbers<[1], [1], [0], [0], [0, 0, 1, 0], [], []>} : vector<8x128xf32>, vector<64x128xf32>, vector<8x64xf32> -> vector<8x64xf32>
    %cst_62 = arith.constant 2.500000e-01 : f32
    %76 = vector.broadcast %cst_62 : f32 to vector<8x64xf32>
    %77 = arith.mulf %75, %76 : vector<8x64xf32>
    %cst_63 = arith.constant dense<0xFF800000> : vector<8xf32>
    %78 = vector.multi_reduction <maximumf>, %77, %cst_63 [1] : vector<8x64xf32> to vector<8xf32>
    %79 = vector.shape_cast %78 : vector<8xf32> to vector<8x1xf32>
    %80 = vector.broadcast %79 : vector<8x1xf32> to vector<8x64xf32>
    %81 = arith.subf %77, %80 : vector<8x64xf32>
    %82 = math.exp %81 : vector<8x64xf32>
    %cst_64 = arith.constant dense<0.000000e+00> : vector<8x128xf32>
    %83 = tpu.matmul %82, %69, %cst_64 {dimension_numbers = #tpu.dot_dimension_numbers<[1], [0], [0], [1], [0, 0, 1, 1], [], []>} : vector<8x64xf32>, vector<64x128xf32>, vector<8x128xf32> -> vector<8x128xf32>
    %84 = arith.truncf %82 : vector<8x64xf32> to vector<8x64xbf16>
    %cst_65 = arith.constant dense<0.000000e+00> : vector<8x128xf32>
    %85 = tpu.matmul %84, %74, %cst_65 {dimension_numbers = #tpu.dot_dimension_numbers<[1], [0], [0], [1], [0, 0, 1, 1], [], []>} : vector<8x64xbf16>, vector<64x128xbf16>, vector<8x128xf32> -> vector<8x128xf32>
    %86 = tpu.reciprocal %83 {approx = true} : vector<8x128xf32> -> vector<8x128xf32>
    %87 = arith.mulf %85, %86 : vector<8x128xf32>
    %88 = arith.truncf %87 : vector<8x128xf32> to vector<8x128xbf16>
    %c0_66 = arith.constant 0 : index
    %c0_67 = arith.constant 0 : index
    %c0_68 = arith.constant 0 : index
    %c0_69 = arith.constant 0 : index
    %89 = vector.load %arg11[%c0_66, %c0_67, %c0_68, %c0_69] : memref<2x3x128x128xbf16, #tpu.memory_space<vmem>>, vector<1x1x128x128xbf16>
    %90 = vector.shape_cast %89 : vector<1x1x128x128xbf16> to vector<128x128xbf16>
    %cst_70 = arith.constant dense<0.000000e+00> : vector<8x128xf32>
    %91 = tpu.matmul %88, %90, %cst_70 {dimension_numbers = #tpu.dot_dimension_numbers<[1], [0], [0], [1], [0, 0, 1, 1], [], []>} : vector<8x128xbf16>, vector<128x128xbf16>, vector<8x128xf32> -> vector<8x128xf32>
    %92 = arith.addf %1, %91 : vector<8x128xf32>
    %93 = vector.broadcast %17 : vector<1x128xf32> to vector<8x128xf32>
    %94 = arith.addf %92, %93 : vector<8x128xf32>
    %cst_71 = arith.constant dense<0.000000e+00> : vector<8xf32>
    %95 = vector.multi_reduction <add>, %94, %cst_71 [1] : vector<8x128xf32> to vector<8xf32>
    %96 = vector.shape_cast %95 : vector<8xf32> to vector<8x1xf32>
    %cst_72 = arith.constant 1.280000e+02 : f32
    %97 = vector.broadcast %cst_72 : f32 to vector<8x1xf32>
    %98 = arith.divf %96, %97 : vector<8x1xf32>
    %99 = vector.broadcast %98 : vector<8x1xf32> to vector<8x128xf32>
    %100 = arith.subf %94, %99 : vector<8x128xf32>
    %101 = arith.mulf %100, %100 : vector<8x128xf32>
    %cst_73 = arith.constant dense<0.000000e+00> : vector<8xf32>
    %102 = vector.multi_reduction <add>, %101, %cst_73 [1] : vector<8x128xf32> to vector<8xf32>
    %103 = vector.shape_cast %102 : vector<8xf32> to vector<8x1xf32>
    %cst_74 = arith.constant 1.280000e+02 : f32
    %104 = vector.broadcast %cst_74 : f32 to vector<8x1xf32>
    %105 = arith.divf %103, %104 : vector<8x1xf32>
    %cst_75 = arith.constant 9.99999974E-6 : f32
    %106 = vector.broadcast %cst_75 : f32 to vector<8x1xf32>
    %107 = arith.addf %105, %106 : vector<8x1xf32>
    %108 = math.rsqrt %107 : vector<8x1xf32>
    %109 = vector.broadcast %108 : vector<8x1xf32> to vector<8x128xf32>
    %110 = arith.mulf %100, %109 : vector<8x128xf32>
    %111 = vector.broadcast %27 : vector<1x128xf32> to vector<8x128xf32>
    %112 = arith.mulf %110, %111 : vector<8x128xf32>
    %113 = vector.broadcast %29 : vector<1x128xf32> to vector<8x128xf32>
    %114 = arith.addf %112, %113 : vector<8x128xf32>
    %115 = tpu.concatenate %114, %3 in 0 : vector<8x128xf32>, vector<8x128xf32> -> vector<16x128xf32>
    %116 = arith.truncf %115 : vector<16x128xf32> to vector<16x128xbf16>
    %c0_76 = arith.constant 0 : index
    %c0_77 = arith.constant 0 : index
    %c0_78 = arith.constant 0 : index
    %117 = vector.load %arg10[%c0_76, %c0_77, %c0_78] : memref<2x128x768xbf16, #tpu.memory_space<vmem>>, vector<1x128x768xbf16>
    %118 = vector.shape_cast %117 : vector<1x128x768xbf16> to vector<128x768xbf16>
    %cst_79 = arith.constant dense<0.000000e+00> : vector<16x768xf32>
    %119 = tpu.matmul %116, %118, %cst_79 {dimension_numbers = #tpu.dot_dimension_numbers<[1], [0], [0], [1], [0, 0, 1, 1], [], []>} : vector<16x128xbf16>, vector<128x768xbf16>, vector<16x768xf32> -> vector<16x768xf32>
    %120 = vector.broadcast %13 : vector<1x768xf32> to vector<16x768xf32>
    %121 = arith.addf %119, %120 : vector<16x768xf32>
    %122 = vector.extract_strided_slice %121 {offsets = [0, 0], sizes = [8, 128], strides = [1, 1]} : vector<16x768xf32> to vector<8x128xf32>
    %123 = vector.extract_strided_slice %121 {offsets = [0, 128], sizes = [16, 128], strides = [1, 1]} : vector<16x768xf32> to vector<16x128xf32>
    %124 = vector.extract_strided_slice %121 {offsets = [0, 256], sizes = [16, 128], strides = [1, 1]} : vector<16x768xf32> to vector<16x128xf32>
    %c0_80 = arith.constant 0 : index
    %c0_81 = arith.constant 0 : index
    %125 = vector.load %arg8[%c0_80, %c0_81] : memref<128x128xf32, #tpu.memory_space<vmem>>, vector<128x128xf32>
    %126 = tpu.concatenate %123, %123, %123, %123, %123, %123, %123, %123 in 0 : vector<16x128xf32>, vector<16x128xf32>, vector<16x128xf32>, vector<16x128xf32>, vector<16x128xf32>, vector<16x128xf32>, vector<16x128xf32>, vector<16x128xf32> -> vector<128x128xf32>
    %127 = arith.mulf %126, %125 : vector<128x128xf32>
    %128 = tpu.concatenate %124, %124, %124, %124, %124, %124, %124, %124 in 0 : vector<16x128xf32>, vector<16x128xf32>, vector<16x128xf32>, vector<16x128xf32>, vector<16x128xf32>, vector<16x128xf32>, vector<16x128xf32>, vector<16x128xf32> -> vector<128x128xf32>
    %129 = arith.mulf %128, %125 : vector<128x128xf32>
    %130 = arith.truncf %129 : vector<128x128xf32> to vector<128x128xbf16>
    %cst_82 = arith.constant dense<0.000000e+00> : vector<8x128xf32>
    %131 = tpu.matmul %122, %127, %cst_82 {dimension_numbers = #tpu.dot_dimension_numbers<[1], [1], [0], [0], [0, 0, 1, 0], [], []>} : vector<8x128xf32>, vector<128x128xf32>, vector<8x128xf32> -> vector<8x128xf32>
    %cst_83 = arith.constant 2.500000e-01 : f32
    %132 = vector.broadcast %cst_83 : f32 to vector<8x128xf32>
    %133 = arith.mulf %131, %132 : vector<8x128xf32>
    %134 = vector.broadcast %5 : vector<1x128xf32> to vector<8x128xf32>
    %135 = arith.addf %133, %134 : vector<8x128xf32>
    %cst_84 = arith.constant dense<0xFF800000> : vector<8xf32>
    %136 = vector.multi_reduction <maximumf>, %135, %cst_84 [1] : vector<8x128xf32> to vector<8xf32>
    %137 = vector.shape_cast %136 : vector<8xf32> to vector<8x1xf32>
    %138 = vector.broadcast %137 : vector<8x1xf32> to vector<8x128xf32>
    %139 = arith.subf %135, %138 : vector<8x128xf32>
    %140 = math.exp %139 : vector<8x128xf32>
    %cst_85 = arith.constant dense<0.000000e+00> : vector<8x128xf32>
    %141 = tpu.matmul %140, %125, %cst_85 {dimension_numbers = #tpu.dot_dimension_numbers<[1], [0], [0], [1], [0, 0, 1, 1], [], []>} : vector<8x128xf32>, vector<128x128xf32>, vector<8x128xf32> -> vector<8x128xf32>
    %142 = arith.truncf %140 : vector<8x128xf32> to vector<8x128xbf16>
    %cst_86 = arith.constant dense<0.000000e+00> : vector<8x128xf32>
    %143 = tpu.matmul %142, %130, %cst_86 {dimension_numbers = #tpu.dot_dimension_numbers<[1], [0], [0], [1], [0, 0, 1, 1], [], []>} : vector<8x128xbf16>, vector<128x128xbf16>, vector<8x128xf32> -> vector<8x128xf32>
    %144 = tpu.reciprocal %141 {approx = true} : vector<8x128xf32> -> vector<8x128xf32>
    %145 = arith.mulf %143, %144 : vector<8x128xf32>
    %146 = vector.extract_strided_slice %121 {offsets = [0, 384], sizes = [8, 128], strides = [1, 1]} : vector<16x768xf32> to vector<8x128xf32>
    %147 = vector.extract_strided_slice %121 {offsets = [0, 512], sizes = [16, 128], strides = [1, 1]} : vector<16x768xf32> to vector<16x128xf32>
    %148 = vector.extract_strided_slice %121 {offsets = [0, 640], sizes = [16, 128], strides = [1, 1]} : vector<16x768xf32> to vector<16x128xf32>
    %c0_87 = arith.constant 0 : index
    %c0_88 = arith.constant 0 : index
    %149 = vector.load %arg8[%c0_87, %c0_88] : memref<128x128xf32, #tpu.memory_space<vmem>>, vector<128x128xf32>
    %150 = tpu.concatenate %147, %147, %147, %147, %147, %147, %147, %147 in 0 : vector<16x128xf32>, vector<16x128xf32>, vector<16x128xf32>, vector<16x128xf32>, vector<16x128xf32>, vector<16x128xf32>, vector<16x128xf32>, vector<16x128xf32> -> vector<128x128xf32>
    %151 = arith.mulf %150, %149 : vector<128x128xf32>
    %152 = tpu.concatenate %148, %148, %148, %148, %148, %148, %148, %148 in 0 : vector<16x128xf32>, vector<16x128xf32>, vector<16x128xf32>, vector<16x128xf32>, vector<16x128xf32>, vector<16x128xf32>, vector<16x128xf32>, vector<16x128xf32> -> vector<128x128xf32>
    %153 = arith.mulf %152, %149 : vector<128x128xf32>
    %154 = arith.truncf %153 : vector<128x128xf32> to vector<128x128xbf16>
    %cst_89 = arith.constant dense<0.000000e+00> : vector<8x128xf32>
    %155 = tpu.matmul %146, %151, %cst_89 {dimension_numbers = #tpu.dot_dimension_numbers<[1], [1], [0], [0], [0, 0, 1, 0], [], []>} : vector<8x128xf32>, vector<128x128xf32>, vector<8x128xf32> -> vector<8x128xf32>
    %cst_90 = arith.constant 2.500000e-01 : f32
    %156 = vector.broadcast %cst_90 : f32 to vector<8x128xf32>
    %157 = arith.mulf %155, %156 : vector<8x128xf32>
    %158 = vector.broadcast %7 : vector<1x128xf32> to vector<8x128xf32>
    %159 = arith.addf %157, %158 : vector<8x128xf32>
    %cst_91 = arith.constant dense<0xFF800000> : vector<8xf32>
    %160 = vector.multi_reduction <maximumf>, %159, %cst_91 [1] : vector<8x128xf32> to vector<8xf32>
    %161 = vector.shape_cast %160 : vector<8xf32> to vector<8x1xf32>
    %162 = vector.broadcast %161 : vector<8x1xf32> to vector<8x128xf32>
    %163 = arith.subf %159, %162 : vector<8x128xf32>
    %164 = math.exp %163 : vector<8x128xf32>
    %cst_92 = arith.constant dense<0.000000e+00> : vector<8x128xf32>
    %165 = tpu.matmul %164, %149, %cst_92 {dimension_numbers = #tpu.dot_dimension_numbers<[1], [0], [0], [1], [0, 0, 1, 1], [], []>} : vector<8x128xf32>, vector<128x128xf32>, vector<8x128xf32> -> vector<8x128xf32>
    %166 = arith.truncf %164 : vector<8x128xf32> to vector<8x128xbf16>
    %cst_93 = arith.constant dense<0.000000e+00> : vector<8x128xf32>
    %167 = tpu.matmul %166, %154, %cst_93 {dimension_numbers = #tpu.dot_dimension_numbers<[1], [0], [0], [1], [0, 0, 1, 1], [], []>} : vector<8x128xbf16>, vector<128x128xbf16>, vector<8x128xf32> -> vector<8x128xf32>
    %168 = tpu.reciprocal %165 {approx = true} : vector<8x128xf32> -> vector<8x128xf32>
    %169 = arith.mulf %167, %168 : vector<8x128xf32>
    %170 = arith.truncf %145 : vector<8x128xf32> to vector<8x128xbf16>
    %c0_94 = arith.constant 0 : index
    %c1_95 = arith.constant 1 : index
    %c0_96 = arith.constant 0 : index
    %c0_97 = arith.constant 0 : index
    %171 = vector.load %arg11[%c0_94, %c1_95, %c0_96, %c0_97] : memref<2x3x128x128xbf16, #tpu.memory_space<vmem>>, vector<1x1x128x128xbf16>
    %172 = vector.shape_cast %171 : vector<1x1x128x128xbf16> to vector<128x128xbf16>
    %cst_98 = arith.constant dense<0.000000e+00> : vector<8x128xf32>
    %173 = tpu.matmul %170, %172, %cst_98 {dimension_numbers = #tpu.dot_dimension_numbers<[1], [0], [0], [1], [0, 0, 1, 1], [], []>} : vector<8x128xbf16>, vector<128x128xbf16>, vector<8x128xf32> -> vector<8x128xf32>
    %174 = vector.broadcast %19 : vector<1x128xf32> to vector<8x128xf32>
    %175 = arith.addf %173, %174 : vector<8x128xf32>
    %176 = arith.truncf %169 : vector<8x128xf32> to vector<8x128xbf16>
    %c0_99 = arith.constant 0 : index
    %c2_100 = arith.constant 2 : index
    %c0_101 = arith.constant 0 : index
    %c0_102 = arith.constant 0 : index
    %177 = vector.load %arg11[%c0_99, %c2_100, %c0_101, %c0_102] : memref<2x3x128x128xbf16, #tpu.memory_space<vmem>>, vector<1x1x128x128xbf16>
    %178 = vector.shape_cast %177 : vector<1x1x128x128xbf16> to vector<128x128xbf16>
    %cst_103 = arith.constant dense<0.000000e+00> : vector<8x128xf32>
    %179 = tpu.matmul %176, %178, %cst_103 {dimension_numbers = #tpu.dot_dimension_numbers<[1], [0], [0], [1], [0, 0, 1, 1], [], []>} : vector<8x128xbf16>, vector<128x128xbf16>, vector<8x128xf32> -> vector<8x128xf32>
    %180 = vector.broadcast %21 : vector<1x128xf32> to vector<8x128xf32>
    %181 = arith.addf %179, %180 : vector<8x128xf32>
    %182 = vector.broadcast %9 : vector<8x1xf32> to vector<8x128xf32>
    %183 = arith.mulf %175, %182 : vector<8x128xf32>
    %184 = arith.addf %114, %183 : vector<8x128xf32>
    %185 = vector.broadcast %11 : vector<8x1xf32> to vector<8x128xf32>
    %186 = arith.mulf %181, %185 : vector<8x128xf32>
    %187 = vector.broadcast %39 : vector<8x1xf32> to vector<8x128xf32>
    %188 = arith.mulf %187, %186 : vector<8x128xf32>
    %189 = arith.addf %184, %188 : vector<8x128xf32>
    %cst_104 = arith.constant dense<0.000000e+00> : vector<8xf32>
    %190 = vector.multi_reduction <add>, %189, %cst_104 [1] : vector<8x128xf32> to vector<8xf32>
    %191 = vector.shape_cast %190 : vector<8xf32> to vector<8x1xf32>
    %cst_105 = arith.constant 1.280000e+02 : f32
    %192 = vector.broadcast %cst_105 : f32 to vector<8x1xf32>
    %193 = arith.divf %191, %192 : vector<8x1xf32>
    %194 = vector.broadcast %193 : vector<8x1xf32> to vector<8x128xf32>
    %195 = arith.subf %189, %194 : vector<8x128xf32>
    %196 = arith.mulf %195, %195 : vector<8x128xf32>
    %cst_106 = arith.constant dense<0.000000e+00> : vector<8xf32>
    %197 = vector.multi_reduction <add>, %196, %cst_106 [1] : vector<8x128xf32> to vector<8xf32>
    %198 = vector.shape_cast %197 : vector<8xf32> to vector<8x1xf32>
    %cst_107 = arith.constant 1.280000e+02 : f32
    %199 = vector.broadcast %cst_107 : f32 to vector<8x1xf32>
    %200 = arith.divf %198, %199 : vector<8x1xf32>
    %cst_108 = arith.constant 9.99999974E-6 : f32
    %201 = vector.broadcast %cst_108 : f32 to vector<8x1xf32>
    %202 = arith.addf %200, %201 : vector<8x1xf32>
    %203 = math.rsqrt %202 : vector<8x1xf32>
    %204 = vector.broadcast %203 : vector<8x1xf32> to vector<8x128xf32>
    %205 = arith.mulf %195, %204 : vector<8x128xf32>
    %206 = vector.broadcast %31 : vector<1x128xf32> to vector<8x128xf32>
    %207 = arith.mulf %205, %206 : vector<8x128xf32>
    %208 = vector.broadcast %33 : vector<1x128xf32> to vector<8x128xf32>
    %209 = arith.addf %207, %208 : vector<8x128xf32>
    %210 = arith.truncf %209 : vector<8x128xf32> to vector<8x128xbf16>
    %c0_109 = arith.constant 0 : index
    %c0_110 = arith.constant 0 : index
    %c0_111 = arith.constant 0 : index
    %211 = vector.load %arg12[%c0_109, %c0_110, %c0_111] : memref<2x128x256xbf16, #tpu.memory_space<vmem>>, vector<1x128x256xbf16>
    %212 = vector.shape_cast %211 : vector<1x128x256xbf16> to vector<128x256xbf16>
    %cst_112 = arith.constant dense<0.000000e+00> : vector<8x256xf32>
    %213 = tpu.matmul %210, %212, %cst_112 {dimension_numbers = #tpu.dot_dimension_numbers<[1], [0], [0], [1], [0, 0, 1, 1], [], []>} : vector<8x128xbf16>, vector<128x256xbf16>, vector<8x256xf32> -> vector<8x256xf32>
    %214 = vector.broadcast %35 : vector<1x256xf32> to vector<8x256xf32>
    %215 = arith.addf %213, %214 : vector<8x256xf32>
    %cst_113 = arith.constant 5.000000e-01 : f32
    %216 = vector.broadcast %cst_113 : f32 to vector<8x256xf32>
    %217 = arith.mulf %216, %215 : vector<8x256xf32>
    %cst_114 = arith.constant 0.707106769 : f32
    %218 = vector.broadcast %cst_114 : f32 to vector<8x256xf32>
    %219 = arith.mulf %215, %218 : vector<8x256xf32>
    %cst_115 = arith.constant 0.000000e+00 : f32
    %220 = vector.broadcast %cst_115 : f32 to vector<8x256xf32>
    %221 = arith.cmpf oge, %219, %220 : vector<8x256xf32>
    %cst_116 = arith.constant 1.000000e+00 : f32
    %cst_117 = arith.constant -1.000000e+00 : f32
    %222 = vector.broadcast %cst_116 : f32 to vector<8x256xf32>
    %223 = vector.broadcast %cst_117 : f32 to vector<8x256xf32>
    %224 = arith.select %221, %222, %223 : vector<8x256xi1>, vector<8x256xf32>
    %225 = math.absf %219 : vector<8x256xf32>
    %cst_118 = arith.constant 0.327591091 : f32
    %226 = vector.broadcast %cst_118 : f32 to vector<8x256xf32>
    %227 = arith.mulf %226, %225 : vector<8x256xf32>
    %cst_119 = arith.constant 1.000000e+00 : f32
    %228 = vector.broadcast %cst_119 : f32 to vector<8x256xf32>
    %229 = arith.addf %228, %227 : vector<8x256xf32>
    %cst_120 = arith.constant 1.000000e+00 : f32
    %230 = vector.broadcast %cst_120 : f32 to vector<8x256xf32>
    %231 = arith.divf %230, %229 : vector<8x256xf32>
    %cst_121 = arith.constant 1.06140542 : f32
    %232 = vector.broadcast %cst_121 : f32 to vector<8x256xf32>
    %233 = arith.mulf %232, %231 : vector<8x256xf32>
    %cst_122 = arith.constant -1.45315206 : f32
    %234 = vector.broadcast %cst_122 : f32 to vector<8x256xf32>
    %235 = arith.addf %233, %234 : vector<8x256xf32>
    %236 = arith.mulf %235, %231 : vector<8x256xf32>
    %cst_123 = arith.constant 1.42141378 : f32
    %237 = vector.broadcast %cst_123 : f32 to vector<8x256xf32>
    %238 = arith.addf %236, %237 : vector<8x256xf32>
    %239 = arith.mulf %238, %231 : vector<8x256xf32>
    %cst_124 = arith.constant -0.284496725 : f32
    %240 = vector.broadcast %cst_124 : f32 to vector<8x256xf32>
    %241 = arith.addf %239, %240 : vector<8x256xf32>
    %242 = arith.mulf %241, %231 : vector<8x256xf32>
    %cst_125 = arith.constant 0.254829586 : f32
    %243 = vector.broadcast %cst_125 : f32 to vector<8x256xf32>
    %244 = arith.addf %242, %243 : vector<8x256xf32>
    %245 = arith.mulf %244, %231 : vector<8x256xf32>
    %cst_126 = arith.constant 0.000000e+00 : f32
    %246 = vector.broadcast %cst_126 : f32 to vector<8x256xf32>
    %247 = arith.subf %246, %225 : vector<8x256xf32>
    %248 = arith.mulf %247, %225 : vector<8x256xf32>
    %249 = math.exp %248 : vector<8x256xf32>
    %250 = arith.mulf %245, %249 : vector<8x256xf32>
    %cst_127 = arith.constant 1.000000e+00 : f32
    %251 = vector.broadcast %cst_127 : f32 to vector<8x256xf32>
    %252 = arith.subf %251, %250 : vector<8x256xf32>
    %253 = arith.mulf %224, %252 : vector<8x256xf32>
    %cst_128 = arith.constant 1.000000e+00 : f32
    %254 = vector.broadcast %cst_128 : f32 to vector<8x256xf32>
    %255 = arith.addf %254, %253 : vector<8x256xf32>
    %256 = arith.mulf %217, %255 : vector<8x256xf32>
    %257 = arith.truncf %256 : vector<8x256xf32> to vector<8x256xbf16>
    %c0_129 = arith.constant 0 : index
    %c0_130 = arith.constant 0 : index
    %c0_131 = arith.constant 0 : index
    %258 = vector.load %arg13[%c0_129, %c0_130, %c0_131] : memref<2x256x128xbf16, #tpu.memory_space<vmem>>, vector<1x256x128xbf16>
    %259 = vector.shape_cast %258 : vector<1x256x128xbf16> to vector<256x128xbf16>
    %cst_132 = arith.constant dense<0.000000e+00> : vector<8x128xf32>
    %260 = tpu.matmul %257, %259, %cst_132 {dimension_numbers = #tpu.dot_dimension_numbers<[1], [0], [0], [1], [0, 0, 1, 1], [], []>} : vector<8x256xbf16>, vector<256x128xbf16>, vector<8x128xf32> -> vector<8x128xf32>
    %261 = arith.addf %189, %260 : vector<8x128xf32>
    %262 = vector.broadcast %37 : vector<1x128xf32> to vector<8x128xf32>
    %263 = arith.addf %261, %262 : vector<8x128xf32>
    %c1_133 = arith.constant 1 : index
    %c0_134 = arith.constant 0 : index
    %c0_135 = arith.constant 0 : index
    %264 = vector.load %arg14[%c1_133, %c0_134, %c0_135] : memref<2x4x768xf32, #tpu.memory_space<vmem>>, vector<1x1x768xf32>
    %265 = vector.shape_cast %264 : vector<1x1x768xf32> to vector<1x768xf32>
    %c1_136 = arith.constant 1 : index
    %c1_137 = arith.constant 1 : index
    %c0_138 = arith.constant 0 : index
    %266 = vector.load %arg14[%c1_136, %c1_137, %c0_138] : memref<2x4x768xf32, #tpu.memory_space<vmem>>, vector<1x1x384xf32>
    %267 = vector.shape_cast %266 : vector<1x1x384xf32> to vector<1x384xf32>
    %c1_139 = arith.constant 1 : index
    %c1_140 = arith.constant 1 : index
    %c384_141 = arith.constant 384 : index
    %268 = vector.load %arg14[%c1_139, %c1_140, %c384_141] : memref<2x4x768xf32, #tpu.memory_space<vmem>>, vector<1x1x128xf32>
    %269 = vector.shape_cast %268 : vector<1x1x128xf32> to vector<1x128xf32>
    %c1_142 = arith.constant 1 : index
    %c1_143 = arith.constant 1 : index
    %c512_144 = arith.constant 512 : index
    %270 = vector.load %arg14[%c1_142, %c1_143, %c512_144] : memref<2x4x768xf32, #tpu.memory_space<vmem>>, vector<1x1x128xf32>
    %271 = vector.shape_cast %270 : vector<1x1x128xf32> to vector<1x128xf32>
    %c1_145 = arith.constant 1 : index
    %c1_146 = arith.constant 1 : index
    %c640_147 = arith.constant 640 : index
    %272 = vector.load %arg14[%c1_145, %c1_146, %c640_147] : memref<2x4x768xf32, #tpu.memory_space<vmem>>, vector<1x1x128xf32>
    %273 = vector.shape_cast %272 : vector<1x1x128xf32> to vector<1x128xf32>
    %c1_148 = arith.constant 1 : index
    %c2_149 = arith.constant 2 : index
    %c0_150 = arith.constant 0 : index
    %274 = vector.load %arg14[%c1_148, %c2_149, %c0_150] : memref<2x4x768xf32, #tpu.memory_space<vmem>>, vector<1x1x128xf32>
    %275 = vector.shape_cast %274 : vector<1x1x128xf32> to vector<1x128xf32>
    %c1_151 = arith.constant 1 : index
    %c2_152 = arith.constant 2 : index
    %c128_153 = arith.constant 128 : index
    %276 = vector.load %arg14[%c1_151, %c2_152, %c128_153] : memref<2x4x768xf32, #tpu.memory_space<vmem>>, vector<1x1x128xf32>
    %277 = vector.shape_cast %276 : vector<1x1x128xf32> to vector<1x128xf32>
    %c1_154 = arith.constant 1 : index
    %c2_155 = arith.constant 2 : index
    %c256_156 = arith.constant 256 : index
    %278 = vector.load %arg14[%c1_154, %c2_155, %c256_156] : memref<2x4x768xf32, #tpu.memory_space<vmem>>, vector<1x1x128xf32>
    %279 = vector.shape_cast %278 : vector<1x1x128xf32> to vector<1x128xf32>
    %c1_157 = arith.constant 1 : index
    %c2_158 = arith.constant 2 : index
    %c384_159 = arith.constant 384 : index
    %280 = vector.load %arg14[%c1_157, %c2_158, %c384_159] : memref<2x4x768xf32, #tpu.memory_space<vmem>>, vector<1x1x128xf32>
    %281 = vector.shape_cast %280 : vector<1x1x128xf32> to vector<1x128xf32>
    %c1_160 = arith.constant 1 : index
    %c2_161 = arith.constant 2 : index
    %c512_162 = arith.constant 512 : index
    %282 = vector.load %arg14[%c1_160, %c2_161, %c512_162] : memref<2x4x768xf32, #tpu.memory_space<vmem>>, vector<1x1x128xf32>
    %283 = vector.shape_cast %282 : vector<1x1x128xf32> to vector<1x128xf32>
    %c1_163 = arith.constant 1 : index
    %c2_164 = arith.constant 2 : index
    %c640_165 = arith.constant 640 : index
    %284 = vector.load %arg14[%c1_163, %c2_164, %c640_165] : memref<2x4x768xf32, #tpu.memory_space<vmem>>, vector<1x1x128xf32>
    %285 = vector.shape_cast %284 : vector<1x1x128xf32> to vector<1x128xf32>
    %c1_166 = arith.constant 1 : index
    %c3_167 = arith.constant 3 : index
    %c0_168 = arith.constant 0 : index
    %286 = vector.load %arg14[%c1_166, %c3_167, %c0_168] : memref<2x4x768xf32, #tpu.memory_space<vmem>>, vector<1x1x256xf32>
    %287 = vector.shape_cast %286 : vector<1x1x256xf32> to vector<1x256xf32>
    %c1_169 = arith.constant 1 : index
    %c3_170 = arith.constant 3 : index
    %c256_171 = arith.constant 256 : index
    %288 = vector.load %arg14[%c1_169, %c3_170, %c256_171] : memref<2x4x768xf32, #tpu.memory_space<vmem>>, vector<1x1x128xf32>
    %289 = vector.shape_cast %288 : vector<1x1x128xf32> to vector<1x128xf32>
    %c1_172 = arith.constant 1 : index
    %c0_173 = arith.constant 0 : index
    %c0_174 = arith.constant 0 : index
    %290 = vector.load %arg15[%c1_172, %c0_173, %c0_174] : memref<2x8x1xf32, #tpu.memory_space<vmem>>, vector<1x8x1xf32>
    %291 = vector.shape_cast %290 : vector<1x8x1xf32> to vector<8x1xf32>
    %cst_175 = arith.constant dense<0.000000e+00> : vector<8xf32>
    %292 = vector.multi_reduction <add>, %263, %cst_175 [1] : vector<8x128xf32> to vector<8xf32>
    %293 = vector.shape_cast %292 : vector<8xf32> to vector<8x1xf32>
    %cst_176 = arith.constant 1.280000e+02 : f32
    %294 = vector.broadcast %cst_176 : f32 to vector<8x1xf32>
    %295 = arith.divf %293, %294 : vector<8x1xf32>
    %296 = vector.broadcast %295 : vector<8x1xf32> to vector<8x128xf32>
    %297 = arith.subf %263, %296 : vector<8x128xf32>
    %298 = arith.mulf %297, %297 : vector<8x128xf32>
    %cst_177 = arith.constant dense<0.000000e+00> : vector<8xf32>
    %299 = vector.multi_reduction <add>, %298, %cst_177 [1] : vector<8x128xf32> to vector<8xf32>
    %300 = vector.shape_cast %299 : vector<8xf32> to vector<8x1xf32>
    %cst_178 = arith.constant 1.280000e+02 : f32
    %301 = vector.broadcast %cst_178 : f32 to vector<8x1xf32>
    %302 = arith.divf %300, %301 : vector<8x1xf32>
    %cst_179 = arith.constant 9.99999974E-6 : f32
    %303 = vector.broadcast %cst_179 : f32 to vector<8x1xf32>
    %304 = arith.addf %302, %303 : vector<8x1xf32>
    %305 = math.rsqrt %304 : vector<8x1xf32>
    %306 = vector.broadcast %305 : vector<8x1xf32> to vector<8x128xf32>
    %307 = arith.mulf %297, %306 : vector<8x128xf32>
    %308 = vector.broadcast %275 : vector<1x128xf32> to vector<8x128xf32>
    %309 = arith.mulf %307, %308 : vector<8x128xf32>
    %310 = vector.broadcast %277 : vector<1x128xf32> to vector<8x128xf32>
    %311 = arith.addf %309, %310 : vector<8x128xf32>
    %312 = arith.truncf %311 : vector<8x128xf32> to vector<8x128xbf16>
    %c1_180 = arith.constant 1 : index
    %c0_181 = arith.constant 0 : index
    %c0_182 = arith.constant 0 : index
    %313 = vector.load %arg9[%c1_180, %c0_181, %c0_182] : memref<2x128x384xbf16, #tpu.memory_space<vmem>>, vector<1x128x384xbf16>
    %314 = vector.shape_cast %313 : vector<1x128x384xbf16> to vector<128x384xbf16>
    %cst_183 = arith.constant dense<0.000000e+00> : vector<8x384xf32>
    %315 = tpu.matmul %312, %314, %cst_183 {dimension_numbers = #tpu.dot_dimension_numbers<[1], [0], [0], [1], [0, 0, 1, 1], [], []>} : vector<8x128xbf16>, vector<128x384xbf16>, vector<8x384xf32> -> vector<8x384xf32>
    %316 = vector.broadcast %267 : vector<1x384xf32> to vector<8x384xf32>
    %317 = arith.addf %315, %316 : vector<8x384xf32>
    %318 = vector.extract_strided_slice %317 {offsets = [0, 0], sizes = [8, 128], strides = [1, 1]} : vector<8x384xf32> to vector<8x128xf32>
    %319 = vector.extract_strided_slice %317 {offsets = [0, 128], sizes = [8, 128], strides = [1, 1]} : vector<8x384xf32> to vector<8x128xf32>
    %320 = vector.extract_strided_slice %317 {offsets = [0, 256], sizes = [8, 128], strides = [1, 1]} : vector<8x384xf32> to vector<8x128xf32>
    %c0_184 = arith.constant 0 : index
    %c0_185 = arith.constant 0 : index
    %321 = vector.load %arg7[%c0_184, %c0_185] : memref<64x128xf32, #tpu.memory_space<vmem>>, vector<64x128xf32>
    %322 = tpu.concatenate %319, %319, %319, %319, %319, %319, %319, %319 in 0 : vector<8x128xf32>, vector<8x128xf32>, vector<8x128xf32>, vector<8x128xf32>, vector<8x128xf32>, vector<8x128xf32>, vector<8x128xf32>, vector<8x128xf32> -> vector<64x128xf32>
    %323 = arith.mulf %322, %321 : vector<64x128xf32>
    %324 = tpu.concatenate %320, %320, %320, %320, %320, %320, %320, %320 in 0 : vector<8x128xf32>, vector<8x128xf32>, vector<8x128xf32>, vector<8x128xf32>, vector<8x128xf32>, vector<8x128xf32>, vector<8x128xf32>, vector<8x128xf32> -> vector<64x128xf32>
    %325 = arith.mulf %324, %321 : vector<64x128xf32>
    %326 = arith.truncf %325 : vector<64x128xf32> to vector<64x128xbf16>
    %cst_186 = arith.constant dense<0.000000e+00> : vector<8x64xf32>
    %327 = tpu.matmul %318, %323, %cst_186 {dimension_numbers = #tpu.dot_dimension_numbers<[1], [1], [0], [0], [0, 0, 1, 0], [], []>} : vector<8x128xf32>, vector<64x128xf32>, vector<8x64xf32> -> vector<8x64xf32>
    %cst_187 = arith.constant 2.500000e-01 : f32
    %328 = vector.broadcast %cst_187 : f32 to vector<8x64xf32>
    %329 = arith.mulf %327, %328 : vector<8x64xf32>
    %cst_188 = arith.constant dense<0xFF800000> : vector<8xf32>
    %330 = vector.multi_reduction <maximumf>, %329, %cst_188 [1] : vector<8x64xf32> to vector<8xf32>
    %331 = vector.shape_cast %330 : vector<8xf32> to vector<8x1xf32>
    %332 = vector.broadcast %331 : vector<8x1xf32> to vector<8x64xf32>
    %333 = arith.subf %329, %332 : vector<8x64xf32>
    %334 = math.exp %333 : vector<8x64xf32>
    %cst_189 = arith.constant dense<0.000000e+00> : vector<8x128xf32>
    %335 = tpu.matmul %334, %321, %cst_189 {dimension_numbers = #tpu.dot_dimension_numbers<[1], [0], [0], [1], [0, 0, 1, 1], [], []>} : vector<8x64xf32>, vector<64x128xf32>, vector<8x128xf32> -> vector<8x128xf32>
    %336 = arith.truncf %334 : vector<8x64xf32> to vector<8x64xbf16>
    %cst_190 = arith.constant dense<0.000000e+00> : vector<8x128xf32>
    %337 = tpu.matmul %336, %326, %cst_190 {dimension_numbers = #tpu.dot_dimension_numbers<[1], [0], [0], [1], [0, 0, 1, 1], [], []>} : vector<8x64xbf16>, vector<64x128xbf16>, vector<8x128xf32> -> vector<8x128xf32>
    %338 = tpu.reciprocal %335 {approx = true} : vector<8x128xf32> -> vector<8x128xf32>
    %339 = arith.mulf %337, %338 : vector<8x128xf32>
    %340 = arith.truncf %339 : vector<8x128xf32> to vector<8x128xbf16>
    %c1_191 = arith.constant 1 : index
    %c0_192 = arith.constant 0 : index
    %c0_193 = arith.constant 0 : index
    %c0_194 = arith.constant 0 : index
    %341 = vector.load %arg11[%c1_191, %c0_192, %c0_193, %c0_194] : memref<2x3x128x128xbf16, #tpu.memory_space<vmem>>, vector<1x1x128x128xbf16>
    %342 = vector.shape_cast %341 : vector<1x1x128x128xbf16> to vector<128x128xbf16>
    %cst_195 = arith.constant dense<0.000000e+00> : vector<8x128xf32>
    %343 = tpu.matmul %340, %342, %cst_195 {dimension_numbers = #tpu.dot_dimension_numbers<[1], [0], [0], [1], [0, 0, 1, 1], [], []>} : vector<8x128xbf16>, vector<128x128xbf16>, vector<8x128xf32> -> vector<8x128xf32>
    %344 = arith.addf %263, %343 : vector<8x128xf32>
    %345 = vector.broadcast %269 : vector<1x128xf32> to vector<8x128xf32>
    %346 = arith.addf %344, %345 : vector<8x128xf32>
    %cst_196 = arith.constant dense<0.000000e+00> : vector<8xf32>
    %347 = vector.multi_reduction <add>, %346, %cst_196 [1] : vector<8x128xf32> to vector<8xf32>
    %348 = vector.shape_cast %347 : vector<8xf32> to vector<8x1xf32>
    %cst_197 = arith.constant 1.280000e+02 : f32
    %349 = vector.broadcast %cst_197 : f32 to vector<8x1xf32>
    %350 = arith.divf %348, %349 : vector<8x1xf32>
    %351 = vector.broadcast %350 : vector<8x1xf32> to vector<8x128xf32>
    %352 = arith.subf %346, %351 : vector<8x128xf32>
    %353 = arith.mulf %352, %352 : vector<8x128xf32>
    %cst_198 = arith.constant dense<0.000000e+00> : vector<8xf32>
    %354 = vector.multi_reduction <add>, %353, %cst_198 [1] : vector<8x128xf32> to vector<8xf32>
    %355 = vector.shape_cast %354 : vector<8xf32> to vector<8x1xf32>
    %cst_199 = arith.constant 1.280000e+02 : f32
    %356 = vector.broadcast %cst_199 : f32 to vector<8x1xf32>
    %357 = arith.divf %355, %356 : vector<8x1xf32>
    %cst_200 = arith.constant 9.99999974E-6 : f32
    %358 = vector.broadcast %cst_200 : f32 to vector<8x1xf32>
    %359 = arith.addf %357, %358 : vector<8x1xf32>
    %360 = math.rsqrt %359 : vector<8x1xf32>
    %361 = vector.broadcast %360 : vector<8x1xf32> to vector<8x128xf32>
    %362 = arith.mulf %352, %361 : vector<8x128xf32>
    %363 = vector.broadcast %279 : vector<1x128xf32> to vector<8x128xf32>
    %364 = arith.mulf %362, %363 : vector<8x128xf32>
    %365 = vector.broadcast %281 : vector<1x128xf32> to vector<8x128xf32>
    %366 = arith.addf %364, %365 : vector<8x128xf32>
    %367 = tpu.concatenate %366, %3 in 0 : vector<8x128xf32>, vector<8x128xf32> -> vector<16x128xf32>
    %368 = arith.truncf %367 : vector<16x128xf32> to vector<16x128xbf16>
    %c1_201 = arith.constant 1 : index
    %c0_202 = arith.constant 0 : index
    %c0_203 = arith.constant 0 : index
    %369 = vector.load %arg10[%c1_201, %c0_202, %c0_203] : memref<2x128x768xbf16, #tpu.memory_space<vmem>>, vector<1x128x768xbf16>
    %370 = vector.shape_cast %369 : vector<1x128x768xbf16> to vector<128x768xbf16>
    %cst_204 = arith.constant dense<0.000000e+00> : vector<16x768xf32>
    %371 = tpu.matmul %368, %370, %cst_204 {dimension_numbers = #tpu.dot_dimension_numbers<[1], [0], [0], [1], [0, 0, 1, 1], [], []>} : vector<16x128xbf16>, vector<128x768xbf16>, vector<16x768xf32> -> vector<16x768xf32>
    %372 = vector.broadcast %265 : vector<1x768xf32> to vector<16x768xf32>
    %373 = arith.addf %371, %372 : vector<16x768xf32>
    %374 = vector.extract_strided_slice %373 {offsets = [0, 0], sizes = [8, 128], strides = [1, 1]} : vector<16x768xf32> to vector<8x128xf32>
    %375 = vector.extract_strided_slice %373 {offsets = [0, 128], sizes = [16, 128], strides = [1, 1]} : vector<16x768xf32> to vector<16x128xf32>
    %376 = vector.extract_strided_slice %373 {offsets = [0, 256], sizes = [16, 128], strides = [1, 1]} : vector<16x768xf32> to vector<16x128xf32>
    %c0_205 = arith.constant 0 : index
    %c0_206 = arith.constant 0 : index
    %377 = vector.load %arg8[%c0_205, %c0_206] : memref<128x128xf32, #tpu.memory_space<vmem>>, vector<128x128xf32>
    %378 = tpu.concatenate %375, %375, %375, %375, %375, %375, %375, %375 in 0 : vector<16x128xf32>, vector<16x128xf32>, vector<16x128xf32>, vector<16x128xf32>, vector<16x128xf32>, vector<16x128xf32>, vector<16x128xf32>, vector<16x128xf32> -> vector<128x128xf32>
    %379 = arith.mulf %378, %377 : vector<128x128xf32>
    %380 = tpu.concatenate %376, %376, %376, %376, %376, %376, %376, %376 in 0 : vector<16x128xf32>, vector<16x128xf32>, vector<16x128xf32>, vector<16x128xf32>, vector<16x128xf32>, vector<16x128xf32>, vector<16x128xf32>, vector<16x128xf32> -> vector<128x128xf32>
    %381 = arith.mulf %380, %377 : vector<128x128xf32>
    %382 = arith.truncf %381 : vector<128x128xf32> to vector<128x128xbf16>
    %cst_207 = arith.constant dense<0.000000e+00> : vector<8x128xf32>
    %383 = tpu.matmul %374, %379, %cst_207 {dimension_numbers = #tpu.dot_dimension_numbers<[1], [1], [0], [0], [0, 0, 1, 0], [], []>} : vector<8x128xf32>, vector<128x128xf32>, vector<8x128xf32> -> vector<8x128xf32>
    %cst_208 = arith.constant 2.500000e-01 : f32
    %384 = vector.broadcast %cst_208 : f32 to vector<8x128xf32>
    %385 = arith.mulf %383, %384 : vector<8x128xf32>
    %386 = vector.broadcast %5 : vector<1x128xf32> to vector<8x128xf32>
    %387 = arith.addf %385, %386 : vector<8x128xf32>
    %cst_209 = arith.constant dense<0xFF800000> : vector<8xf32>
    %388 = vector.multi_reduction <maximumf>, %387, %cst_209 [1] : vector<8x128xf32> to vector<8xf32>
    %389 = vector.shape_cast %388 : vector<8xf32> to vector<8x1xf32>
    %390 = vector.broadcast %389 : vector<8x1xf32> to vector<8x128xf32>
    %391 = arith.subf %387, %390 : vector<8x128xf32>
    %392 = math.exp %391 : vector<8x128xf32>
    %cst_210 = arith.constant dense<0.000000e+00> : vector<8x128xf32>
    %393 = tpu.matmul %392, %377, %cst_210 {dimension_numbers = #tpu.dot_dimension_numbers<[1], [0], [0], [1], [0, 0, 1, 1], [], []>} : vector<8x128xf32>, vector<128x128xf32>, vector<8x128xf32> -> vector<8x128xf32>
    %394 = arith.truncf %392 : vector<8x128xf32> to vector<8x128xbf16>
    %cst_211 = arith.constant dense<0.000000e+00> : vector<8x128xf32>
    %395 = tpu.matmul %394, %382, %cst_211 {dimension_numbers = #tpu.dot_dimension_numbers<[1], [0], [0], [1], [0, 0, 1, 1], [], []>} : vector<8x128xbf16>, vector<128x128xbf16>, vector<8x128xf32> -> vector<8x128xf32>
    %396 = tpu.reciprocal %393 {approx = true} : vector<8x128xf32> -> vector<8x128xf32>
    %397 = arith.mulf %395, %396 : vector<8x128xf32>
    %398 = vector.extract_strided_slice %373 {offsets = [0, 384], sizes = [8, 128], strides = [1, 1]} : vector<16x768xf32> to vector<8x128xf32>
    %399 = vector.extract_strided_slice %373 {offsets = [0, 512], sizes = [16, 128], strides = [1, 1]} : vector<16x768xf32> to vector<16x128xf32>
    %400 = vector.extract_strided_slice %373 {offsets = [0, 640], sizes = [16, 128], strides = [1, 1]} : vector<16x768xf32> to vector<16x128xf32>
    %c0_212 = arith.constant 0 : index
    %c0_213 = arith.constant 0 : index
    %401 = vector.load %arg8[%c0_212, %c0_213] : memref<128x128xf32, #tpu.memory_space<vmem>>, vector<128x128xf32>
    %402 = tpu.concatenate %399, %399, %399, %399, %399, %399, %399, %399 in 0 : vector<16x128xf32>, vector<16x128xf32>, vector<16x128xf32>, vector<16x128xf32>, vector<16x128xf32>, vector<16x128xf32>, vector<16x128xf32>, vector<16x128xf32> -> vector<128x128xf32>
    %403 = arith.mulf %402, %401 : vector<128x128xf32>
    %404 = tpu.concatenate %400, %400, %400, %400, %400, %400, %400, %400 in 0 : vector<16x128xf32>, vector<16x128xf32>, vector<16x128xf32>, vector<16x128xf32>, vector<16x128xf32>, vector<16x128xf32>, vector<16x128xf32>, vector<16x128xf32> -> vector<128x128xf32>
    %405 = arith.mulf %404, %401 : vector<128x128xf32>
    %406 = arith.truncf %405 : vector<128x128xf32> to vector<128x128xbf16>
    %cst_214 = arith.constant dense<0.000000e+00> : vector<8x128xf32>
    %407 = tpu.matmul %398, %403, %cst_214 {dimension_numbers = #tpu.dot_dimension_numbers<[1], [1], [0], [0], [0, 0, 1, 0], [], []>} : vector<8x128xf32>, vector<128x128xf32>, vector<8x128xf32> -> vector<8x128xf32>
    %cst_215 = arith.constant 2.500000e-01 : f32
    %408 = vector.broadcast %cst_215 : f32 to vector<8x128xf32>
    %409 = arith.mulf %407, %408 : vector<8x128xf32>
    %410 = vector.broadcast %7 : vector<1x128xf32> to vector<8x128xf32>
    %411 = arith.addf %409, %410 : vector<8x128xf32>
    %cst_216 = arith.constant dense<0xFF800000> : vector<8xf32>
    %412 = vector.multi_reduction <maximumf>, %411, %cst_216 [1] : vector<8x128xf32> to vector<8xf32>
    %413 = vector.shape_cast %412 : vector<8xf32> to vector<8x1xf32>
    %414 = vector.broadcast %413 : vector<8x1xf32> to vector<8x128xf32>
    %415 = arith.subf %411, %414 : vector<8x128xf32>
    %416 = math.exp %415 : vector<8x128xf32>
    %cst_217 = arith.constant dense<0.000000e+00> : vector<8x128xf32>
    %417 = tpu.matmul %416, %401, %cst_217 {dimension_numbers = #tpu.dot_dimension_numbers<[1], [0], [0], [1], [0, 0, 1, 1], [], []>} : vector<8x128xf32>, vector<128x128xf32>, vector<8x128xf32> -> vector<8x128xf32>
    %418 = arith.truncf %416 : vector<8x128xf32> to vector<8x128xbf16>
    %cst_218 = arith.constant dense<0.000000e+00> : vector<8x128xf32>
    %419 = tpu.matmul %418, %406, %cst_218 {dimension_numbers = #tpu.dot_dimension_numbers<[1], [0], [0], [1], [0, 0, 1, 1], [], []>} : vector<8x128xbf16>, vector<128x128xbf16>, vector<8x128xf32> -> vector<8x128xf32>
    %420 = tpu.reciprocal %417 {approx = true} : vector<8x128xf32> -> vector<8x128xf32>
    %421 = arith.mulf %419, %420 : vector<8x128xf32>
    %422 = arith.truncf %397 : vector<8x128xf32> to vector<8x128xbf16>
    %c1_219 = arith.constant 1 : index
    %c1_220 = arith.constant 1 : index
    %c0_221 = arith.constant 0 : index
    %c0_222 = arith.constant 0 : index
    %423 = vector.load %arg11[%c1_219, %c1_220, %c0_221, %c0_222] : memref<2x3x128x128xbf16, #tpu.memory_space<vmem>>, vector<1x1x128x128xbf16>
    %424 = vector.shape_cast %423 : vector<1x1x128x128xbf16> to vector<128x128xbf16>
    %cst_223 = arith.constant dense<0.000000e+00> : vector<8x128xf32>
    %425 = tpu.matmul %422, %424, %cst_223 {dimension_numbers = #tpu.dot_dimension_numbers<[1], [0], [0], [1], [0, 0, 1, 1], [], []>} : vector<8x128xbf16>, vector<128x128xbf16>, vector<8x128xf32> -> vector<8x128xf32>
    %426 = vector.broadcast %271 : vector<1x128xf32> to vector<8x128xf32>
    %427 = arith.addf %425, %426 : vector<8x128xf32>
    %428 = arith.truncf %421 : vector<8x128xf32> to vector<8x128xbf16>
    %c1_224 = arith.constant 1 : index
    %c2_225 = arith.constant 2 : index
    %c0_226 = arith.constant 0 : index
    %c0_227 = arith.constant 0 : index
    %429 = vector.load %arg11[%c1_224, %c2_225, %c0_226, %c0_227] : memref<2x3x128x128xbf16, #tpu.memory_space<vmem>>, vector<1x1x128x128xbf16>
    %430 = vector.shape_cast %429 : vector<1x1x128x128xbf16> to vector<128x128xbf16>
    %cst_228 = arith.constant dense<0.000000e+00> : vector<8x128xf32>
    %431 = tpu.matmul %428, %430, %cst_228 {dimension_numbers = #tpu.dot_dimension_numbers<[1], [0], [0], [1], [0, 0, 1, 1], [], []>} : vector<8x128xbf16>, vector<128x128xbf16>, vector<8x128xf32> -> vector<8x128xf32>
    %432 = vector.broadcast %273 : vector<1x128xf32> to vector<8x128xf32>
    %433 = arith.addf %431, %432 : vector<8x128xf32>
    %434 = vector.broadcast %9 : vector<8x1xf32> to vector<8x128xf32>
    %435 = arith.mulf %427, %434 : vector<8x128xf32>
    %436 = arith.addf %366, %435 : vector<8x128xf32>
    %437 = vector.broadcast %11 : vector<8x1xf32> to vector<8x128xf32>
    %438 = arith.mulf %433, %437 : vector<8x128xf32>
    %439 = vector.broadcast %291 : vector<8x1xf32> to vector<8x128xf32>
    %440 = arith.mulf %439, %438 : vector<8x128xf32>
    %441 = arith.addf %436, %440 : vector<8x128xf32>
    %cst_229 = arith.constant dense<0.000000e+00> : vector<8xf32>
    %442 = vector.multi_reduction <add>, %441, %cst_229 [1] : vector<8x128xf32> to vector<8xf32>
    %443 = vector.shape_cast %442 : vector<8xf32> to vector<8x1xf32>
    %cst_230 = arith.constant 1.280000e+02 : f32
    %444 = vector.broadcast %cst_230 : f32 to vector<8x1xf32>
    %445 = arith.divf %443, %444 : vector<8x1xf32>
    %446 = vector.broadcast %445 : vector<8x1xf32> to vector<8x128xf32>
    %447 = arith.subf %441, %446 : vector<8x128xf32>
    %448 = arith.mulf %447, %447 : vector<8x128xf32>
    %cst_231 = arith.constant dense<0.000000e+00> : vector<8xf32>
    %449 = vector.multi_reduction <add>, %448, %cst_231 [1] : vector<8x128xf32> to vector<8xf32>
    %450 = vector.shape_cast %449 : vector<8xf32> to vector<8x1xf32>
    %cst_232 = arith.constant 1.280000e+02 : f32
    %451 = vector.broadcast %cst_232 : f32 to vector<8x1xf32>
    %452 = arith.divf %450, %451 : vector<8x1xf32>
    %cst_233 = arith.constant 9.99999974E-6 : f32
    %453 = vector.broadcast %cst_233 : f32 to vector<8x1xf32>
    %454 = arith.addf %452, %453 : vector<8x1xf32>
    %455 = math.rsqrt %454 : vector<8x1xf32>
    %456 = vector.broadcast %455 : vector<8x1xf32> to vector<8x128xf32>
    %457 = arith.mulf %447, %456 : vector<8x128xf32>
    %458 = vector.broadcast %283 : vector<1x128xf32> to vector<8x128xf32>
    %459 = arith.mulf %457, %458 : vector<8x128xf32>
    %460 = vector.broadcast %285 : vector<1x128xf32> to vector<8x128xf32>
    %461 = arith.addf %459, %460 : vector<8x128xf32>
    %462 = arith.truncf %461 : vector<8x128xf32> to vector<8x128xbf16>
    %c1_234 = arith.constant 1 : index
    %c0_235 = arith.constant 0 : index
    %c0_236 = arith.constant 0 : index
    %463 = vector.load %arg12[%c1_234, %c0_235, %c0_236] : memref<2x128x256xbf16, #tpu.memory_space<vmem>>, vector<1x128x256xbf16>
    %464 = vector.shape_cast %463 : vector<1x128x256xbf16> to vector<128x256xbf16>
    %cst_237 = arith.constant dense<0.000000e+00> : vector<8x256xf32>
    %465 = tpu.matmul %462, %464, %cst_237 {dimension_numbers = #tpu.dot_dimension_numbers<[1], [0], [0], [1], [0, 0, 1, 1], [], []>} : vector<8x128xbf16>, vector<128x256xbf16>, vector<8x256xf32> -> vector<8x256xf32>
    %466 = vector.broadcast %287 : vector<1x256xf32> to vector<8x256xf32>
    %467 = arith.addf %465, %466 : vector<8x256xf32>
    %cst_238 = arith.constant 5.000000e-01 : f32
    %468 = vector.broadcast %cst_238 : f32 to vector<8x256xf32>
    %469 = arith.mulf %468, %467 : vector<8x256xf32>
    %cst_239 = arith.constant 0.707106769 : f32
    %470 = vector.broadcast %cst_239 : f32 to vector<8x256xf32>
    %471 = arith.mulf %467, %470 : vector<8x256xf32>
    %cst_240 = arith.constant 0.000000e+00 : f32
    %472 = vector.broadcast %cst_240 : f32 to vector<8x256xf32>
    %473 = arith.cmpf oge, %471, %472 : vector<8x256xf32>
    %cst_241 = arith.constant 1.000000e+00 : f32
    %cst_242 = arith.constant -1.000000e+00 : f32
    %474 = vector.broadcast %cst_241 : f32 to vector<8x256xf32>
    %475 = vector.broadcast %cst_242 : f32 to vector<8x256xf32>
    %476 = arith.select %473, %474, %475 : vector<8x256xi1>, vector<8x256xf32>
    %477 = math.absf %471 : vector<8x256xf32>
    %cst_243 = arith.constant 0.327591091 : f32
    %478 = vector.broadcast %cst_243 : f32 to vector<8x256xf32>
    %479 = arith.mulf %478, %477 : vector<8x256xf32>
    %cst_244 = arith.constant 1.000000e+00 : f32
    %480 = vector.broadcast %cst_244 : f32 to vector<8x256xf32>
    %481 = arith.addf %480, %479 : vector<8x256xf32>
    %cst_245 = arith.constant 1.000000e+00 : f32
    %482 = vector.broadcast %cst_245 : f32 to vector<8x256xf32>
    %483 = arith.divf %482, %481 : vector<8x256xf32>
    %cst_246 = arith.constant 1.06140542 : f32
    %484 = vector.broadcast %cst_246 : f32 to vector<8x256xf32>
    %485 = arith.mulf %484, %483 : vector<8x256xf32>
    %cst_247 = arith.constant -1.45315206 : f32
    %486 = vector.broadcast %cst_247 : f32 to vector<8x256xf32>
    %487 = arith.addf %485, %486 : vector<8x256xf32>
    %488 = arith.mulf %487, %483 : vector<8x256xf32>
    %cst_248 = arith.constant 1.42141378 : f32
    %489 = vector.broadcast %cst_248 : f32 to vector<8x256xf32>
    %490 = arith.addf %488, %489 : vector<8x256xf32>
    %491 = arith.mulf %490, %483 : vector<8x256xf32>
    %cst_249 = arith.constant -0.284496725 : f32
    %492 = vector.broadcast %cst_249 : f32 to vector<8x256xf32>
    %493 = arith.addf %491, %492 : vector<8x256xf32>
    %494 = arith.mulf %493, %483 : vector<8x256xf32>
    %cst_250 = arith.constant 0.254829586 : f32
    %495 = vector.broadcast %cst_250 : f32 to vector<8x256xf32>
    %496 = arith.addf %494, %495 : vector<8x256xf32>
    %497 = arith.mulf %496, %483 : vector<8x256xf32>
    %cst_251 = arith.constant 0.000000e+00 : f32
    %498 = vector.broadcast %cst_251 : f32 to vector<8x256xf32>
    %499 = arith.subf %498, %477 : vector<8x256xf32>
    %500 = arith.mulf %499, %477 : vector<8x256xf32>
    %501 = math.exp %500 : vector<8x256xf32>
    %502 = arith.mulf %497, %501 : vector<8x256xf32>
    %cst_252 = arith.constant 1.000000e+00 : f32
    %503 = vector.broadcast %cst_252 : f32 to vector<8x256xf32>
    %504 = arith.subf %503, %502 : vector<8x256xf32>
    %505 = arith.mulf %476, %504 : vector<8x256xf32>
    %cst_253 = arith.constant 1.000000e+00 : f32
    %506 = vector.broadcast %cst_253 : f32 to vector<8x256xf32>
    %507 = arith.addf %506, %505 : vector<8x256xf32>
    %508 = arith.mulf %469, %507 : vector<8x256xf32>
    %509 = arith.truncf %508 : vector<8x256xf32> to vector<8x256xbf16>
    %c1_254 = arith.constant 1 : index
    %c0_255 = arith.constant 0 : index
    %c0_256 = arith.constant 0 : index
    %510 = vector.load %arg13[%c1_254, %c0_255, %c0_256] : memref<2x256x128xbf16, #tpu.memory_space<vmem>>, vector<1x256x128xbf16>
    %511 = vector.shape_cast %510 : vector<1x256x128xbf16> to vector<256x128xbf16>
    %cst_257 = arith.constant dense<0.000000e+00> : vector<8x128xf32>
    %512 = tpu.matmul %509, %511, %cst_257 {dimension_numbers = #tpu.dot_dimension_numbers<[1], [0], [0], [1], [0, 0, 1, 1], [], []>} : vector<8x256xbf16>, vector<256x128xbf16>, vector<8x128xf32> -> vector<8x128xf32>
    %513 = arith.addf %441, %512 : vector<8x128xf32>
    %514 = vector.broadcast %289 : vector<1x128xf32> to vector<8x128xf32>
    %515 = arith.addf %513, %514 : vector<8x128xf32>
    %c0_258 = arith.constant 0 : index
    %c0_259 = arith.constant 0 : index
    %c0_260 = arith.constant 0 : index
    %516 = vector.load %arg16[%c0_258, %c0_259, %c0_260] : memref<1x8x128xf32, #tpu.memory_space<vmem>>, vector<1x8x128xf32>
    %517 = vector.shape_cast %516 : vector<1x8x128xf32> to vector<8x128xf32>
    %518 = vector.shape_cast %515 : vector<8x128xf32> to vector<1x8x128xf32>
    tpu.vector_store %arg16[%c0_258, %c0_259, %c0_260], %518 {strides = array<i32>} : memref<1x8x128xf32, #tpu.memory_space<vmem>>, vector<1x8x128xf32>,
    return
  }
  func.func @transform_0(%arg0: i32) -> (i32, i32, i32) {
    %c0_i32 = arith.constant 0 : i32
    %c0_i32_0 = arith.constant 0 : i32
    %c0_i32_1 = arith.constant 0 : i32
    return %arg0, %c0_i32, %c0_i32_0 : i32, i32, i32
  }
  func.func @transform_1(%arg0: i32) -> (i32, i32, i32) {
    %c0_i32 = arith.constant 0 : i32
    %c0_i32_0 = arith.constant 0 : i32
    %c0_i32_1 = arith.constant 0 : i32
    return %arg0, %c0_i32, %c0_i32_0 : i32, i32, i32
  }
  func.func @transform_2(%arg0: i32) -> (i32, i32, i32) {
    %c0_i32 = arith.constant 0 : i32
    %c0_i32_0 = arith.constant 0 : i32
    %c0_i32_1 = arith.constant 0 : i32
    return %arg0, %c0_i32, %c0_i32_0 : i32, i32, i32
  }
  func.func @transform_3(%arg0: i32) -> (i32, i32, i32) {
    %c0_i32 = arith.constant 0 : i32
    %c0_i32_0 = arith.constant 0 : i32
    %c0_i32_1 = arith.constant 0 : i32
    return %arg0, %c0_i32, %c0_i32_0 : i32, i32, i32
  }
  func.func @transform_4(%arg0: i32) -> (i32, i32, i32) {
    %c0_i32 = arith.constant 0 : i32
    %c0_i32_0 = arith.constant 0 : i32
    %c0_i32_1 = arith.constant 0 : i32
    return %arg0, %c0_i32, %c0_i32_0 : i32, i32, i32
  }
  func.func @transform_5(%arg0: i32) -> (i32, i32, i32) {
    %c0_i32 = arith.constant 0 : i32
    %c0_i32_0 = arith.constant 0 : i32
    %c0_i32_1 = arith.constant 0 : i32
    return %arg0, %c0_i32, %c0_i32_0 : i32, i32, i32
  }
  func.func @transform_6(%arg0: i32) -> (i32, i32) {
    %c0_i32 = arith.constant 0 : i32
    %c0_i32_0 = arith.constant 0 : i32
    %c0_i32_1 = arith.constant 0 : i32
    return %c0_i32, %c0_i32_0 : i32, i32
  }
  func.func @transform_7(%arg0: i32) -> (i32, i32) {
    %c0_i32 = arith.constant 0 : i32
    %c0_i32_0 = arith.constant 0 : i32
    %c0_i32_1 = arith.constant 0 : i32
    return %c0_i32, %c0_i32_0 : i32, i32
  }
  func.func @transform_8(%arg0: i32) -> (i32, i32, i32) {
    %c0_i32 = arith.constant 0 : i32
    %c0_i32_0 = arith.constant 0 : i32
    %c0_i32_1 = arith.constant 0 : i32
    %c0_i32_2 = arith.constant 0 : i32
    return %c0_i32, %c0_i32_0, %c0_i32_1 : i32, i32, i32
  }
  func.func @transform_9(%arg0: i32) -> (i32, i32, i32) {
    %c0_i32 = arith.constant 0 : i32
    %c0_i32_0 = arith.constant 0 : i32
    %c0_i32_1 = arith.constant 0 : i32
    %c0_i32_2 = arith.constant 0 : i32
    return %c0_i32, %c0_i32_0, %c0_i32_1 : i32, i32, i32
  }
  func.func @transform_10(%arg0: i32) -> (i32, i32, i32, i32) {
    %c0_i32 = arith.constant 0 : i32
    %c0_i32_0 = arith.constant 0 : i32
    %c0_i32_1 = arith.constant 0 : i32
    %c0_i32_2 = arith.constant 0 : i32
    %c0_i32_3 = arith.constant 0 : i32
    return %c0_i32, %c0_i32_0, %c0_i32_1, %c0_i32_2 : i32, i32, i32, i32
  }
  func.func @transform_11(%arg0: i32) -> (i32, i32, i32) {
    %c0_i32 = arith.constant 0 : i32
    %c0_i32_0 = arith.constant 0 : i32
    %c0_i32_1 = arith.constant 0 : i32
    %c0_i32_2 = arith.constant 0 : i32
    return %c0_i32, %c0_i32_0, %c0_i32_1 : i32, i32, i32
  }
  func.func @transform_12(%arg0: i32) -> (i32, i32, i32) {
    %c0_i32 = arith.constant 0 : i32
    %c0_i32_0 = arith.constant 0 : i32
    %c0_i32_1 = arith.constant 0 : i32
    %c0_i32_2 = arith.constant 0 : i32
    return %c0_i32, %c0_i32_0, %c0_i32_1 : i32, i32, i32
  }
  func.func @transform_13(%arg0: i32) -> (i32, i32, i32) {
    %c0_i32 = arith.constant 0 : i32
    %c0_i32_0 = arith.constant 0 : i32
    %c0_i32_1 = arith.constant 0 : i32
    %c0_i32_2 = arith.constant 0 : i32
    return %c0_i32, %c0_i32_0, %c0_i32_1 : i32, i32, i32
  }
  func.func @transform_14(%arg0: i32) -> (i32, i32, i32) {
    %c0_i32 = arith.constant 0 : i32
    %c0_i32_0 = arith.constant 0 : i32
    %c0_i32_1 = arith.constant 0 : i32
    %c0_i32_2 = arith.constant 0 : i32
    return %c0_i32, %c0_i32_0, %c0_i32_1 : i32, i32, i32
  }
  func.func @transform_15(%arg0: i32) -> (i32, i32, i32) {
    %c0_i32 = arith.constant 0 : i32
    %c0_i32_0 = arith.constant 0 : i32
    %c0_i32_1 = arith.constant 0 : i32
    return %arg0, %c0_i32, %c0_i32_0 : i32, i32, i32
  }
}

</mosaic_0001>

<llo_original>
// kernel: encoder_forward.1
$region0: #{encoder_forward.1}
  #allocation0 [shape = 'u32[]', space=smem, size = 0x4, offset = 0x4, fixed_abs, tag = 'smem constant byte address 0x4 - core index']
  #allocation1 [shape = 'u32[144,128]{1,0:T(1,128)}', space=vmem, size = 0x12000, scoped, tag = 'internal scratch']
  %s0 = inlined_call_operand.vmem [shape: f32[2,8,128], index: 0, kind: input, shape index: {}]
  %s1 = inlined_call_operand.hbm [shape: f32[2,8,128], index: 1, kind: input, shape index: {}]
  %s2 = inlined_call_operand.vmem [shape: f32[2,1,128], index: 2, kind: input, shape index: {}]
  %s3 = inlined_call_operand.vmem [shape: f32[2,1,128], index: 3, kind: input, shape index: {}]
  %s4 = inlined_call_operand.vmem [shape: f32[2,8,1], index: 4, kind: input, shape index: {}]
  %s5 = inlined_call_operand.vmem [shape: f32[2,8,1], index: 5, kind: input, shape index: {}]
  %s6 = inlined_call_operand.vmem [shape: f32[64,128], index: 6, kind: input, shape index: {}]
  %s7 = inlined_call_operand.vmem [shape: f32[128,128], index: 7, kind: input, shape index: {}]
  %s8 = inlined_call_operand.hbm [shape: bf16[2,128,384], index: 8, kind: input, shape index: {}]
  %s9 = inlined_call_operand.hbm [shape: bf16[2,128,768], index: 9, kind: input, shape index: {}]
  %s10 = inlined_call_operand.hbm [shape: bf16[2,3,128,128], index: 10, kind: input, shape index: {}]
  %s11 = inlined_call_operand.hbm [shape: bf16[2,128,256], index: 11, kind: input, shape index: {}]
  %s12 = inlined_call_operand.hbm [shape: bf16[2,256,128], index: 12, kind: input, shape index: {}]
  %s13 = inlined_call_operand.hbm [shape: f32[2,4,768], index: 13, kind: input, shape index: {}]
  %s14 = inlined_call_operand.vmem [shape: f32[2,8,1], index: 14, kind: input, shape index: {}]
  %s15 = inlined_call_operand.hbm [shape: f32[2,8,128], index: 15, kind: output, shape index: {}]
  %s16 = sld [smem:[#allocation0]]
  $region121: #{encoder_forward.1} parent=0
    _
  %s18 = ssub.s32 1, %s16
  %s19 = scalar_select 0, %s18, %s16
  $region1: #{encoder_forward.1} parent=0
    #allocation2 [shape = 'u8[8192]{0}', space=vmem, size = 0x2000, scoped, tag = 'input window, operand 1']
    #allocation3 [shape = 's32[2]{0}', space=sflag, size = 0x8, scoped, tag = 'scoped memory for encoder_forward.1']
    #allocation4 [shape = 's32[2]{0}', space=sflag, size = 0x8, scoped, tag = 'scoped memory for encoder_forward.1']
    #allocation5 [shape = 'u8[196608]{0}', space=vmem, size = 0x30000, scoped, tag = 'input window, operand 8, single buffered']
    #allocation6 [shape = 's32[1]{0}', space=sflag, size = 0x4, scoped, tag = 'scoped memory for encoder_forward.1']
    #allocation7 [shape = 'u8[393216]{0}', space=vmem, size = 0x60000, scoped, tag = 'input window, operand 9, single buffered']
    #allocation8 [shape = 'u8[196608]{0}', space=vmem, size = 0x30000, scoped, tag = 'input window, operand 10, single buffered']
    #allocation9 [shape = 's32[1]{0}', space=sflag, size = 0x4, scoped, tag = 'scoped memory for encoder_forward.1']
    #allocation10 [shape = 'u8[131072]{0}', space=vmem, size = 0x20000, scoped, tag = 'input window, operand 11, single buffered']
    #allocation11 [shape = 'u8[131072]{0}', space=vmem, size = 0x20000, scoped, tag = 'input window, operand 12, single buffered']
    #allocation12 [shape = 's32[1]{0}', space=sflag, size = 0x4, scoped, tag = 'scoped memory for encoder_forward.1']
    #allocation13 [shape = 'u8[24576]{0}', space=vmem, size = 0x6000, scoped, tag = 'input window, operand 13, single buffered']
    #allocation14 [shape = 'u8[8192]{0}', space=vmem, size = 0x2000, scoped, tag = 'output window, operand 0']
    %20 = vsyncpa [#allocation3], 0
    %s21 = scalar_lea.sflag [#allocation3], 1
    %22 = vsyncpa %s21, 0
    %23 = vsyncpa [#allocation6], 0
    %24 = vsyncpa [#allocation9], 0
    %25 = vsyncpa [#allocation12], 0
    %26 = vsyncpa [#allocation4], 0
    %s27 = scalar_lea.sflag [#allocation4], 1
    %28 = vsyncpa %s27, 0
    loop: start=0, step=1, limit=4
    $region2: #{encoder_forward.1} parent=1 // loop_pre_header
      _
    $region3: #{encoder_forward.1} parent=1 // loop_header
      %s30 = sphi 0, %s34
      %p31 = scmp.ge.s32.totalorder %s30, 4
      %s40 = sphi 0, %s42
      %s43 = sphi 0, %s40
      %s44 = sphi 0, %s43
      %s60 = sphi 0, %s44
      %s66 = sphi 0, %s68
      %s69 = sphi 0, %s66
      %s70 = sphi 0, %s69
      %s86 = sphi 0, %s70
      %s92 = sphi 0, %s94
      %s95 = sphi 0, %s92
      %s96 = sphi 0, %s95
      %s112 = sphi 0, %s96
      %s118 = sphi 0, %s120
      %s121 = sphi 0, %s118
      %s122 = sphi 0, %s121
      %s138 = sphi 0, %s122
      %s144 = sphi 0, %s146
      %s147 = sphi 0, %s144
      %s148 = sphi 0, %s147
      %s164 = sphi 0, %s148
      %s170 = sphi 0, %s172
      %s173 = sphi 0, %s170
      %s174 = sphi 0, %s173
      %s190 = sphi 0, %s174
      %s194 = sphi 0, %s194
      %s196 = sphi 0, %s194
      %s197 = sphi 0, %s196
      %s211 = sphi 0, %s197
      %s215 = sphi 0, %s215
      %s217 = sphi 0, %s215
      %s218 = sphi 0, %s217
      %s232 = sphi 0, %s218
      %s236 = sphi 0, %s236
      %s238 = sphi 0, %s236
      %s239 = sphi 0, %s238
      %s253 = sphi 0, %s239
      %s257 = sphi 0, %s257
      %s259 = sphi 0, %s257
      %s260 = sphi 0, %s259
      %s274 = sphi 0, %s260
      %s278 = sphi 0, %s278
      %s280 = sphi 0, %s278
      %s281 = sphi 0, %s280
      %s295 = sphi 0, %s281
      %s299 = sphi 0, %s299
      %s301 = sphi 0, %s299
      %s302 = sphi 0, %s301
      %s316 = sphi 0, %s302
      %s320 = sphi 0, %s320
      %s322 = sphi 0, %s320
      %s323 = sphi 0, %s322
      %s337 = sphi 0, %s323
      %s341 = sphi 0, %s341
      %s343 = sphi 0, %s341
      %s344 = sphi 0, %s343
      %s358 = sphi 0, %s344
      %s362 = sphi 0, %s362
      %s364 = sphi 0, %s362
      %s365 = sphi 0, %s364
      %s379 = sphi 0, %s365
      %s385 = sphi 0, %s387
      %s388 = sphi 0, %s385
      %s389 = sphi 0, %s388
      %s405 = sphi 0, %s389
    $region4: #{encoder_forward.1} parent=1 // loop_header_branch
      %33 = sbr.rel (%p31) target = $region8
    $region5: #{encoder_forward.1} parent=1 // loop_body
      %s35 = ssub.s32 %s30, 1
      %s36 = ssub.s32 %s30, 2
      %s37 = sadd.s32 %s30, 1
      %s38 = ssub.s32 %s30, %s37
      %p39 = scmp.eq.s32.totalorder %s38, 0
      %s41 = sadd.s32 %s40, 1
      %s42 = scalar_select %p39, %s40, %s41
      %p45 = pneg %p39
      %p46 = scmp.eq.s32.totalorder %s30, 1
      %p47 = por %p45, %p46
      %p48 = scmp.ne.s32.totalorder %s40, %s43
      %p49 = scmp.eq.s32.totalorder %s30, 0
      %p50 = por %p48, %p49
      %p51 = scmp.ne.s32.totalorder %s40, %s43
      %p52 = scmp.eq.s32.totalorder %s35, 1
      %p53 = por %p51, %p52
      %p54 = scmp.ne.s32.totalorder %s43, %s44
      %p55 = scmp.eq.s32.totalorder %s35, 0
      %p56 = por %p54, %p55
      %p57 = scmp.ne.s32.totalorder %s43, %s44
      %p58 = scmp.eq.s32.totalorder %s36, 1
      %p59 = por %p57, %p58
      %p61 = scmp.ne.s32.totalorder %s44, %s60
      %p62 = scmp.eq.s32.totalorder %s36, 0
      %p63 = por %p61, %p62
      %s64 = ssub.s32 %s30, %s37
      %p65 = scmp.eq.s32.totalorder %s64, 0
      %s67 = sadd.s32 %s66, 1
      %s68 = scalar_select %p65, %s66, %s67
      %p71 = pneg %p65
      %p72 = scmp.eq.s32.totalorder %s30, 1
      %p73 = por %p71, %p72
      %p74 = scmp.ne.s32.totalorder %s66, %s69
      %p75 = scmp.eq.s32.totalorder %s30, 0
      %p76 = por %p74, %p75
      %p77 = scmp.ne.s32.totalorder %s66, %s69
      %p78 = scmp.eq.s32.totalorder %s35, 1
      %p79 = por %p77, %p78
      %p80 = scmp.ne.s32.totalorder %s69, %s70
      %p81 = scmp.eq.s32.totalorder %s35, 0
      %p82 = por %p80, %p81
      %p83 = scmp.ne.s32.totalorder %s69, %s70
      %p84 = scmp.eq.s32.totalorder %s36, 1
      %p85 = por %p83, %p84
      %p87 = scmp.ne.s32.totalorder %s70, %s86
      %p88 = scmp.eq.s32.totalorder %s36, 0
      %p89 = por %p87, %p88
      %s90 = ssub.s32 %s30, %s37
      %p91 = scmp.eq.s32.totalorder %s90, 0
      %s93 = sadd.s32 %s92, 1
      %s94 = scalar_select %p91, %s92, %s93
      %p97 = pneg %p91
      %p98 = scmp.eq.s32.totalorder %s30, 1
      %p99 = por %p97, %p98
      %p100 = scmp.ne.s32.totalorder %s92, %s95
      %p101 = scmp.eq.s32.totalorder %s30, 0
      %p102 = por %p100, %p101
      %p103 = scmp.ne.s32.totalorder %s92, %s95
      %p104 = scmp.eq.s32.totalorder %s35, 1
      %p105 = por %p103, %p104
      %p106 = scmp.ne.s32.totalorder %s95, %s96
      %p107 = scmp.eq.s32.totalorder %s35, 0
      %p108 = por %p106, %p107
      %p109 = scmp.ne.s32.totalorder %s95, %s96
      %p110 = scmp.eq.s32.totalorder %s36, 1
      %p111 = por %p109, %p110
      %p113 = scmp.ne.s32.totalorder %s96, %s112
      %p114 = scmp.eq.s32.totalorder %s36, 0
      %p115 = por %p113, %p114
      %s116 = ssub.s32 %s30, %s37
      %p117 = scmp.eq.s32.totalorder %s116, 0
      %s119 = sadd.s32 %s118, 1
      %s120 = scalar_select %p117, %s118, %s119
      %p123 = pneg %p117
      %p124 = scmp.eq.s32.totalorder %s30, 1
      %p125 = por %p123, %p124
      %p126 = scmp.ne.s32.totalorder %s118, %s121
      %p127 = scmp.eq.s32.totalorder %s30, 0
      %p128 = por %p126, %p127
      %p129 = scmp.ne.s32.totalorder %s118, %s121
      %p130 = scmp.eq.s32.totalorder %s35, 1
      %p131 = por %p129, %p130
      %p132 = scmp.ne.s32.totalorder %s121, %s122
      %p133 = scmp.eq.s32.totalorder %s35, 0
      %p134 = por %p132, %p133
      %p135 = scmp.ne.s32.totalorder %s121, %s122
      %p136 = scmp.eq.s32.totalorder %s36, 1
      %p137 = por %p135, %p136
      %p139 = scmp.ne.s32.totalorder %s122, %s138
      %p140 = scmp.eq.s32.totalorder %s36, 0
      %p141 = por %p139, %p140
      %s142 = ssub.s32 %s30, %s37
      %p143 = scmp.eq.s32.totalorder %s142, 0
      %s145 = sadd.s32 %s144, 1
      %s146 = scalar_select %p143, %s144, %s145
      %p149 = pneg %p143
      %p150 = scmp.eq.s32.totalorder %s30, 1
      %p151 = por %p149, %p150
      %p152 = scmp.ne.s32.totalorder %s144, %s147
      %p153 = scmp.eq.s32.totalorder %s30, 0
      %p154 = por %p152, %p153
      %p155 = scmp.ne.s32.totalorder %s144, %s147
      %p156 = scmp.eq.s32.totalorder %s35, 1
      %p157 = por %p155, %p156
      %p158 = scmp.ne.s32.totalorder %s147, %s148
      %p159 = scmp.eq.s32.totalorder %s35, 0
      %p160 = por %p158, %p159
      %p161 = scmp.ne.s32.totalorder %s147, %s148
      %p162 = scmp.eq.s32.totalorder %s36, 1
      %p163 = por %p161, %p162
      %p165 = scmp.ne.s32.totalorder %s148, %s164
      %p166 = scmp.eq.s32.totalorder %s36, 0
      %p167 = por %p165, %p166
      %s168 = ssub.s32 %s30, %s37
      %p169 = scmp.eq.s32.totalorder %s168, 0
      %s171 = sadd.s32 %s170, 1
      %s172 = scalar_select %p169, %s170, %s171
      %p175 = pneg %p169
      %p176 = scmp.eq.s32.totalorder %s30, 1
      %p177 = por %p175, %p176
      %p178 = scmp.ne.s32.totalorder %s170, %s173
      %p179 = scmp.eq.s32.totalorder %s30, 0
      %p180 = por %p178, %p179
      %p181 = scmp.ne.s32.totalorder %s170, %s173
      %p182 = scmp.eq.s32.totalorder %s35, 1
      %p183 = por %p181, %p182
      %p184 = scmp.ne.s32.totalorder %s173, %s174
      %p185 = scmp.eq.s32.totalorder %s35, 0
      %p186 = por %p184, %p185
      %p187 = scmp.ne.s32.totalorder %s173, %s174
      %p188 = scmp.eq.s32.totalorder %s36, 1
      %p189 = por %p187, %p188
      %p191 = scmp.ne.s32.totalorder %s174, %s190
      %p192 = scmp.eq.s32.totalorder %s36, 0
      %p193 = por %p191, %p192
      %s195 = sadd.s32 %s194, 1
      %p198 = scmp.eq.s32.totalorder %s30, 1
      %p199 = scmp.ne.s32.totalorder %s194, %s196
      %p200 = scmp.eq.s32.totalorder %s30, 0
      %p201 = por %p199, %p200
      %p202 = scmp.ne.s32.totalorder %s194, %s196
      %p203 = scmp.eq.s32.totalorder %s35, 1
      %p204 = por %p202, %p203
      %p205 = scmp.ne.s32.totalorder %s196, %s197
      %p206 = scmp.eq.s32.totalorder %s35, 0
      %p207 = por %p205, %p206
      %p208 = scmp.ne.s32.totalorder %s196, %s197
      %p209 = scmp.eq.s32.totalorder %s36, 1
      %p210 = por %p208, %p209
      %p212 = scmp.ne.s32.totalorder %s197, %s211
      %p213 = scmp.eq.s32.totalorder %s36, 0
      %p214 = por %p212, %p213
      %s216 = sadd.s32 %s215, 1
      %p219 = scmp.eq.s32.totalorder %s30, 1
      %p220 = scmp.ne.s32.totalorder %s215, %s217
      %p221 = scmp.eq.s32.totalorder %s30, 0
      %p222 = por %p220, %p221
      %p223 = scmp.ne.s32.totalorder %s215, %s217
      %p224 = scmp.eq.s32.totalorder %s35, 1
      %p225 = por %p223, %p224
      %p226 = scmp.ne.s32.totalorder %s217, %s218
      %p227 = scmp.eq.s32.totalorder %s35, 0
      %p228 = por %p226, %p227
      %p229 = scmp.ne.s32.totalorder %s217, %s218
      %p230 = scmp.eq.s32.totalorder %s36, 1
      %p231 = por %p229, %p230
      %p233 = scmp.ne.s32.totalorder %s218, %s232
      %p234 = scmp.eq.s32.totalorder %s36, 0
      %p235 = por %p233, %p234
      %s237 = sadd.s32 %s236, 1
      %p240 = scmp.eq.s32.totalorder %s30, 1
      %p241 = scmp.ne.s32.totalorder %s236, %s238
      %p242 = scmp.eq.s32.totalorder %s30, 0
      %p243 = por %p241, %p242
      %p244 = scmp.ne.s32.totalorder %s236, %s238
      %p245 = scmp.eq.s32.totalorder %s35, 1
      %p246 = por %p244, %p245
      %p247 = scmp.ne.s32.totalorder %s238, %s239
      %p248 = scmp.eq.s32.totalorder %s35, 0
      %p249 = por %p247, %p248
      %p250 = scmp.ne.s32.totalorder %s238, %s239
      %p251 = scmp.eq.s32.totalorder %s36, 1
      %p252 = por %p250, %p251
      %p254 = scmp.ne.s32.totalorder %s239, %s253
      %p255 = scmp.eq.s32.totalorder %s36, 0
      %p256 = por %p254, %p255
      %s258 = sadd.s32 %s257, 1
      %p261 = scmp.eq.s32.totalorder %s30, 1
      %p262 = scmp.ne.s32.totalorder %s257, %s259
      %p263 = scmp.eq.s32.totalorder %s30, 0
      %p264 = por %p262, %p263
      %p265 = scmp.ne.s32.totalorder %s257, %s259
      %p266 = scmp.eq.s32.totalorder %s35, 1
      %p267 = por %p265, %p266
      %p268 = scmp.ne.s32.totalorder %s259, %s260
      %p269 = scmp.eq.s32.totalorder %s35, 0
      %p270 = por %p268, %p269
      %p271 = scmp.ne.s32.totalorder %s259, %s260
      %p272 = scmp.eq.s32.totalorder %s36, 1
      %p273 = por %p271, %p272
      %p275 = scmp.ne.s32.totalorder %s260, %s274
      %p276 = scmp.eq.s32.totalorder %s36, 0
      %p277 = por %p275, %p276
      %s279 = sadd.s32 %s278, 1
      %p282 = scmp.eq.s32.totalorder %s30, 1
      %p283 = scmp.ne.s32.totalorder %s278, %s280
      %p284 = scmp.eq.s32.totalorder %s30, 0
      %p285 = por %p283, %p284
      %p286 = scmp.ne.s32.totalorder %s278, %s280
      %p287 = scmp.eq.s32.totalorder %s35, 1
      %p288 = por %p286, %p287
      %p289 = scmp.ne.s32.totalorder %s280, %s281
      %p290 = scmp.eq.s32.totalorder %s35, 0
      %p291 = por %p289, %p290
      %p292 = scmp.ne.s32.totalorder %s280, %s281
      %p293 = scmp.eq.s32.totalorder %s36, 1
      %p294 = por %p292, %p293
      %p296 = scmp.ne.s32.totalorder %s281, %s295
      %p297 = scmp.eq.s32.totalorder %s36, 0
      %p298 = por %p296, %p297
      %s300 = sadd.s32 %s299, 1
      %p303 = scmp.eq.s32.totalorder %s30, 1
      %p304 = scmp.ne.s32.totalorder %s299, %s301
      %p305 = scmp.eq.s32.totalorder %s30, 0
      %p306 = por %p304, %p305
      %p307 = scmp.ne.s32.totalorder %s299, %s301
      %p308 = scmp.eq.s32.totalorder %s35, 1
      %p309 = por %p307, %p308
      %p310 = scmp.ne.s32.totalorder %s301, %s302
      %p311 = scmp.eq.s32.totalorder %s35, 0
      %p312 = por %p310, %p311
      %p313 = scmp.ne.s32.totalorder %s301, %s302
      %p314 = scmp.eq.s32.totalorder %s36, 1
      %p315 = por %p313, %p314
      %p317 = scmp.ne.s32.totalorder %s302, %s316
      %p318 = scmp.eq.s32.totalorder %s36, 0
      %p319 = por %p317, %p318
      %s321 = sadd.s32 %s320, 1
      %p324 = scmp.eq.s32.totalorder %s30, 1
      %p325 = scmp.ne.s32.totalorder %s320, %s322
      %p326 = scmp.eq.s32.totalorder %s30, 0
      %p327 = por %p325, %p326
      %p328 = scmp.ne.s32.totalorder %s320, %s322
      %p329 = scmp.eq.s32.totalorder %s35, 1
      %p330 = por %p328, %p329
      %p331 = scmp.ne.s32.totalorder %s322, %s323
      %p332 = scmp.eq.s32.totalorder %s35, 0
      %p333 = por %p331, %p332
      %p334 = scmp.ne.s32.totalorder %s322, %s323
      %p335 = scmp.eq.s32.totalorder %s36, 1
      %p336 = por %p334, %p335
      %p338 = scmp.ne.s32.totalorder %s323, %s337
      %p339 = scmp.eq.s32.totalorder %s36, 0
      %p340 = por %p338, %p339
      %s342 = sadd.s32 %s341, 1
      %p345 = scmp.eq.s32.totalorder %s30, 1
      %p346 = scmp.ne.s32.totalorder %s341, %s343
      %p347 = scmp.eq.s32.totalorder %s30, 0
      %p348 = por %p346, %p347
      %p349 = scmp.ne.s32.totalorder %s341, %s343
      %p350 = scmp.eq.s32.totalorder %s35, 1
      %p351 = por %p349, %p350
      %p352 = scmp.ne.s32.totalorder %s343, %s344
      %p353 = scmp.eq.s32.totalorder %s35, 0
      %p354 = por %p352, %p353
      %p355 = scmp.ne.s32.totalorder %s343, %s344
      %p356 = scmp.eq.s32.totalorder %s36, 1
      %p357 = por %p355, %p356
      %p359 = scmp.ne.s32.totalorder %s344, %s358
      %p360 = scmp.eq.s32.totalorder %s36, 0
      %p361 = por %p359, %p360
      %s363 = sadd.s32 %s362, 1
      %p366 = scmp.eq.s32.totalorder %s30, 1
      %p367 = scmp.ne.s32.totalorder %s362, %s364
      %p368 = scmp.eq.s32.totalorder %s30, 0
      %p369 = por %p367, %p368
      %p370 = scmp.ne.s32.totalorder %s362, %s364
      %p371 = scmp.eq.s32.totalorder %s35, 1
      %p372 = por %p370, %p371
      %p373 = scmp.ne.s32.totalorder %s364, %s365
      %p374 = scmp.eq.s32.totalorder %s35, 0
      %p375 = por %p373, %p374
      %p376 = scmp.ne.s32.totalorder %s364, %s365
      %p377 = scmp.eq.s32.totalorder %s36, 1
      %p378 = por %p376, %p377
      %p380 = scmp.ne.s32.totalorder %s365, %s379
      %p381 = scmp.eq.s32.totalorder %s36, 0
      %p382 = por %p380, %p381
      %s383 = ssub.s32 %s30, %s37
      %p384 = scmp.eq.s32.totalorder %s383, 0
      %s386 = sadd.s32 %s385, 1
      %s387 = scalar_select %p384, %s385, %s386
      %p390 = pneg %p384
      %p391 = scmp.eq.s32.totalorder %s30, 1
      %p392 = por %p390, %p391
      %p393 = scmp.ne.s32.totalorder %s385, %s388
      %p394 = scmp.eq.s32.totalorder %s30, 0
      %p395 = por %p393, %p394
      %p396 = scmp.ne.s32.totalorder %s385, %s388
      %p397 = scmp.eq.s32.totalorder %s35, 1
      %p398 = por %p396, %p397
      %p399 = scmp.ne.s32.totalorder %s388, %s389
      %p400 = scmp.eq.s32.totalorder %s35, 0
      %p401 = por %p399, %p400
      %p402 = scmp.ne.s32.totalorder %s388, %s389
      %p403 = scmp.eq.s32.totalorder %s36, 1
      %p404 = por %p402, %p403
      %p406 = scmp.ne.s32.totalorder %s389, %s405
      %p407 = scmp.eq.s32.totalorder %s36, 0
      %p408 = por %p406, %p407
      %p409 = scmp.le.s32.totalorder 1, %s30
      %p410 = scmp.lt.s32.totalorder %s30, 3
      %p411 = pnand %p409, %p410
      %p412 = pneg %p411
      // Predicated region
      $region9: #{encoder_forward.1} parent=5 // pred_check
        _
      $region10: #{encoder_forward.1} parent=5 // pred_check_branch
        %414 = sbr.rel (%p411) target = $region12
      $region11: #{encoder_forward.1} parent=5 // pred_region
        %s415 = ssub.s32 %s30, 1
        // Predicated region
        $region13: #{encoder_forward.1} parent=11 // pred_check
          %p416 = pneg %p207
        $region14: #{encoder_forward.1} parent=11 // pred_check_branch
          %418 = sbr.rel (%p416) target = $region16
        $region15: #{encoder_forward.1} parent=11 // pred_region
          _
        $region16: #{encoder_forward.1} parent=11 // pred_fallthru
          _
        // Predicated region
        $region17: #{encoder_forward.1} parent=11 // pred_check
          %p419 = pneg %p228
        $region18: #{encoder_forward.1} parent=11 // pred_check_branch
          %421 = sbr.rel (%p419) target = $region20
        $region19: #{encoder_forward.1} parent=11 // pred_region
          _
        $region20: #{encoder_forward.1} parent=11 // pred_fallthru
          _
        // Predicated region
        $region21: #{encoder_forward.1} parent=11 // pred_check
          %p422 = pneg %p249
        $region22: #{encoder_forward.1} parent=11 // pred_check_branch
          %424 = sbr.rel (%p422) target = $region24
        $region23: #{encoder_forward.1} parent=11 // pred_region
          %s426 = ssub.s32 6144, 6144
          %427 = vsyncadd [#allocation6], %s426
          %s428 = sshll.u32 [#allocation5], 4
          %s429 = int_to_ptr.vmem [resolvable:$true] %s428
          %434 = dma.hbm_to_vmem [thread:$0]  %s8, 6144, %s429, [#allocation6], 192, 192, 12
        $region24: #{encoder_forward.1} parent=11 // pred_fallthru
          _
        // Predicated region
        $region25: #{encoder_forward.1} parent=11 // pred_check
          %p435 = pneg %p270
        $region26: #{encoder_forward.1} parent=11 // pred_check_branch
          %437 = sbr.rel (%p435) target = $region28
        $region27: #{encoder_forward.1} parent=11 // pred_region
          %s439 = ssub.s32 12288, 12288
          %440 = vsyncadd [#allocation6], %s439
          %s441 = sshll.u32 [#allocation7], 4
          %s442 = int_to_ptr.vmem [resolvable:$true] %s441
          %447 = dma.hbm_to_vmem [thread:$0]  %s9, 12288, %s442, [#allocation6], 384, 384, 24
        $region28: #{encoder_forward.1} parent=11 // pred_fallthru
          _
        // Predicated region
        $region29: #{encoder_forward.1} parent=11 // pred_check
          %p448 = pneg %p291
        $region30: #{encoder_forward.1} parent=11 // pred_check_branch
          %450 = sbr.rel (%p448) target = $region32
        $region31: #{encoder_forward.1} parent=11 // pred_region
          %s452 = ssub.s32 6144, 6144
          %453 = vsyncadd [#allocation9], %s452
          %s454 = sshll.u32 [#allocation8], 4
          %s455 = int_to_ptr.vmem [resolvable:$true] %s454
          %460 = dma.hbm_to_vmem [thread:$0]  %s10, 6144, %s455, [#allocation9], 64, 64, 4
        $region32: #{encoder_forward.1} parent=11 // pred_fallthru
          _
        // Predicated region
        $region33: #{encoder_forward.1} parent=11 // pred_check
          %p461 = pneg %p312
        $region34: #{encoder_forward.1} parent=11 // pred_check_branch
          %463 = sbr.rel (%p461) target = $region36
        $region35: #{encoder_forward.1} parent=11 // pred_region
          %s465 = ssub.s32 4096, 4096
          %466 = vsyncadd [#allocation9], %s465
          %s467 = sshll.u32 [#allocation10], 4
          %s468 = int_to_ptr.vmem [resolvable:$true] %s467
          %473 = dma.hbm_to_vmem [thread:$0]  %s11, 4096, %s468, [#allocation9], 128, 128, 8
        $region36: #{encoder_forward.1} parent=11 // pred_fallthru
          _
        // Predicated region
        $region37: #{encoder_forward.1} parent=11 // pred_check
          %p474 = pneg %p333
        $region38: #{encoder_forward.1} parent=11 // pred_check_branch
          %476 = sbr.rel (%p474) target = $region40
        $region39: #{encoder_forward.1} parent=11 // pred_region
          %s478 = ssub.s32 4096, 4096
          %479 = vsyncadd [#allocation12], %s478
          %s480 = sshll.u32 [#allocation11], 4
          %s481 = int_to_ptr.vmem [resolvable:$true] %s480
          %486 = dma.hbm_to_vmem [thread:$0]  %s12, 4096, %s481, [#allocation12], 64, 64, 4
        $region40: #{encoder_forward.1} parent=11 // pred_fallthru
          _
        // Predicated region
        $region41: #{encoder_forward.1} parent=11 // pred_check
          %p487 = pneg %p354
        $region42: #{encoder_forward.1} parent=11 // pred_check_branch
          %489 = sbr.rel (%p487) target = $region44
        $region43: #{encoder_forward.1} parent=11 // pred_region
          %s491 = ssub.s32 768, 768
          %492 = vsyncadd [#allocation12], %s491
          %s493 = sshll.u32 [#allocation13], 4
          %s494 = int_to_ptr.vmem [resolvable:$true] %s493
          %499 = dma.hbm_to_vmem [thread:$0]  %s13, 768, %s494, [#allocation12], 384, 384, 24
        $region44: #{encoder_forward.1} parent=11 // pred_fallthru
          _
        // Predicated region
        $region45: #{encoder_forward.1} parent=11 // pred_check
          %p500 = pneg %p375
        $region46: #{encoder_forward.1} parent=11 // pred_check_branch
          %502 = sbr.rel (%p500) target = $region48
        $region47: #{encoder_forward.1} parent=11 // pred_region
          _
        $region48: #{encoder_forward.1} parent=11 // pred_fallthru
          _
      $region12: #{encoder_forward.1} parent=5 // pred_fallthru
        _
      %p503 = scmp.lt.s32.totalorder %s30, 2
      // Predicated region
      $region49: #{encoder_forward.1} parent=5 // pred_check
        %p504 = pneg %p503
      $region50: #{encoder_forward.1} parent=5 // pred_check_branch
        %506 = sbr.rel (%p504) target = $region52
      $region51: #{encoder_forward.1} parent=5 // pred_region
        // Predicated region
        $region53: #{encoder_forward.1} parent=51 // pred_check
          %p507 = pneg %p50
        $region54: #{encoder_forward.1} parent=51 // pred_check_branch
          %509 = sbr.rel (%p507) target = $region56
        $region55: #{encoder_forward.1} parent=51 // pred_region
          %p510 = scmp.lt.s32.totalorder %s30, 1
          %s511 = scalar_select %p510, %s30, 1
          %s512 = smul.addr %s511, 8
          %s513 = scalar_lea.vmem %s0, %s512
        $region56: #{encoder_forward.1} parent=51 // pred_fallthru
          _
        // Predicated region
        $region57: #{encoder_forward.1} parent=51 // pred_check
          %p514 = pneg %p76
        $region58: #{encoder_forward.1} parent=51 // pred_check_branch
          %516 = sbr.rel (%p514) target = $region60
        $region59: #{encoder_forward.1} parent=51 // pred_region
          %s517 = sand.u32 %s66, 1
          %s518 = scalar_lea.sflag [#allocation3], %s517
          %s519 = sand.u32 %s66, 1
          %s520 = smul.addr %s519, 8
          %s521 = scalar_lea.vmem [#allocation2], %s520
          %s523 = ssub.s32 128, 128
          %524 = vsyncadd %s518, %s523
          %s525 = smul.addr %s30, 128
          %s526 = scalar_lea.hbm %s1, %s525
          %s528 = sshll.u32 %s521, 4
          %s529 = int_to_ptr.vmem [resolvable:$true] %s528
          %531 = dma.hbm_to_vmem [thread:$0]  %s526, 128, %s529, %s518
        $region60: #{encoder_forward.1} parent=51 // pred_fallthru
          _
        // Predicated region
        $region61: #{encoder_forward.1} parent=51 // pred_check
          %p532 = pneg %p102
        $region62: #{encoder_forward.1} parent=51 // pred_check_branch
          %534 = sbr.rel (%p532) target = $region64
        $region63: #{encoder_forward.1} parent=51 // pred_region
          %p535 = scmp.lt.s32.totalorder %s30, 1
          %s536 = scalar_select %p535, %s30, 1
          %s537 = scalar_lea.vmem %s2, %s536
        $region64: #{encoder_forward.1} parent=51 // pred_fallthru
          _
        // Predicated region
        $region65: #{encoder_forward.1} parent=51 // pred_check
          %p538 = pneg %p128
        $region66: #{encoder_forward.1} parent=51 // pred_check_branch
          %540 = sbr.rel (%p538) target = $region68
        $region67: #{encoder_forward.1} parent=51 // pred_region
          %p541 = scmp.lt.s32.totalorder %s30, 1
          %s542 = scalar_select %p541, %s30, 1
          %s543 = scalar_lea.vmem %s3, %s542
        $region68: #{encoder_forward.1} parent=51 // pred_fallthru
          _
        // Predicated region
        $region69: #{encoder_forward.1} parent=51 // pred_check
          %p544 = pneg %p154
        $region70: #{encoder_forward.1} parent=51 // pred_check_branch
          %546 = sbr.rel (%p544) target = $region72
        $region71: #{encoder_forward.1} parent=51 // pred_region
          %p547 = scmp.lt.s32.totalorder %s30, 1
          %s548 = scalar_select %p547, %s30, 1
          %s549 = smul.addr %s548, 8
          %s550 = scalar_lea.vmem %s4, %s549
        $region72: #{encoder_forward.1} parent=51 // pred_fallthru
          _
        // Predicated region
        $region73: #{encoder_forward.1} parent=51 // pred_check
          %p551 = pneg %p180
        $region74: #{encoder_forward.1} parent=51 // pred_check_branch
          %553 = sbr.rel (%p551) target = $region76
        $region75: #{encoder_forward.1} parent=51 // pred_region
          %p554 = scmp.lt.s32.totalorder %s30, 1
          %s555 = scalar_select %p554, %s30, 1
          %s556 = smul.addr %s555, 8
          %s557 = scalar_lea.vmem %s5, %s556
        $region76: #{encoder_forward.1} parent=51 // pred_fallthru
          _
      $region52: #{encoder_forward.1} parent=5 // pred_fallthru
        _
      %p558 = scmp.le.s32.totalorder 1, %s30
      %p559 = scmp.lt.s32.totalorder %s30, 3
      %p560 = pnand %p558, %p559
      %p561 = pneg %p560
      // Predicated region
      $region77: #{encoder_forward.1} parent=5 // pred_check
        _
      $region78: #{encoder_forward.1} parent=5 // pred_check_branch
        %563 = sbr.rel (%p560) target = $region80
      $region79: #{encoder_forward.1} parent=5 // pred_region
        %s564 = ssub.s32 %s30, 1
        %s565 = sand.u32 %s69, 1
        %s566 = scalar_lea.sflag [#allocation3], %s565
        %s567 = sand.u32 %s69, 1
        %s568 = smul.addr %s567, 8
        %s569 = scalar_lea.vmem [#allocation2], %s568
        // Predicated region
        $region81: #{encoder_forward.1} parent=79 // pred_check
          %p570 = pneg %p82
        $region82: #{encoder_forward.1} parent=79 // pred_check_branch
          %572 = sbr.rel (%p570) target = $region84
        $region83: #{encoder_forward.1} parent=79 // pred_region
          %573 = dma.done %s566, 128
        $region84: #{encoder_forward.1} parent=79 // pred_fallthru
          _
        // Predicated region
        $region85: #{encoder_forward.1} parent=79 // pred_check
          %p574 = pneg %p249
        $region86: #{encoder_forward.1} parent=79 // pred_check_branch
          %576 = sbr.rel (%p574) target = $region88
        $region87: #{encoder_forward.1} parent=79 // pred_region
          %577 = dma.done [#allocation6], 6144
        $region88: #{encoder_forward.1} parent=79 // pred_fallthru
          _
        // Predicated region
        $region89: #{encoder_forward.1} parent=79 // pred_check
          %p578 = pneg %p270
        $region90: #{encoder_forward.1} parent=79 // pred_check_branch
          %580 = sbr.rel (%p578) target = $region92
        $region91: #{encoder_forward.1} parent=79 // pred_region
          %581 = dma.done [#allocation6], 12288
        $region92: #{encoder_forward.1} parent=79 // pred_fallthru
          _
        // Predicated region
        $region93: #{encoder_forward.1} parent=79 // pred_check
          %p582 = pneg %p291
        $region94: #{encoder_forward.1} parent=79 // pred_check_branch
          %584 = sbr.rel (%p582) target = $region96
        $region95: #{encoder_forward.1} parent=79 // pred_region
          %585 = dma.done [#allocation9], 6144
        $region96: #{encoder_forward.1} parent=79 // pred_fallthru
          _
        // Predicated region
        $region97: #{encoder_forward.1} parent=79 // pred_check
          %p586 = pneg %p312
        $region98: #{encoder_forward.1} parent=79 // pred_check_branch
          %588 = sbr.rel (%p586) target = $region100
        $region99: #{encoder_forward.1} parent=79 // pred_region
          %589 = dma.done [#allocation9], 4096
        $region100: #{encoder_forward.1} parent=79 // pred_fallthru
          _
        // Predicated region
        $region101: #{encoder_forward.1} parent=79 // pred_check
          %p590 = pneg %p333
        $region102: #{encoder_forward.1} parent=79 // pred_check_branch
          %592 = sbr.rel (%p590) target = $region104
        $region103: #{encoder_forward.1} parent=79 // pred_region
          %593 = dma.done [#allocation12], 4096
        $region104: #{encoder_forward.1} parent=79 // pred_fallthru
          _
        // Predicated region
        $region105: #{encoder_forward.1} parent=79 // pred_check
          %p594 = pneg %p354
        $region106: #{encoder_forward.1} parent=79 // pred_check_branch
          %596 = sbr.rel (%p594) target = $region108
        $region107: #{encoder_forward.1} parent=79 // pred_region
          %597 = dma.done [#allocation12], 768
        $region108: #{encoder_forward.1} parent=79 // pred_fallthru
          _
        %p598 = scmp.lt.s32.totalorder %s35, 1
        %s599 = scalar_select %p598, %s35, 1
        %s600 = smul.addr %s599, 8
        %s601 = scalar_lea.vmem %s0, %s600
        %p602 = pneg %p56
        %p603 = pneg %p53
        %s604 = sand.u32 %s69, 1
        %s605 = scalar_lea.sflag [#allocation3], %s604
        %s606 = sand.u32 %s69, 1
        %s607 = smul.addr %s606, 8
        %s608 = scalar_lea.vmem [#allocation2], %s607
        %p609 = pneg %p82
        %p610 = pneg %p79
        %p611 = scmp.lt.s32.totalorder %s35, 1
        %s612 = scalar_select %p611, %s35, 1
        %s613 = scalar_lea.vmem %s2, %s612
        %p614 = pneg %p108
        %p615 = pneg %p105
        %p616 = scmp.lt.s32.totalorder %s35, 1
        %s617 = scalar_select %p616, %s35, 1
        %s618 = scalar_lea.vmem %s3, %s617
        %p619 = pneg %p134
        %p620 = pneg %p131
        %p621 = scmp.lt.s32.totalorder %s35, 1
        %s622 = scalar_select %p621, %s35, 1
        %s623 = smul.addr %s622, 8
        %s624 = scalar_lea.vmem %s4, %s623
        %p625 = pneg %p160
        %p626 = pneg %p157
        %p627 = scmp.lt.s32.totalorder %s35, 1
        %s628 = scalar_select %p627, %s35, 1
        %s629 = smul.addr %s628, 8
        %s630 = scalar_lea.vmem %s5, %s629
        %p631 = pneg %p186
        %p632 = pneg %p183
        %p633 = pneg %p207
        %p634 = pneg %p204
        %p635 = pneg %p228
        %p636 = pneg %p225
        %p637 = pneg %p249
        %p638 = pneg %p246
        %p639 = pneg %p270
        %p640 = pneg %p267
        %p641 = pneg %p291
        %p642 = pneg %p288
        %p643 = pneg %p312
        %p644 = pneg %p309
        %p645 = pneg %p333
        %p646 = pneg %p330
        %p647 = pneg %p354
        %p648 = pneg %p351
        %p649 = pneg %p375
        %p650 = pneg %p372
        %p651 = pneg %p401
        %p652 = pneg %p398
        %s653 = sand.u32 %s388, 1
        %s654 = scalar_lea.sflag [#allocation4], %s653
        %s655 = sand.u32 %s388, 1
        %s656 = smul.addr %s655, 8
        %s657 = scalar_lea.vmem [#allocation14], %s656
        %p658 = scmp.lt.s32.totalorder %s35, 1
        %s659 = scalar_select %p658, %s35, 1
        %s660 = smul.addr %s659, 8
        %s661 = scalar_lea.vmem %s0, %s660
        %p662 = scmp.lt.s32.totalorder %s35, 1
        %s663 = scalar_select %p662, %s35, 1
        %s664 = scalar_lea.vmem %s2, %s663
        %p665 = scmp.lt.s32.totalorder %s35, 1
        %s666 = scalar_select %p665, %s35, 1
        %s667 = scalar_lea.vmem %s3, %s666
        %p668 = scmp.lt.s32.totalorder %s35, 1
        %s669 = scalar_select %p668, %s35, 1
        %s670 = smul.addr %s669, 8
        %s671 = scalar_lea.vmem %s4, %s670
        %p672 = scmp.lt.s32.totalorder %s35, 1
        %s673 = scalar_select %p672, %s35, 1
        %s674 = smul.addr %s673, 8
        %s675 = scalar_lea.vmem %s5, %s674
        %v677 = vld [vmem:[%s661] sm:$0xff]
        %v678 = vld [vmem:[%s569] sm:$0xff]
        %v679 = vld [vmem:[%s664] sm:$0x1]
        %v680 = vld [vmem:[%s667] sm:$0x1]
        %v681 = vld [vmem:[%s671] sm:$0xff]
        %v682 = vld [vmem:[%s675] sm:$0xff]
        %v683 = vld [vmem:[#allocation13] ss:$4 sm:$0x3f]
        %s684 = scalar_lea.vmem [#allocation13], 1
        %v685 = vld [vmem:[%s684] ss:$4 sm:$0x7]
        %v686 = vld [vmem:[#allocation13 + $0xd] sm:$0x1]
        %v687 = vld [vmem:[#allocation13 + $0x11] sm:$0x1]
        %v688 = vld [vmem:[#allocation13 + $0x15] sm:$0x1]
        %v689 = vld [vmem:[#allocation13 + $0x2] sm:$0x1]
        %v690 = vld [vmem:[#allocation13 + $0x6] sm:$0x1]
        %v691 = vld [vmem:[#allocation13 + $0xa] sm:$0x1]
        %v692 = vld [vmem:[#allocation13 + $0xe] sm:$0x1]
        %v693 = vld [vmem:[#allocation13 + $0x12] sm:$0x1]
        %v694 = vld [vmem:[#allocation13 + $0x16] sm:$0x1]
        %s695 = scalar_lea.vmem [#allocation13], 3
        %v696 = vld [vmem:[%s695] ss:$4 sm:$0x3]
        %v697 = vld [vmem:[#allocation13 + $0xb] sm:$0x1]
        %v698 = vld [vmem:[%s14] sm:$0xff]
        %699 = vadd.xlane.f32.xlu0 %v677
        %v700 = vpop.xlane.xlu0 %699
        %v701 = vrcp.pop 128.0
        %v702 = vmul.f32 %v700, %v701
        %v703 = vsub.f32 %v677, %v702
        %v704 = vmul.f32 %v703, %v703
        %705 = vadd.xlane.f32.xlu0 %v704
        %v706 = vpop.xlane.xlu0 %705
        %v707 = vmul.f32 %v706, %v701
        %v708 = vadd.f32 %v707, 1e-05
        %v709 = vrsqrt.pop %v708
        %v710 = vmul.f32 %v703, %v709
        %v711 = vlaneseq
        %v712 = vshrl.u32 %v711, 7
        %v713 = vsub.s32 0, %v712
        %v714 = vrot.slane %v689, %v713
        %v715 = vmul.f32 %v710, %v714
        %v716 = vlaneseq
        %v717 = vshrl.u32 %v716, 7
        %v718 = vsub.s32 0, %v717
        %v719 = vrot.slane %v690, %v718
        %v720 = vadd.f32 %v715, %v719
        %v721 = vpack.c.bf16 %v720, %v720
        %v722 = vld [vmem:[#allocation5] sm:$0xff]
        %v723 = vld [vmem:[#allocation5 + $0x8] sm:$0xf]
        %v724 = vld [vmem:[#allocation5 + $0xc] sm:$0xff]
        %v725 = vld [vmem:[#allocation5 + $0x14] sm:$0xf]
        %v726 = vld [vmem:[#allocation5 + $0x18] sm:$0xff]
        %v727 = vld [vmem:[#allocation5 + $0x20] sm:$0xf]
        %v728 = vld [vmem:[#allocation5 + $0x24] sm:$0xff]
        %v729 = vld [vmem:[#allocation5 + $0x2c] sm:$0xf]
        %v730 = vld [vmem:[#allocation5 + $0x30] sm:$0xff]
        %v731 = vld [vmem:[#allocation5 + $0x38] sm:$0xf]
        %v732 = vld [vmem:[#allocation5 + $0x3c] sm:$0xff]
        %v733 = vld [vmem:[#allocation5 + $0x44] sm:$0xf]
        %v734 = vld [vmem:[#allocation5 + $0x48] sm:$0xff]
        %v735 = vld [vmem:[#allocation5 + $0x50] sm:$0xf]
        %v736 = vld [vmem:[#allocation5 + $0x54] sm:$0xff]
        %v737 = vld [vmem:[#allocation5 + $0x5c] sm:$0xf]
        %v738 = vld [vmem:[#allocation5 + $0x60] sm:$0xff]
        %v739 = vld [vmem:[#allocation5 + $0x68] sm:$0xf]
        %v740 = vld [vmem:[#allocation5 + $0x6c] sm:$0xff]
        %v741 = vld [vmem:[#allocation5 + $0x74] sm:$0xf]
        %v742 = vld [vmem:[#allocation5 + $0x78] sm:$0xff]
        %v743 = vld [vmem:[#allocation5 + $0x80] sm:$0xf]
        %v744 = vld [vmem:[#allocation5 + $0x84] sm:$0xff]
        %v745 = vld [vmem:[#allocation5 + $0x8c] sm:$0xf]
        %v746 = vld [vmem:[#allocation5 + $0x90] sm:$0xff]
        %v747 = vld [vmem:[#allocation5 + $0x98] sm:$0xf]
        %v748 = vld [vmem:[#allocation5 + $0x9c] sm:$0xff]
        %v749 = vld [vmem:[#allocation5 + $0xa4] sm:$0xf]
        %v750 = vld [vmem:[#allocation5 + $0xa8] sm:$0xff]
        %v751 = vld [vmem:[#allocation5 + $0xb0] sm:$0xf]
        %v752 = vld [vmem:[#allocation5 + $0xb4] sm:$0xff]
        %v753 = vld [vmem:[#allocation5 + $0xbc] sm:$0xf]
        %v755 = vlaneseq
        %v756 = vshrl.u32 %v755, 7
        %v757 = vsub.s32 0, %v756
        %v758 = vrot.slane %v685, %v757
        %v759 = vlaneseq
        %v760 = vshrl.u32 %v759, 7
        %v761 = vsub.s32 1, %v760
        %v762 = vrot.slane %v685, %v761
        %v763 = vlaneseq
        %v764 = vshrl.u32 %v763, 7
        %v765 = vsub.s32 2, %v764
        %v766 = vrot.slane %v685, %v765
        %v802 = vunpack.c.l.b16 %v722
        %v803 = vunpack.c.h.b16 %v722
        %v804 = vunpack.c.l.b16 %v723
        %v805 = vunpack.c.l.b16 %v724
        %v806 = vunpack.c.h.b16 %v724
        %v807 = vunpack.c.l.b16 %v725
        %v808 = vunpack.c.l.b16 %v726
        %v809 = vunpack.c.h.b16 %v726
        %v810 = vunpack.c.l.b16 %v727
        %v811 = vunpack.c.l.b16 %v728
        %v812 = vunpack.c.h.b16 %v728
        %v813 = vunpack.c.l.b16 %v729
        %v814 = vunpack.c.l.b16 %v730
        %v815 = vunpack.c.h.b16 %v730
        %v816 = vunpack.c.l.b16 %v731
        %v817 = vunpack.c.l.b16 %v732
        %v818 = vunpack.c.h.b16 %v732
        %v819 = vunpack.c.l.b16 %v733
        %v820 = vunpack.c.l.b16 %v734
        %v821 = vunpack.c.h.b16 %v734
        %v822 = vunpack.c.l.b16 %v735
        %v823 = vunpack.c.l.b16 %v736
        %v824 = vunpack.c.h.b16 %v736
        %v825 = vunpack.c.l.b16 %v737
        %v826 = vunpack.c.l.b16 %v738
        %v827 = vunpack.c.h.b16 %v738
        %v828 = vunpack.c.l.b16 %v739
        %v829 = vunpack.c.l.b16 %v740
        %v830 = vunpack.c.h.b16 %v740
        %v831 = vunpack.c.l.b16 %v741
        %v832 = vunpack.c.l.b16 %v742
        %v833 = vunpack.c.h.b16 %v742
        %v834 = vunpack.c.l.b16 %v743
        %v835 = vunpack.c.l.b16 %v744
        %v836 = vunpack.c.h.b16 %v744
        %v837 = vunpack.c.l.b16 %v745
        %v838 = vunpack.c.l.b16 %v746
        %v839 = vunpack.c.h.b16 %v746
        %v840 = vunpack.c.l.b16 %v747
        %v841 = vunpack.c.l.b16 %v748
        %v842 = vunpack.c.h.b16 %v748
        %v843 = vunpack.c.l.b16 %v749
        %v844 = vunpack.c.l.b16 %v750
        %v845 = vunpack.c.h.b16 %v750
        %v846 = vunpack.c.l.b16 %v751
        %v847 = vunpack.c.l.b16 %v752
        %v848 = vunpack.c.h.b16 %v752
        %v849 = vunpack.c.l.b16 %v753
        %v850 = vpack.c.b16 %v805, %v802
        %v851 = vpack.c.b16 %v806, %v803
        %v852 = vpack.c.b16 %v807, %v804
        %v853 = vpack.c.b16 %v811, %v808
        %v854 = vpack.c.b16 %v812, %v809
        %v855 = vpack.c.b16 %v813, %v810
        %v856 = vpack.c.b16 %v817, %v814
        %v857 = vpack.c.b16 %v818, %v815
        %v858 = vpack.c.b16 %v819, %v816
        %v859 = vpack.c.b16 %v823, %v820
        %v860 = vpack.c.b16 %v824, %v821
        %v861 = vpack.c.b16 %v825, %v822
        %v862 = vpack.c.b16 %v829, %v826
        %v863 = vpack.c.b16 %v830, %v827
        %v864 = vpack.c.b16 %v831, %v828
        %v865 = vpack.c.b16 %v835, %v832
        %v866 = vpack.c.b16 %v836, %v833
        %v867 = vpack.c.b16 %v837, %v834
        %v868 = vpack.c.b16 %v841, %v838
        %v869 = vpack.c.b16 %v842, %v839
        %v870 = vpack.c.b16 %v843, %v840
        %v871 = vpack.c.b16 %v847, %v844
        %v872 = vpack.c.b16 %v848, %v845
        %v873 = vpack.c.b16 %v849, %v846
        %898 = vmatprep.subr.bf16.mxu0 %v851
        %899 = vmatpush1.bf16.msra.mxu0 %v850
        %900 = vmatprep.subr.bf16.mxu0 %v854
        %901 = vmatpush1.bf16.msra.mxu0 %v853
        %902 = vmatprep.subr.bf16.mxu0 %v857
        %903 = vmatpush1.bf16.msra.mxu0 %v856
        %904 = vmatprep.subr.bf16.mxu0 %v860
        %905 = vmatpush1.bf16.msra.mxu0 %v859
        %906 = vmatprep.subr.bf16.mxu0 %v863
        %907 = vmatpush1.bf16.msra.mxu0 %v862
        %908 = vmatprep.subr.bf16.mxu0 %v866
        %909 = vmatpush1.bf16.msra.mxu0 %v865
        %910 = vmatprep.subr.bf16.mxu0 %v869
        %911 = vmatpush1.bf16.msra.mxu0 %v868
        %912 = vmatprep.subr.bf16.mxu0 %v872
        %913 = vmatpush1.bf16.msra.mxu0 %v871
        %914 = vmatprep.subr.bf16.mxu0 0
        %915 = vmatpush1.bf16.msra.mxu0 0
        %916 = vmatprep.subr.bf16.mxu0 0
        %917 = vmatpush1.bf16.msra.mxu0 0
        %918 = vmatprep.subr.bf16.mxu0 0
        %919 = vmatpush1.bf16.msra.mxu0 0
        %920 = vmatprep.subr.bf16.mxu0 0
        %921 = vmatpush1.bf16.msra.mxu0 0
        %922 = vmatprep.subr.bf16.mxu0 0
        %923 = vmatpush1.bf16.msra.mxu0 0
        %924 = vmatprep.subr.bf16.mxu0 0
        %925 = vmatpush1.bf16.msra.mxu0 0
        %926 = vmatprep.subr.bf16.mxu0 0
        %927 = vmatpush1.bf16.msra.mxu0 0
        %928 = vmatprep.subr.bf16.mxu0 0
        %929 = vmatpush1.bf16.msra.mxu0 0
        %930 = vmatprep.mubr.bf16.mxu0 0
        %931 = vmatmul.mubr.bf16.gmra.mrb[0].mxu0 %v721
        %v932 = vpop.f32.mrb[0].mxu0
        %v933 = vadd.f32 %v758, %v932
        %v934 = vpop.f32.mrb[0].mxu0
        %v935 = vadd.f32 %v762, %v934
        %v936 = vpop.f32.mrb[0].mxu0
        %v937 = vpop.f32.mrb[0].mxu0
        %938 = vdwg.mxu0
        %939 = vmatprep.subr.bf16.mxu0 0
        %940 = vmatpush1.bf16.msra.mxu0 %v852
        %941 = vmatprep.subr.bf16.mxu0 0
        %942 = vmatpush1.bf16.msra.mxu0 %v855
        %943 = vmatprep.subr.bf16.mxu0 0
        %944 = vmatpush1.bf16.msra.mxu0 %v858
        %945 = vmatprep.subr.bf16.mxu0 0
        %946 = vmatpush1.bf16.msra.mxu0 %v861
        %947 = vmatprep.subr.bf16.mxu0 0
        %948 = vmatpush1.bf16.msra.mxu0 %v864
        %949 = vmatprep.subr.bf16.mxu0 0
        %950 = vmatpush1.bf16.msra.mxu0 %v867
        %951 = vmatprep.subr.bf16.mxu0 0
        %952 = vmatpush1.bf16.msra.mxu0 %v870
        %953 = vmatprep.subr.bf16.mxu0 0
        %954 = vmatpush1.bf16.msra.mxu0 %v873
        %955 = vmatprep.subr.bf16.mxu0 0
        %956 = vmatpush1.bf16.msra.mxu0 0
        %957 = vmatprep.subr.bf16.mxu0 0
        %958 = vmatpush1.bf16.msra.mxu0 0
        %959 = vmatprep.subr.bf16.mxu0 0
        %960 = vmatpush1.bf16.msra.mxu0 0
        %961 = vmatprep.subr.bf16.mxu0 0
        %962 = vmatpush1.bf16.msra.mxu0 0
        %963 = vmatprep.subr.bf16.mxu0 0
        %964 = vmatpush1.bf16.msra.mxu0 0
        %965 = vmatprep.subr.bf16.mxu0 0
        %966 = vmatpush1.bf16.msra.mxu0 0
        %967 = vmatprep.subr.bf16.mxu0 0
        %968 = vmatpush1.bf16.msra.mxu0 0
        %969 = vmatprep.subr.bf16.mxu0 0
        %970 = vmatpush1.bf16.msra.mxu0 0
        %971 = vmatprep.mubr.bf16.mxu0 0
        %972 = vmatmul.mubr.bf16.gmra.mrb[0].mxu0 %v721
        %v973 = vpop.f32.mrb[0].mxu0
        %v974 = vadd.f32 %v766, %v973
        %v975 = vpop.f32.mrb[0].mxu0
        %v976 = vpop.f32.mrb[0].mxu0
        %v977 = vpop.f32.mrb[0].mxu0
        %978 = vdwg.mxu0
        %v979 = vld [vmem:[%s6] sm:$0xff]
        %v980 = vld [vmem:[%s6 + $0x8] sm:$0xff]
        %v981 = vld [vmem:[%s6 + $0x10] sm:$0xff]
        %v982 = vld [vmem:[%s6 + $0x18] sm:$0xff]
        %v983 = vld [vmem:[%s6 + $0x20] sm:$0xff]
        %v984 = vld [vmem:[%s6 + $0x28] sm:$0xff]
        %v985 = vld [vmem:[%s6 + $0x30] sm:$0xff]
        %v986 = vld [vmem:[%s6 + $0x38] sm:$0xff]
        %v987 = vmul.f32 %v935, %v979
        %v988 = vmul.f32 %v935, %v980
        %v989 = vmul.f32 %v935, %v981
        %v990 = vmul.f32 %v935, %v982
        %v991 = vmul.f32 %v935, %v983
        %v992 = vmul.f32 %v935, %v984
        %v993 = vmul.f32 %v935, %v985
        %v994 = vmul.f32 %v935, %v986
        %v995 = vmul.f32 %v974, %v979
        %v996 = vmul.f32 %v974, %v980
        %v997 = vmul.f32 %v974, %v981
        %v998 = vmul.f32 %v974, %v982
        %v999 = vmul.f32 %v974, %v983
        %v1000 = vmul.f32 %v974, %v984
        %v1001 = vmul.f32 %v974, %v985
        %v1002 = vmul.f32 %v974, %v986
        %v1003 = vpack.c.bf16 %v996, %v995
        %v1004 = vpack.c.bf16 %v998, %v997
        %v1005 = vpack.c.bf16 %v1000, %v999
        %v1006 = vpack.c.bf16 %v1002, %v1001
        %1007 = vmatprep.subr.mxu0 0.0
        %1008 = vmatpush1.xpose.msra.mxu0 %v987
        %1009 = vmatprep.subr.mxu0 0.0
        %1010 = vmatpush1.xpose.msra.mxu0 %v988
        %1011 = vmatprep.subr.mxu0 0.0
        %1012 = vmatpush1.xpose.msra.mxu0 %v989
        %1013 = vmatprep.subr.mxu0 0.0
        %1014 = vmatpush1.xpose.msra.mxu0 %v990
        %1015 = vmatprep.subr.mxu0 0.0
        %1016 = vmatpush1.xpose.msra.mxu0 %v991
        %1017 = vmatprep.subr.mxu0 0.0
        %1018 = vmatpush1.xpose.msra.mxu0 %v992
        %1019 = vmatprep.subr.mxu0 0.0
        %1020 = vmatpush1.xpose.msra.mxu0 %v993
        %1021 = vmatprep.subr.mxu0 0.0
        %1022 = vmatpush1.xpose.msra.mxu0 %v994
        %1023 = vmatprep.subr.mxu0 0.0
        %1024 = vmatpush1.xpose.msra.mxu0 0.0
        %1025 = vmatprep.subr.mxu0 0.0
        %1026 = vmatpush1.xpose.msra.mxu0 0.0
        %1027 = vmatprep.subr.mxu0 0.0
        %1028 = vmatpush1.xpose.msra.mxu0 0.0
        %1029 = vmatprep.subr.mxu0 0.0
        %1030 = vmatpush1.xpose.msra.mxu0 0.0
        %1031 = vmatprep.subr.mxu0 0.0
        %1032 = vmatpush1.xpose.msra.mxu0 0.0
        %1033 = vmatprep.subr.mxu0 0.0
        %1034 = vmatpush1.xpose.msra.mxu0 0.0
        %1035 = vmatprep.subr.mxu0 0.0
        %1036 = vmatpush1.xpose.msra.mxu0 0.0
        %1037 = vmatprep.subr.mxu0 0.0
        %1038 = vmatpush1.xpose.msra.mxu0 0.0
        %1039 = vmatprep.subr.mxu0 0.0
        %1040 = vmatpush1.xpose.msra.mxu0 0.0
        %1041 = vmatprep.subr.mxu0 0.0
        %1042 = vmatpush1.xpose.msra.mxu0 0.0
        %1043 = vmatprep.subr.mxu0 0.0
        %1044 = vmatpush1.xpose.msra.mxu0 0.0
        %1045 = vmatprep.subr.mxu0 0.0
        %1046 = vmatpush1.xpose.msra.mxu0 0.0
        %1047 = vmatprep.subr.mxu0 0.0
        %1048 = vmatpush1.xpose.msra.mxu0 0.0
        %1049 = vmatprep.subr.mxu0 0.0
        %1050 = vmatpush1.xpose.msra.mxu0 0.0
        %1051 = vmatprep.subr.mxu0 0.0
        %1052 = vmatpush1.xpose.msra.mxu0 0.0
        %1053 = vmatprep.subr.mxu0 0.0
        %1054 = vmatpush1.xpose.msra.mxu0 0.0
        %1055 = vmatprep.subr.mxu0 0.0
        %1056 = vmatpush1.xpose.msra.mxu0 0.0
        %1057 = vmatprep.subr.mxu0 0.0
        %1058 = vmatpush1.xpose.msra.mxu0 0.0
        %1059 = vmatprep.subr.mxu0 0.0
        %1060 = vmatpush1.xpose.msra.mxu0 0.0
        %1061 = vmatprep.subr.mxu0 0.0
        %1062 = vmatpush1.xpose.msra.mxu0 0.0
        %1063 = vmatprep.subr.mxu0 0.0
        %1064 = vmatpush1.xpose.msra.mxu0 0.0
        %1065 = vmatprep.subr.mxu0 0.0
        %1066 = vmatpush1.xpose.msra.mxu0 0.0
        %1067 = vmatprep.subr.mxu0 0.0
        %1068 = vmatpush1.xpose.msra.mxu0 0.0
        %1069 = vmatprep.subr.mxu0 0.0
        %1070 = vmatpush1.xpose.msra.mxu0 0.0
        %1071 = vmatprep.mubr.f32.mxu0 0.0
        %1072 = vmatmul.mubr.f32.gmra.mrb[0].mxu0 %v933
        %v1073 = vpop.f32.mrb[0].mxu0
        %v1074 = vadd.f32 0.0, %v1073
        %v1075 = vpop.f32.mrb[0].mxu0
        %1076 = vdwg.mxu0
        %v1077 = vmul.f32 %v1074, 0.25
        %vm1078 = vcmask 523264
        %v1079 = vsel %vm1078, %v1077, -inf
        %1080 = vmax.xlane.f32.xlu0 %v1079
        %v1081 = vpop.xlane.xlu0 %1080
        %v1082 = vsub.f32 %v1077, %v1081
        %v1083 = vmul.f32 %v1082, 1.442695
        %v1084 = vpow.pop %v1083
        %v1086 = vsel %vm1078, %v1084, 0
        %1088 = vmatprep.subr.mxu0 0.0
        %1089 = vmatpush1.msra.mxu0 %v979
        %1090 = vmatprep.subr.mxu0 0.0
        %1091 = vmatpush1.msra.mxu0 %v980
        %1092 = vmatprep.subr.mxu0 0.0
        %1093 = vmatpush1.msra.mxu0 %v981
        %1094 = vmatprep.subr.mxu0 0.0
        %1095 = vmatpush1.msra.mxu0 %v982
        %1096 = vmatprep.subr.mxu0 0.0
        %1097 = vmatpush1.msra.mxu0 %v983
        %1098 = vmatprep.subr.mxu0 0.0
        %1099 = vmatpush1.msra.mxu0 %v984
        %1100 = vmatprep.subr.mxu0 0.0
        %1101 = vmatpush1.msra.mxu0 %v985
        %1102 = vmatprep.subr.mxu0 0.0
        %1103 = vmatpush1.msra.mxu0 %v986
        %1104 = vmatprep.subr.mxu0 0.0
        %1105 = vmatpush1.msra.mxu0 0.0
        %1106 = vmatprep.subr.mxu0 0.0
        %1107 = vmatpush1.msra.mxu0 0.0
        %1108 = vmatprep.subr.mxu0 0.0
        %1109 = vmatpush1.msra.mxu0 0.0
        %1110 = vmatprep.subr.mxu0 0.0
        %1111 = vmatpush1.msra.mxu0 0.0
        %1112 = vmatprep.subr.mxu0 0.0
        %1113 = vmatpush1.msra.mxu0 0.0
        %1114 = vmatprep.subr.mxu0 0.0
        %1115 = vmatpush1.msra.mxu0 0.0
        %1116 = vmatprep.subr.mxu0 0.0
        %1117 = vmatpush1.msra.mxu0 0.0
        %1118 = vmatprep.subr.mxu0 0.0
        %1119 = vmatpush1.msra.mxu0 0.0
        %1120 = vmatprep.subr.mxu0 0.0
        %1121 = vmatpush1.msra.mxu0 0.0
        %1122 = vmatprep.subr.mxu0 0.0
        %1123 = vmatpush1.msra.mxu0 0.0
        %1124 = vmatprep.subr.mxu0 0.0
        %1125 = vmatpush1.msra.mxu0 0.0
        %1126 = vmatprep.subr.mxu0 0.0
        %1127 = vmatpush1.msra.mxu0 0.0
        %1128 = vmatprep.subr.mxu0 0.0
        %1129 = vmatpush1.msra.mxu0 0.0
        %1130 = vmatprep.subr.mxu0 0.0
        %1131 = vmatpush1.msra.mxu0 0.0
        %1132 = vmatprep.subr.mxu0 0.0
        %1133 = vmatpush1.msra.mxu0 0.0
        %1134 = vmatprep.subr.mxu0 0.0
        %1135 = vmatpush1.msra.mxu0 0.0
        %1136 = vmatprep.subr.mxu0 0.0
        %1137 = vmatpush1.msra.mxu0 0.0
        %1138 = vmatprep.subr.mxu0 0.0
        %1139 = vmatpush1.msra.mxu0 0.0
        %1140 = vmatprep.subr.mxu0 0.0
        %1141 = vmatpush1.msra.mxu0 0.0
        %1142 = vmatprep.subr.mxu0 0.0
        %1143 = vmatpush1.msra.mxu0 0.0
        %1144 = vmatprep.subr.mxu0 0.0
        %1145 = vmatpush1.msra.mxu0 0.0
        %1146 = vmatprep.subr.mxu0 0.0
        %1147 = vmatpush1.msra.mxu0 0.0
        %1148 = vmatprep.subr.mxu0 0.0
        %1149 = vmatpush1.msra.mxu0 0.0
        %1150 = vmatprep.subr.mxu0 0.0
        %1151 = vmatpush1.msra.mxu0 0.0
        %1152 = vmatprep.mubr.f32.mxu0 0.0
        %1153 = vmatmul.mubr.f32.gmra.mrb[0].mxu0 %v1086
        %v1154 = vpop.f32.mrb[0].mxu0
        %v1155 = vadd.f32 0.0, %v1154
        %v1156 = vpop.f32.mrb[0].mxu0
        %1157 = vdwg.mxu0
        %v1158 = vpack.c.bf16 %v1084, %v1084
        %v1160 = vsel %vm1078, %v1158, 0
        %1162 = vmatprep.subr.bf16.mxu0 0
        %1163 = vmatpush1.bf16.msra.mxu0 %v1003
        %1164 = vmatprep.subr.bf16.mxu0 0
        %1165 = vmatpush1.bf16.msra.mxu0 %v1004
        %1166 = vmatprep.subr.bf16.mxu0 0
        %1167 = vmatpush1.bf16.msra.mxu0 %v1005
        %1168 = vmatprep.subr.bf16.mxu0 0
        %1169 = vmatpush1.bf16.msra.mxu0 %v1006
        %1170 = vmatprep.subr.bf16.mxu0 0
        %1171 = vmatpush1.bf16.msra.mxu0 0
        %1172 = vmatprep.subr.bf16.mxu0 0
        %1173 = vmatpush1.bf16.msra.mxu0 0
        %1174 = vmatprep.subr.bf16.mxu0 0
        %1175 = vmatpush1.bf16.msra.mxu0 0
        %1176 = vmatprep.subr.bf16.mxu0 0
        %1177 = vmatpush1.bf16.msra.mxu0 0
        %1178 = vmatprep.subr.bf16.mxu0 0
        %1179 = vmatpush1.bf16.msra.mxu0 0
        %1180 = vmatprep.subr.bf16.mxu0 0
        %1181 = vmatpush1.bf16.msra.mxu0 0
        %1182 = vmatprep.subr.bf16.mxu0 0
        %1183 = vmatpush1.bf16.msra.mxu0 0
        %1184 = vmatprep.subr.bf16.mxu0 0
        %1185 = vmatpush1.bf16.msra.mxu0 0
        %1186 = vmatprep.subr.bf16.mxu0 0
        %1187 = vmatpush1.bf16.msra.mxu0 0
        %1188 = vmatprep.subr.bf16.mxu0 0
        %1189 = vmatpush1.bf16.msra.mxu0 0
        %1190 = vmatprep.subr.bf16.mxu0 0
        %1191 = vmatpush1.bf16.msra.mxu0 0
        %1192 = vmatprep.subr.bf16.mxu0 0
        %1193 = vmatpush1.bf16.msra.mxu0 0
        %1194 = vmatprep.mubr.bf16.mxu0 0
        %1195 = vmatmul.mubr.bf16.gmra.mrb[0].mxu0 %v1160
        %v1196 = vpop.f32.mrb[0].mxu0
        %v1197 = vadd.f32 0.0, %v1196
        %v1198 = vpop.f32.mrb[0].mxu0
        %v1199 = vpop.f32.mrb[0].mxu0
        %v1200 = vpop.f32.mrb[0].mxu0
        %1201 = vdwg.mxu0
        %v1202 = vrcp.pop %v1155
        %v1203 = vmul.f32 %v1197, %v1202
        %v1204 = vpack.c.bf16 %v1203, %v1203
        %v1205 = vld [vmem:[#allocation8] sm:$0xf]
        %v1206 = vld [vmem:[#allocation8 + $0x4] sm:$0xf]
        %v1207 = vld [vmem:[#allocation8 + $0x8] sm:$0xf]
        %v1208 = vld [vmem:[#allocation8 + $0xc] sm:$0xf]
        %v1209 = vld [vmem:[#allocation8 + $0x10] sm:$0xf]
        %v1210 = vld [vmem:[#allocation8 + $0x14] sm:$0xf]
        %v1211 = vld [vmem:[#allocation8 + $0x18] sm:$0xf]
        %v1212 = vld [vmem:[#allocation8 + $0x1c] sm:$0xf]
        %v1213 = vld [vmem:[#allocation8 + $0x20] sm:$0xf]
        %v1214 = vld [vmem:[#allocation8 + $0x24] sm:$0xf]
        %v1215 = vld [vmem:[#allocation8 + $0x28] sm:$0xf]
        %v1216 = vld [vmem:[#allocation8 + $0x2c] sm:$0xf]
        %v1217 = vld [vmem:[#allocation8 + $0x30] sm:$0xf]
        %v1218 = vld [vmem:[#allocation8 + $0x34] sm:$0xf]
        %v1219 = vld [vmem:[#allocation8 + $0x38] sm:$0xf]
        %v1220 = vld [vmem:[#allocation8 + $0x3c] sm:$0xf]
        %v1237 = vunpack.c.l.b16 %v1205
        %v1238 = vunpack.c.l.b16 %v1206
        %v1239 = vunpack.c.l.b16 %v1207
        %v1240 = vunpack.c.l.b16 %v1208
        %v1241 = vunpack.c.l.b16 %v1209
        %v1242 = vunpack.c.l.b16 %v1210
        %v1243 = vunpack.c.l.b16 %v1211
        %v1244 = vunpack.c.l.b16 %v1212
        %v1245 = vunpack.c.l.b16 %v1213
        %v1246 = vunpack.c.l.b16 %v1214
        %v1247 = vunpack.c.l.b16 %v1215
        %v1248 = vunpack.c.l.b16 %v1216
        %v1249 = vunpack.c.l.b16 %v1217
        %v1250 = vunpack.c.l.b16 %v1218
        %v1251 = vunpack.c.l.b16 %v1219
        %v1252 = vunpack.c.l.b16 %v1220
        %v1253 = vpack.c.b16 %v1238, %v1237
        %v1254 = vpack.c.b16 %v1240, %v1239
        %v1255 = vpack.c.b16 %v1242, %v1241
        %v1256 = vpack.c.b16 %v1244, %v1243
        %v1257 = vpack.c.b16 %v1246, %v1245
        %v1258 = vpack.c.b16 %v1248, %v1247
        %v1259 = vpack.c.b16 %v1250, %v1249
        %v1260 = vpack.c.b16 %v1252, %v1251
        %1269 = vmatprep.subr.bf16.mxu0 0
        %1270 = vmatpush1.bf16.msra.mxu0 %v1253
        %1271 = vmatprep.subr.bf16.mxu0 0
        %1272 = vmatpush1.bf16.msra.mxu0 %v1254
        %1273 = vmatprep.subr.bf16.mxu0 0
        %1274 = vmatpush1.bf16.msra.mxu0 %v1255
        %1275 = vmatprep.subr.bf16.mxu0 0
        %1276 = vmatpush1.bf16.msra.mxu0 %v1256
        %1277 = vmatprep.subr.bf16.mxu0 0
        %1278 = vmatpush1.bf16.msra.mxu0 %v1257
        %1279 = vmatprep.subr.bf16.mxu0 0
        %1280 = vmatpush1.bf16.msra.mxu0 %v1258
        %1281 = vmatprep.subr.bf16.mxu0 0
        %1282 = vmatpush1.bf16.msra.mxu0 %v1259
        %1283 = vmatprep.subr.bf16.mxu0 0
        %1284 = vmatpush1.bf16.msra.mxu0 %v1260
        %1285 = vmatprep.subr.bf16.mxu0 0
        %1286 = vmatpush1.bf16.msra.mxu0 0
        %1287 = vmatprep.subr.bf16.mxu0 0
        %1288 = vmatpush1.bf16.msra.mxu0 0
        %1289 = vmatprep.subr.bf16.mxu0 0
        %1290 = vmatpush1.bf16.msra.mxu0 0
        %1291 = vmatprep.subr.bf16.mxu0 0
        %1292 = vmatpush1.bf16.msra.mxu0 0
        %1293 = vmatprep.subr.bf16.mxu0 0
        %1294 = vmatpush1.bf16.msra.mxu0 0
        %1295 = vmatprep.subr.bf16.mxu0 0
        %1296 = vmatpush1.bf16.msra.mxu0 0
        %1297 = vmatprep.subr.bf16.mxu0 0
        %1298 = vmatpush1.bf16.msra.mxu0 0
        %1299 = vmatprep.subr.bf16.mxu0 0
        %1300 = vmatpush1.bf16.msra.mxu0 0
        %1301 = vmatprep.mubr.bf16.mxu0 0
        %1302 = vmatmul.mubr.bf16.gmra.mrb[0].mxu0 %v1204
        %v1303 = vpop.f32.mrb[0].mxu0
        %v1304 = vadd.f32 0.0, %v1303
        %v1305 = vpop.f32.mrb[0].mxu0
        %v1306 = vpop.f32.mrb[0].mxu0
        %v1307 = vpop.f32.mrb[0].mxu0
        %1308 = vdwg.mxu0
        %v1309 = vadd.f32 %v677, %v1304
        %v1310 = vlaneseq
        %v1311 = vshrl.u32 %v1310, 7
        %v1312 = vsub.s32 0, %v1311
        %v1313 = vrot.slane %v686, %v1312
        %v1314 = vadd.f32 %v1309, %v1313
        %1315 = vadd.xlane.f32.xlu0 %v1314
        %v1316 = vpop.xlane.xlu0 %1315
        %v1317 = vmul.f32 %v1316, %v701
        %v1318 = vsub.f32 %v1314, %v1317
        %v1319 = vmul.f32 %v1318, %v1318
        %1320 = vadd.xlane.f32.xlu0 %v1319
        %v1321 = vpop.xlane.xlu0 %1320
        %v1322 = vmul.f32 %v1321, %v701
        %v1323 = vadd.f32 %v1322, 1e-05
        %v1324 = vrsqrt.pop %v1323
        %v1325 = vmul.f32 %v1318, %v1324
        %v1326 = vlaneseq
        %v1327 = vshrl.u32 %v1326, 7
        %v1328 = vsub.s32 0, %v1327
        %v1329 = vrot.slane %v691, %v1328
        %v1330 = vmul.f32 %v1325, %v1329
        %v1331 = vlaneseq
        %v1332 = vshrl.u32 %v1331, 7
        %v1333 = vsub.s32 0, %v1332
        %v1334 = vrot.slane %v692, %v1333
        %v1335 = vadd.f32 %v1330, %v1334
        %v1336 = vpack.c.bf16 %v678, %v1335
        %v1337 = vld [vmem:[#allocation7] sm:$0xff]
        %v1338 = vld [vmem:[#allocation7 + $0x8] sm:$0xff]
        %v1339 = vld [vmem:[#allocation7 + $0x10] sm:$0xff]
        %v1340 = vld [vmem:[#allocation7 + $0x18] sm:$0xff]
        %v1341 = vld [vmem:[#allocation7 + $0x20] sm:$0xff]
        %v1342 = vld [vmem:[#allocation7 + $0x28] sm:$0xff]
        %v1343 = vld [vmem:[#allocation7 + $0x30] sm:$0xff]
        %v1344 = vld [vmem:[#allocation7 + $0x38] sm:$0xff]
        %v1345 = vld [vmem:[#allocation7 + $0x40] sm:$0xff]
        %v1346 = vld [vmem:[#allocation7 + $0x48] sm:$0xff]
        %v1347 = vld [vmem:[#allocation7 + $0x50] sm:$0xff]
        %v1348 = vld [vmem:[#allocation7 + $0x58] sm:$0xff]
        %v1349 = vld [vmem:[#allocation7 + $0x60] sm:$0xff]
        %v1350 = vld [vmem:[#allocation7 + $0x68] sm:$0xff]
        %v1351 = vld [vmem:[#allocation7 + $0x70] sm:$0xff]
        %v1352 = vld [vmem:[#allocation7 + $0x78] sm:$0xff]
        %v1353 = vld [vmem:[#allocation7 + $0x80] sm:$0xff]
        %v1354 = vld [vmem:[#allocation7 + $0x88] sm:$0xff]
        %v1355 = vld [vmem:[#allocation7 + $0x90] sm:$0xff]
        %v1356 = vld [vmem:[#allocation7 + $0x98] sm:$0xff]
        %v1357 = vld [vmem:[#allocation7 + $0xa0] sm:$0xff]
        %v1358 = vld [vmem:[#allocation7 + $0xa8] sm:$0xff]
        %v1359 = vld [vmem:[#allocation7 + $0xb0] sm:$0xff]
        %v1360 = vld [vmem:[#allocation7 + $0xb8] sm:$0xff]
        %v1361 = vld [vmem:[#allocation7 + $0xc0] sm:$0xff]
        %v1362 = vld [vmem:[#allocation7 + $0xc8] sm:$0xff]
        %v1363 = vld [vmem:[#allocation7 + $0xd0] sm:$0xff]
        %v1364 = vld [vmem:[#allocation7 + $0xd8] sm:$0xff]
        %v1365 = vld [vmem:[#allocation7 + $0xe0] sm:$0xff]
        %v1366 = vld [vmem:[#allocation7 + $0xe8] sm:$0xff]
        %v1367 = vld [vmem:[#allocation7 + $0xf0] sm:$0xff]
        %v1368 = vld [vmem:[#allocation7 + $0xf8] sm:$0xff]
        %v1369 = vld [vmem:[#allocation7 + $0x100] sm:$0xff]
        %v1370 = vld [vmem:[#allocation7 + $0x108] sm:$0xff]
        %v1371 = vld [vmem:[#allocation7 + $0x110] sm:$0xff]
        %v1372 = vld [vmem:[#allocation7 + $0x118] sm:$0xff]
        %v1373 = vld [vmem:[#allocation7 + $0x120] sm:$0xff]
        %v1374 = vld [vmem:[#allocation7 + $0x128] sm:$0xff]
        %v1375 = vld [vmem:[#allocation7 + $0x130] sm:$0xff]
        %v1376 = vld [vmem:[#allocation7 + $0x138] sm:$0xff]
        %v1377 = vld [vmem:[#allocation7 + $0x140] sm:$0xff]
        %v1378 = vld [vmem:[#allocation7 + $0x148] sm:$0xff]
        %v1379 = vld [vmem:[#allocation7 + $0x150] sm:$0xff]
        %v1380 = vld [vmem:[#allocation7 + $0x158] sm:$0xff]
        %v1381 = vld [vmem:[#allocation7 + $0x160] sm:$0xff]
        %v1382 = vld [vmem:[#allocation7 + $0x168] sm:$0xff]
        %v1383 = vld [vmem:[#allocation7 + $0x170] sm:$0xff]
        %v1384 = vld [vmem:[#allocation7 + $0x178] sm:$0xff]
        %v1386 = vlaneseq
        %v1387 = vshrl.u32 %v1386, 7
        %v1388 = vsub.s32 0, %v1387
        %v1389 = vrot.slane %v683, %v1388
        %v1390 = vlaneseq
        %v1391 = vshrl.u32 %v1390, 7
        %v1392 = vsub.s32 1, %v1391
        %v1393 = vrot.slane %v683, %v1392
        %v1394 = vlaneseq
        %v1395 = vshrl.u32 %v1394, 7
        %v1396 = vsub.s32 2, %v1395
        %v1397 = vrot.slane %v683, %v1396
        %v1398 = vlaneseq
        %v1399 = vshrl.u32 %v1398, 7
        %v1400 = vsub.s32 3, %v1399
        %v1401 = vrot.slane %v683, %v1400
        %v1402 = vlaneseq
        %v1403 = vshrl.u32 %v1402, 7
        %v1404 = vsub.s32 4, %v1403
        %v1405 = vrot.slane %v683, %v1404
        %v1406 = vlaneseq
        %v1407 = vshrl.u32 %v1406, 7
        %v1408 = vsub.s32 5, %v1407
        %v1409 = vrot.slane %v683, %v1408
        %v1464 = vunpack.c.l.b16 %v1337
        %v1465 = vunpack.c.h.b16 %v1337
        %v1466 = vunpack.c.l.b16 %v1338
        %v1467 = vunpack.c.h.b16 %v1338
        %v1468 = vunpack.c.l.b16 %v1339
        %v1469 = vunpack.c.h.b16 %v1339
        %v1470 = vunpack.c.l.b16 %v1340
        %v1471 = vunpack.c.h.b16 %v1340
        %v1472 = vunpack.c.l.b16 %v1341
        %v1473 = vunpack.c.h.b16 %v1341
        %v1474 = vunpack.c.l.b16 %v1342
        %v1475 = vunpack.c.h.b16 %v1342
        %v1476 = vunpack.c.l.b16 %v1343
        %v1477 = vunpack.c.h.b16 %v1343
        %v1478 = vunpack.c.l.b16 %v1344
        %v1479 = vunpack.c.h.b16 %v1344
        %v1480 = vunpack.c.l.b16 %v1345
        %v1481 = vunpack.c.h.b16 %v1345
        %v1482 = vunpack.c.l.b16 %v1346
        %v1483 = vunpack.c.h.b16 %v1346
        %v1484 = vunpack.c.l.b16 %v1347
        %v1485 = vunpack.c.h.b16 %v1347
        %v1486 = vunpack.c.l.b16 %v1348
        %v1487 = vunpack.c.h.b16 %v1348
        %v1488 = vunpack.c.l.b16 %v1349
        %v1489 = vunpack.c.h.b16 %v1349
        %v1490 = vunpack.c.l.b16 %v1350
        %v1491 = vunpack.c.h.b16 %v1350
        %v1492 = vunpack.c.l.b16 %v1351
        %v1493 = vunpack.c.h.b16 %v1351
        %v1494 = vunpack.c.l.b16 %v1352
        %v1495 = vunpack.c.h.b16 %v1352
        %v1496 = vunpack.c.l.b16 %v1353
        %v1497 = vunpack.c.h.b16 %v1353
        %v1498 = vunpack.c.l.b16 %v1354
        %v1499 = vunpack.c.h.b16 %v1354
        %v1500 = vunpack.c.l.b16 %v1355
        %v1501 = vunpack.c.h.b16 %v1355
        %v1502 = vunpack.c.l.b16 %v1356
        %v1503 = vunpack.c.h.b16 %v1356
        %v1504 = vunpack.c.l.b16 %v1357
        %v1505 = vunpack.c.h.b16 %v1357
        %v1506 = vunpack.c.l.b16 %v1358
        %v1507 = vunpack.c.h.b16 %v1358
        %v1508 = vunpack.c.l.b16 %v1359
        %v1509 = vunpack.c.h.b16 %v1359
        %v1510 = vunpack.c.l.b16 %v1360
        %v1511 = vunpack.c.h.b16 %v1360
        %v1512 = vunpack.c.l.b16 %v1361
        %v1513 = vunpack.c.h.b16 %v1361
        %v1514 = vunpack.c.l.b16 %v1362
        %v1515 = vunpack.c.h.b16 %v1362
        %v1516 = vunpack.c.l.b16 %v1363
        %v1517 = vunpack.c.h.b16 %v1363
        %v1518 = vunpack.c.l.b16 %v1364
        %v1519 = vunpack.c.h.b16 %v1364
        %v1520 = vunpack.c.l.b16 %v1365
        %v1521 = vunpack.c.h.b16 %v1365
        %v1522 = vunpack.c.l.b16 %v1366
        %v1523 = vunpack.c.h.b16 %v1366
        %v1524 = vunpack.c.l.b16 %v1367
        %v1525 = vunpack.c.h.b16 %v1367
        %v1526 = vunpack.c.l.b16 %v1368
        %v1527 = vunpack.c.h.b16 %v1368
        %v1528 = vunpack.c.l.b16 %v1369
        %v1529 = vunpack.c.h.b16 %v1369
        %v1530 = vunpack.c.l.b16 %v1370
        %v1531 = vunpack.c.h.b16 %v1370
        %v1532 = vunpack.c.l.b16 %v1371
        %v1533 = vunpack.c.h.b16 %v1371
        %v1534 = vunpack.c.l.b16 %v1372
        %v1535 = vunpack.c.h.b16 %v1372
        %v1536 = vunpack.c.l.b16 %v1373
        %v1537 = vunpack.c.h.b16 %v1373
        %v1538 = vunpack.c.l.b16 %v1374
        %v1539 = vunpack.c.h.b16 %v1374
        %v1540 = vunpack.c.l.b16 %v1375
        %v1541 = vunpack.c.h.b16 %v1375
        %v1542 = vunpack.c.l.b16 %v1376
        %v1543 = vunpack.c.h.b16 %v1376
        %v1544 = vunpack.c.l.b16 %v1377
        %v1545 = vunpack.c.h.b16 %v1377
        %v1546 = vunpack.c.l.b16 %v1378
        %v1547 = vunpack.c.h.b16 %v1378
        %v1548 = vunpack.c.l.b16 %v1379
        %v1549 = vunpack.c.h.b16 %v1379
        %v1550 = vunpack.c.l.b16 %v1380
        %v1551 = vunpack.c.h.b16 %v1380
        %v1552 = vunpack.c.l.b16 %v1381
        %v1553 = vunpack.c.h.b16 %v1381
        %v1554 = vunpack.c.l.b16 %v1382
        %v1555 = vunpack.c.h.b16 %v1382
        %v1556 = vunpack.c.l.b16 %v1383
        %v1557 = vunpack.c.h.b16 %v1383
        %v1558 = vunpack.c.l.b16 %v1384
        %v1559 = vunpack.c.h.b16 %v1384
        %v1560 = vpack.c.b16 %v1470, %v1464
        %v1561 = vpack.c.b16 %v1471, %v1465
        %v1562 = vpack.c.b16 %v1472, %v1466
        %v1563 = vpack.c.b16 %v1473, %v1467
        %v1564 = vpack.c.b16 %v1474, %v1468
        %v1565 = vpack.c.b16 %v1475, %v1469
        %v1566 = vpack.c.b16 %v1482, %v1476
        %v1567 = vpack.c.b16 %v1483, %v1477
        %v1568 = vpack.c.b16 %v1484, %v1478
        %v1569 = vpack.c.b16 %v1485, %v1479
        %v1570 = vpack.c.b16 %v1486, %v1480
        %v1571 = vpack.c.b16 %v1487, %v1481
        %v1572 = vpack.c.b16 %v1494, %v1488
        %v1573 = vpack.c.b16 %v1495, %v1489
        %v1574 = vpack.c.b16 %v1496, %v1490
        %v1575 = vpack.c.b16 %v1497, %v1491
        %v1576 = vpack.c.b16 %v1498, %v1492
        %v1577 = vpack.c.b16 %v1499, %v1493
        %v1578 = vpack.c.b16 %v1506, %v1500
        %v1579 = vpack.c.b16 %v1507, %v1501
        %v1580 = vpack.c.b16 %v1508, %v1502
        %v1581 = vpack.c.b16 %v1509, %v1503
        %v1582 = vpack.c.b16 %v1510, %v1504
        %v1583 = vpack.c.b16 %v1511, %v1505
        %v1584 = vpack.c.b16 %v1518, %v1512
        %v1585 = vpack.c.b16 %v1519, %v1513
        %v1586 = vpack.c.b16 %v1520, %v1514
        %v1587 = vpack.c.b16 %v1521, %v1515
        %v1588 = vpack.c.b16 %v1522, %v1516
        %v1589 = vpack.c.b16 %v1523, %v1517
        %v1590 = vpack.c.b16 %v1530, %v1524
        %v1591 = vpack.c.b16 %v1531, %v1525
        %v1592 = vpack.c.b16 %v1532, %v1526
        %v1593 = vpack.c.b16 %v1533, %v1527
        %v1594 = vpack.c.b16 %v1534, %v1528
        %v1595 = vpack.c.b16 %v1535, %v1529
        %v1596 = vpack.c.b16 %v1542, %v1536
        %v1597 = vpack.c.b16 %v1543, %v1537
        %v1598 = vpack.c.b16 %v1544, %v1538
        %v1599 = vpack.c.b16 %v1545, %v1539
        %v1600 = vpack.c.b16 %v1546, %v1540
        %v1601 = vpack.c.b16 %v1547, %v1541
        %v1602 = vpack.c.b16 %v1554, %v1548
        %v1603 = vpack.c.b16 %v1555, %v1549
        %v1604 = vpack.c.b16 %v1556, %v1550
        %v1605 = vpack.c.b16 %v1557, %v1551
        %v1606 = vpack.c.b16 %v1558, %v1552
        %v1607 = vpack.c.b16 %v1559, %v1553
        %1656 = vmatprep.subr.bf16.mxu0 %v1561
        %1657 = vmatpush1.bf16.msra.mxu0 %v1560
        %1658 = vmatprep.subr.bf16.mxu0 %v1567
        %1659 = vmatpush1.bf16.msra.mxu0 %v1566
        %1660 = vmatprep.subr.bf16.mxu0 %v1573
        %1661 = vmatpush1.bf16.msra.mxu0 %v1572
        %1662 = vmatprep.subr.bf16.mxu0 %v1579
        %1663 = vmatpush1.bf16.msra.mxu0 %v1578
        %1664 = vmatprep.subr.bf16.mxu0 %v1585
        %1665 = vmatpush1.bf16.msra.mxu0 %v1584
        %1666 = vmatprep.subr.bf16.mxu0 %v1591
        %1667 = vmatpush1.bf16.msra.mxu0 %v1590
        %1668 = vmatprep.subr.bf16.mxu0 %v1597
        %1669 = vmatpush1.bf16.msra.mxu0 %v1596
        %1670 = vmatprep.subr.bf16.mxu0 %v1603
        %1671 = vmatpush1.bf16.msra.mxu0 %v1602
        %1672 = vmatprep.subr.bf16.mxu0 0
        %1673 = vmatpush1.bf16.msra.mxu0 0
        %1674 = vmatprep.subr.bf16.mxu0 0
        %1675 = vmatpush1.bf16.msra.mxu0 0
        %1676 = vmatprep.subr.bf16.mxu0 0
        %1677 = vmatpush1.bf16.msra.mxu0 0
        %1678 = vmatprep.subr.bf16.mxu0 0
        %1679 = vmatpush1.bf16.msra.mxu0 0
        %1680 = vmatprep.subr.bf16.mxu0 0
        %1681 = vmatpush1.bf16.msra.mxu0 0
        %1682 = vmatprep.subr.bf16.mxu0 0
        %1683 = vmatpush1.bf16.msra.mxu0 0
        %1684 = vmatprep.subr.bf16.mxu0 0
        %1685 = vmatpush1.bf16.msra.mxu0 0
        %1686 = vmatprep.subr.bf16.mxu0 0
        %1687 = vmatpush1.bf16.msra.mxu0 0
        %1688 = vmatprep.mubr.bf16.mxu0 0
        %1689 = vmatmul.mubr.bf16.gmra.mrb[0].mxu0 %v1336
        %v1690 = vpop.f32.mrb[0].mxu0
        %v1691 = vadd.f32 %v1389, %v1690
        %v1692 = vpop.f32.mrb[0].mxu0
        %v1693 = vadd.f32 %v1393, %v1692
        %v1694 = vpop.f32.mrb[0].mxu0
        %v1695 = vpop.f32.mrb[0].mxu0
        %v1696 = vadd.f32 %v1393, %v1695
        %1697 = vdwg.mxu0
        %1698 = vmatprep.subr.bf16.mxu0 %v1563
        %1699 = vmatpush1.bf16.msra.mxu0 %v1562
        %1700 = vmatprep.subr.bf16.mxu0 %v1569
        %1701 = vmatpush1.bf16.msra.mxu0 %v1568
        %1702 = vmatprep.subr.bf16.mxu0 %v1575
        %1703 = vmatpush1.bf16.msra.mxu0 %v1574
        %1704 = vmatprep.subr.bf16.mxu0 %v1581
        %1705 = vmatpush1.bf16.msra.mxu0 %v1580
        %1706 = vmatprep.subr.bf16.mxu0 %v1587
        %1707 = vmatpush1.bf16.msra.mxu0 %v1586
        %1708 = vmatprep.subr.bf16.mxu0 %v1593
        %1709 = vmatpush1.bf16.msra.mxu0 %v1592
        %1710 = vmatprep.subr.bf16.mxu0 %v1599
        %1711 = vmatpush1.bf16.msra.mxu0 %v1598
        %1712 = vmatprep.subr.bf16.mxu0 %v1605
        %1713 = vmatpush1.bf16.msra.mxu0 %v1604
        %1714 = vmatprep.subr.bf16.mxu0 0
        %1715 = vmatpush1.bf16.msra.mxu0 0
        %1716 = vmatprep.subr.bf16.mxu0 0
        %1717 = vmatpush1.bf16.msra.mxu0 0
        %1718 = vmatprep.subr.bf16.mxu0 0
        %1719 = vmatpush1.bf16.msra.mxu0 0
        %1720 = vmatprep.subr.bf16.mxu0 0
        %1721 = vmatpush1.bf16.msra.mxu0 0
        %1722 = vmatprep.subr.bf16.mxu0 0
        %1723 = vmatpush1.bf16.msra.mxu0 0
        %1724 = vmatprep.subr.bf16.mxu0 0
        %1725 = vmatpush1.bf16.msra.mxu0 0
        %1726 = vmatprep.subr.bf16.mxu0 0
        %1727 = vmatpush1.bf16.msra.mxu0 0
        %1728 = vmatprep.subr.bf16.mxu0 0
        %1729 = vmatpush1.bf16.msra.mxu0 0
        %1730 = vmatprep.mubr.bf16.mxu0 0
        %1731 = vmatmul.mubr.bf16.gmra.mrb[0].mxu0 %v1336
        %v1732 = vpop.f32.mrb[0].mxu0
        %v1733 = vadd.f32 %v1397, %v1732
        %v1734 = vpop.f32.mrb[0].mxu0
        %v1735 = vadd.f32 %v1401, %v1734
        %v1736 = vpop.f32.mrb[0].mxu0
        %v1737 = vadd.f32 %v1397, %v1736
        %v1738 = vpop.f32.mrb[0].mxu0
        %1739 = vdwg.mxu0
        %1740 = vmatprep.subr.bf16.mxu0 %v1565
        %1741 = vmatpush1.bf16.msra.mxu0 %v1564
        %1742 = vmatprep.subr.bf16.mxu0 %v1571
        %1743 = vmatpush1.bf16.msra.mxu0 %v1570
        %1744 = vmatprep.subr.bf16.mxu0 %v1577
        %1745 = vmatpush1.bf16.msra.mxu0 %v1576
        %1746 = vmatprep.subr.bf16.mxu0 %v1583
        %1747 = vmatpush1.bf16.msra.mxu0 %v1582
        %1748 = vmatprep.subr.bf16.mxu0 %v1589
        %1749 = vmatpush1.bf16.msra.mxu0 %v1588
        %1750 = vmatprep.subr.bf16.mxu0 %v1595
        %1751 = vmatpush1.bf16.msra.mxu0 %v1594
        %1752 = vmatprep.subr.bf16.mxu0 %v1601
        %1753 = vmatpush1.bf16.msra.mxu0 %v1600
        %1754 = vmatprep.subr.bf16.mxu0 %v1607
        %1755 = vmatpush1.bf16.msra.mxu0 %v1606
        %1756 = vmatprep.subr.bf16.mxu0 0
        %1757 = vmatpush1.bf16.msra.mxu0 0
        %1758 = vmatprep.subr.bf16.mxu0 0
        %1759 = vmatpush1.bf16.msra.mxu0 0
        %1760 = vmatprep.subr.bf16.mxu0 0
        %1761 = vmatpush1.bf16.msra.mxu0 0
        %1762 = vmatprep.subr.bf16.mxu0 0
        %1763 = vmatpush1.bf16.msra.mxu0 0
        %1764 = vmatprep.subr.bf16.mxu0 0
        %1765 = vmatpush1.bf16.msra.mxu0 0
        %1766 = vmatprep.subr.bf16.mxu0 0
        %1767 = vmatpush1.bf16.msra.mxu0 0
        %1768 = vmatprep.subr.bf16.mxu0 0
        %1769 = vmatpush1.bf16.msra.mxu0 0
        %1770 = vmatprep.subr.bf16.mxu0 0
        %1771 = vmatpush1.bf16.msra.mxu0 0
        %1772 = vmatprep.mubr.bf16.mxu0 0
        %1773 = vmatmul.mubr.bf16.gmra.mrb[0].mxu0 %v1336
        %v1774 = vpop.f32.mrb[0].mxu0
        %v1775 = vadd.f32 %v1405, %v1774
        %v1776 = vpop.f32.mrb[0].mxu0
        %v1777 = vadd.f32 %v1409, %v1776
        %v1778 = vpop.f32.mrb[0].mxu0
        %v1779 = vadd.f32 %v1405, %v1778
        %v1780 = vpop.f32.mrb[0].mxu0
        %v1781 = vadd.f32 %v1409, %v1780
        %1782 = vdwg.mxu0
        %v1783 = vld [vmem:[%s7] sm:$0xff]
        %v1784 = vld [vmem:[%s7 + $0x8] sm:$0xff]
        %v1785 = vld [vmem:[%s7 + $0x10] sm:$0xff]
        %v1786 = vld [vmem:[%s7 + $0x18] sm:$0xff]
        %v1787 = vld [vmem:[%s7 + $0x20] sm:$0xff]
        %v1788 = vld [vmem:[%s7 + $0x28] sm:$0xff]
        %v1789 = vld [vmem:[%s7 + $0x30] sm:$0xff]
        %v1790 = vld [vmem:[%s7 + $0x38] sm:$0xff]
        %v1791 = vld [vmem:[%s7 + $0x40] sm:$0xff]
        %v1792 = vld [vmem:[%s7 + $0x48] sm:$0xff]
        %v1793 = vld [vmem:[%s7 + $0x50] sm:$0xff]
        %v1794 = vld [vmem:[%s7 + $0x58] sm:$0xff]
        %v1795 = vld [vmem:[%s7 + $0x60] sm:$0xff]
        %v1796 = vld [vmem:[%s7 + $0x68] sm:$0xff]
        %v1797 = vld [vmem:[%s7 + $0x70] sm:$0xff]
        %v1798 = vld [vmem:[%s7 + $0x78] sm:$0xff]
        %v1799 = vmul.f32 %v1693, %v1783
        %v1800 = vmul.f32 %v1696, %v1784
        %v1801 = vmul.f32 %v1693, %v1785
        %v1802 = vmul.f32 %v1696, %v1786
        %v1803 = vmul.f32 %v1693, %v1787
        %v1804 = vmul.f32 %v1696, %v1788
        %v1805 = vmul.f32 %v1693, %v1789
        %v1806 = vmul.f32 %v1696, %v1790
        %v1807 = vmul.f32 %v1693, %v1791
        %v1808 = vmul.f32 %v1696, %v1792
        %v1809 = vmul.f32 %v1693, %v1793
        %v1810 = vmul.f32 %v1696, %v1794
        %v1811 = vmul.f32 %v1693, %v1795
        %v1812 = vmul.f32 %v1696, %v1796
        %v1813 = vmul.f32 %v1693, %v1797
        %v1814 = vmul.f32 %v1696, %v1798
        %v1815 = vmul.f32 %v1733, %v1783
        %v1816 = vmul.f32 %v1737, %v1784
        %v1817 = vmul.f32 %v1733, %v1785
        %v1818 = vmul.f32 %v1737, %v1786
        %v1819 = vmul.f32 %v1733, %v1787
        %v1820 = vmul.f32 %v1737, %v1788
        %v1821 = vmul.f32 %v1733, %v1789
        %v1822 = vmul.f32 %v1737, %v1790
        %v1823 = vmul.f32 %v1733, %v1791
        %v1824 = vmul.f32 %v1737, %v1792
        %v1825 = vmul.f32 %v1733, %v1793
        %v1826 = vmul.f32 %v1737, %v1794
        %v1827 = vmul.f32 %v1733, %v1795
        %v1828 = vmul.f32 %v1737, %v1796
        %v1829 = vmul.f32 %v1733, %v1797
        %v1830 = vmul.f32 %v1737, %v1798
        %v1831 = vpack.c.bf16 %v1816, %v1815
        %v1832 = vpack.c.bf16 %v1818, %v1817
        %v1833 = vpack.c.bf16 %v1820, %v1819
        %v1834 = vpack.c.bf16 %v1822, %v1821
        %v1835 = vpack.c.bf16 %v1824, %v1823
        %v1836 = vpack.c.bf16 %v1826, %v1825
        %v1837 = vpack.c.bf16 %v1828, %v1827
        %v1838 = vpack.c.bf16 %v1830, %v1829
        %1839 = vmatprep.subr.mxu0 0.0
        %1840 = vmatpush1.xpose.msra.mxu0 %v1799
        %1841 = vmatprep.subr.mxu0 0.0
        %1842 = vmatpush1.xpose.msra.mxu0 %v1800
        %1843 = vmatprep.subr.mxu0 0.0
        %1844 = vmatpush1.xpose.msra.mxu0 %v1801
        %1845 = vmatprep.subr.mxu0 0.0
        %1846 = vmatpush1.xpose.msra.mxu0 %v1802
        %1847 = vmatprep.subr.mxu0 0.0
        %1848 = vmatpush1.xpose.msra.mxu0 %v1803
        %1849 = vmatprep.subr.mxu0 0.0
        %1850 = vmatpush1.xpose.msra.mxu0 %v1804
        %1851 = vmatprep.subr.mxu0 0.0
        %1852 = vmatpush1.xpose.msra.mxu0 %v1805
        %1853 = vmatprep.subr.mxu0 0.0
        %1854 = vmatpush1.xpose.msra.mxu0 %v1806
        %1855 = vmatprep.subr.mxu0 0.0
        %1856 = vmatpush1.xpose.msra.mxu0 %v1807
        %1857 = vmatprep.subr.mxu0 0.0
        %1858 = vmatpush1.xpose.msra.mxu0 %v1808
        %1859 = vmatprep.subr.mxu0 0.0
        %1860 = vmatpush1.xpose.msra.mxu0 %v1809
        %1861 = vmatprep.subr.mxu0 0.0
        %1862 = vmatpush1.xpose.msra.mxu0 %v1810
        %1863 = vmatprep.subr.mxu0 0.0
        %1864 = vmatpush1.xpose.msra.mxu0 %v1811
        %1865 = vmatprep.subr.mxu0 0.0
        %1866 = vmatpush1.xpose.msra.mxu0 %v1812
        %1867 = vmatprep.subr.mxu0 0.0
        %1868 = vmatpush1.xpose.msra.mxu0 %v1813
        %1869 = vmatprep.subr.mxu0 0.0
        %1870 = vmatpush1.xpose.msra.mxu0 %v1814
        %1871 = vmatprep.subr.mxu0 0.0
        %1872 = vmatpush1.xpose.msra.mxu0 0.0
        %1873 = vmatprep.subr.mxu0 0.0
        %1874 = vmatpush1.xpose.msra.mxu0 0.0
        %1875 = vmatprep.subr.mxu0 0.0
        %1876 = vmatpush1.xpose.msra.mxu0 0.0
        %1877 = vmatprep.subr.mxu0 0.0
        %1878 = vmatpush1.xpose.msra.mxu0 0.0
        %1879 = vmatprep.subr.mxu0 0.0
        %1880 = vmatpush1.xpose.msra.mxu0 0.0
        %1881 = vmatprep.subr.mxu0 0.0
        %1882 = vmatpush1.xpose.msra.mxu0 0.0
        %1883 = vmatprep.subr.mxu0 0.0
        %1884 = vmatpush1.xpose.msra.mxu0 0.0
        %1885 = vmatprep.subr.mxu0 0.0
        %1886 = vmatpush1.xpose.msra.mxu0 0.0
        %1887 = vmatprep.subr.mxu0 0.0
        %1888 = vmatpush1.xpose.msra.mxu0 0.0
        %1889 = vmatprep.subr.mxu0 0.0
        %1890 = vmatpush1.xpose.msra.mxu0 0.0
        %1891 = vmatprep.subr.mxu0 0.0
        %1892 = vmatpush1.xpose.msra.mxu0 0.0
        %1893 = vmatprep.subr.mxu0 0.0
        %1894 = vmatpush1.xpose.msra.mxu0 0.0
        %1895 = vmatprep.subr.mxu0 0.0
        %1896 = vmatpush1.xpose.msra.mxu0 0.0
        %1897 = vmatprep.subr.mxu0 0.0
        %1898 = vmatpush1.xpose.msra.mxu0 0.0
        %1899 = vmatprep.subr.mxu0 0.0
        %1900 = vmatpush1.xpose.msra.mxu0 0.0
        %1901 = vmatprep.subr.mxu0 0.0
        %1902 = vmatpush1.xpose.msra.mxu0 0.0
        %1903 = vmatprep.mubr.f32.mxu0 0.0
        %1904 = vmatmul.mubr.f32.gmra.mrb[0].mxu0 %v1691
        %v1905 = vpop.f32.mrb[0].mxu0
        %v1906 = vadd.f32 0.0, %v1905
        %v1907 = vpop.f32.mrb[0].mxu0
        %1908 = vdwg.mxu0
        %v1909 = vmul.f32 %v1906, 0.25
        %v1911 = vlaneseq
        %v1912 = vshrl.u32 %v1911, 7
        %v1913 = vsub.s32 0, %v1912
        %v1914 = vrot.slane %v679, %v1913
        %v1916 = vadd.f32 %v1909, %v1914
        %1917 = vmax.xlane.f32.xlu0 %v1916
        %v1918 = vpop.xlane.xlu0 %1917
        %v1919 = vsub.f32 %v1916, %v1918
        %v1920 = vmul.f32 %v1919, 1.442695
        %v1921 = vpow.pop %v1920
        %1922 = vmatprep.subr.mxu0 0.0
        %1923 = vmatpush1.msra.mxu0 %v1783
        %1924 = vmatprep.subr.mxu0 0.0
        %1925 = vmatpush1.msra.mxu0 %v1784
        %1926 = vmatprep.subr.mxu0 0.0
        %1927 = vmatpush1.msra.mxu0 %v1785
        %1928 = vmatprep.subr.mxu0 0.0
        %1929 = vmatpush1.msra.mxu0 %v1786
        %1930 = vmatprep.subr.mxu0 0.0
        %1931 = vmatpush1.msra.mxu0 %v1787
        %1932 = vmatprep.subr.mxu0 0.0
        %1933 = vmatpush1.msra.mxu0 %v1788
        %1934 = vmatprep.subr.mxu0 0.0
        %1935 = vmatpush1.msra.mxu0 %v1789
        %1936 = vmatprep.subr.mxu0 0.0
        %1937 = vmatpush1.msra.mxu0 %v1790
        %1938 = vmatprep.subr.mxu0 0.0
        %1939 = vmatpush1.msra.mxu0 %v1791
        %1940 = vmatprep.subr.mxu0 0.0
        %1941 = vmatpush1.msra.mxu0 %v1792
        %1942 = vmatprep.subr.mxu0 0.0
        %1943 = vmatpush1.msra.mxu0 %v1793
        %1944 = vmatprep.subr.mxu0 0.0
        %1945 = vmatpush1.msra.mxu0 %v1794
        %1946 = vmatprep.subr.mxu0 0.0
        %1947 = vmatpush1.msra.mxu0 %v1795
        %1948 = vmatprep.subr.mxu0 0.0
        %1949 = vmatpush1.msra.mxu0 %v1796
        %1950 = vmatprep.subr.mxu0 0.0
        %1951 = vmatpush1.msra.mxu0 %v1797
        %1952 = vmatprep.subr.mxu0 0.0
        %1953 = vmatpush1.msra.mxu0 %v1798
        %1954 = vmatprep.subr.mxu0 0.0
        %1955 = vmatpush1.msra.mxu0 0.0
        %1956 = vmatprep.subr.mxu0 0.0
        %1957 = vmatpush1.msra.mxu0 0.0
        %1958 = vmatprep.subr.mxu0 0.0
        %1959 = vmatpush1.msra.mxu0 0.0
        %1960 = vmatprep.subr.mxu0 0.0
        %1961 = vmatpush1.msra.mxu0 0.0
        %1962 = vmatprep.subr.mxu0 0.0
        %1963 = vmatpush1.msra.mxu0 0.0
        %1964 = vmatprep.subr.mxu0 0.0
        %1965 = vmatpush1.msra.mxu0 0.0
        %1966 = vmatprep.subr.mxu0 0.0
        %1967 = vmatpush1.msra.mxu0 0.0
        %1968 = vmatprep.subr.mxu0 0.0
        %1969 = vmatpush1.msra.mxu0 0.0
        %1970 = vmatprep.subr.mxu0 0.0
        %1971 = vmatpush1.msra.mxu0 0.0
        %1972 = vmatprep.subr.mxu0 0.0
        %1973 = vmatpush1.msra.mxu0 0.0
        %1974 = vmatprep.subr.mxu0 0.0
        %1975 = vmatpush1.msra.mxu0 0.0
        %1976 = vmatprep.subr.mxu0 0.0
        %1977 = vmatpush1.msra.mxu0 0.0
        %1978 = vmatprep.subr.mxu0 0.0
        %1979 = vmatpush1.msra.mxu0 0.0
        %1980 = vmatprep.subr.mxu0 0.0
        %1981 = vmatpush1.msra.mxu0 0.0
        %1982 = vmatprep.subr.mxu0 0.0
        %1983 = vmatpush1.msra.mxu0 0.0
        %1984 = vmatprep.subr.mxu0 0.0
        %1985 = vmatpush1.msra.mxu0 0.0
        %1986 = vmatprep.mubr.f32.mxu0 0.0
        %1987 = vmatmul.mubr.f32.gmra.mrb[0].mxu0 %v1921
        %v1988 = vpop.f32.mrb[0].mxu0
        %v1989 = vadd.f32 0.0, %v1988
        %v1990 = vpop.f32.mrb[0].mxu0
        %1991 = vdwg.mxu0
        %v1992 = vpack.c.bf16 %v1921, %v1921
        %1993 = vmatprep.subr.bf16.mxu0 0
        %1994 = vmatpush1.bf16.msra.mxu0 %v1831
        %1995 = vmatprep.subr.bf16.mxu0 0
        %1996 = vmatpush1.bf16.msra.mxu0 %v1832
        %1997 = vmatprep.subr.bf16.mxu0 0
        %1998 = vmatpush1.bf16.msra.mxu0 %v1833
        %1999 = vmatprep.subr.bf16.mxu0 0
        %2000 = vmatpush1.bf16.msra.mxu0 %v1834
        %2001 = vmatprep.subr.bf16.mxu0 0
        %2002 = vmatpush1.bf16.msra.mxu0 %v1835
        %2003 = vmatprep.subr.bf16.mxu0 0
        %2004 = vmatpush1.bf16.msra.mxu0 %v1836
        %2005 = vmatprep.subr.bf16.mxu0 0
        %2006 = vmatpush1.bf16.msra.mxu0 %v1837
        %2007 = vmatprep.subr.bf16.mxu0 0
        %2008 = vmatpush1.bf16.msra.mxu0 %v1838
        %2009 = vmatprep.subr.bf16.mxu0 0
        %2010 = vmatpush1.bf16.msra.mxu0 0
        %2011 = vmatprep.subr.bf16.mxu0 0
        %2012 = vmatpush1.bf16.msra.mxu0 0
        %2013 = vmatprep.subr.bf16.mxu0 0
        %2014 = vmatpush1.bf16.msra.mxu0 0
        %2015 = vmatprep.subr.bf16.mxu0 0
        %2016 = vmatpush1.bf16.msra.mxu0 0
        %2017 = vmatprep.subr.bf16.mxu0 0
        %2018 = vmatpush1.bf16.msra.mxu0 0
        %2019 = vmatprep.subr.bf16.mxu0 0
        %2020 = vmatpush1.bf16.msra.mxu0 0
        %2021 = vmatprep.subr.bf16.mxu0 0
        %2022 = vmatpush1.bf16.msra.mxu0 0
        %2023 = vmatprep.subr.bf16.mxu0 0
        %2024 = vmatpush1.bf16.msra.mxu0 0
        %2025 = vmatprep.mubr.bf16.mxu0 0
        %2026 = vmatmul.mubr.bf16.gmra.mrb[0].mxu0 %v1992
        %v2027 = vpop.f32.mrb[0].mxu0
        %v2028 = vadd.f32 0.0, %v2027
        %v2029 = vpop.f32.mrb[0].mxu0
        %v2030 = vpop.f32.mrb[0].mxu0
        %v2031 = vpop.f32.mrb[0].mxu0
        %2032 = vdwg.mxu0
        %v2033 = vrcp.pop %v1989
        %v2034 = vmul.f32 %v2028, %v2033
        %v2035 = vmul.f32 %v1775, %v1783
        %v2036 = vmul.f32 %v1779, %v1784
        %v2037 = vmul.f32 %v1775, %v1785
        %v2038 = vmul.f32 %v1779, %v1786
        %v2039 = vmul.f32 %v1775, %v1787
        %v2040 = vmul.f32 %v1779, %v1788
        %v2041 = vmul.f32 %v1775, %v1789
        %v2042 = vmul.f32 %v1779, %v1790
        %v2043 = vmul.f32 %v1775, %v1791
        %v2044 = vmul.f32 %v1779, %v1792
        %v2045 = vmul.f32 %v1775, %v1793
        %v2046 = vmul.f32 %v1779, %v1794
        %v2047 = vmul.f32 %v1775, %v1795
        %v2048 = vmul.f32 %v1779, %v1796
        %v2049 = vmul.f32 %v1775, %v1797
        %v2050 = vmul.f32 %v1779, %v1798
        %v2051 = vmul.f32 %v1777, %v1783
        %v2052 = vmul.f32 %v1781, %v1784
        %v2053 = vmul.f32 %v1777, %v1785
        %v2054 = vmul.f32 %v1781, %v1786
        %v2055 = vmul.f32 %v1777, %v1787
        %v2056 = vmul.f32 %v1781, %v1788
        %v2057 = vmul.f32 %v1777, %v1789
        %v2058 = vmul.f32 %v1781, %v1790
        %v2059 = vmul.f32 %v1777, %v1791
        %v2060 = vmul.f32 %v1781, %v1792
        %v2061 = vmul.f32 %v1777, %v1793
        %v2062 = vmul.f32 %v1781, %v1794
        %v2063 = vmul.f32 %v1777, %v1795
        %v2064 = vmul.f32 %v1781, %v1796
        %v2065 = vmul.f32 %v1777, %v1797
        %v2066 = vmul.f32 %v1781, %v1798
        %v2067 = vpack.c.bf16 %v2052, %v2051
        %v2068 = vpack.c.bf16 %v2054, %v2053
        %v2069 = vpack.c.bf16 %v2056, %v2055
        %v2070 = vpack.c.bf16 %v2058, %v2057
        %v2071 = vpack.c.bf16 %v2060, %v2059
        %v2072 = vpack.c.bf16 %v2062, %v2061
        %v2073 = vpack.c.bf16 %v2064, %v2063
        %v2074 = vpack.c.bf16 %v2066, %v2065
        %2075 = vmatprep.subr.mxu0 0.0
        %2076 = vmatpush1.xpose.msra.mxu0 %v2035
        %2077 = vmatprep.subr.mxu0 0.0
        %2078 = vmatpush1.xpose.msra.mxu0 %v2036
        %2079 = vmatprep.subr.mxu0 0.0
        %2080 = vmatpush1.xpose.msra.mxu0 %v2037
        %2081 = vmatprep.subr.mxu0 0.0
        %2082 = vmatpush1.xpose.msra.mxu0 %v2038
        %2083 = vmatprep.subr.mxu0 0.0
        %2084 = vmatpush1.xpose.msra.mxu0 %v2039
        %2085 = vmatprep.subr.mxu0 0.0
        %2086 = vmatpush1.xpose.msra.mxu0 %v2040
        %2087 = vmatprep.subr.mxu0 0.0
        %2088 = vmatpush1.xpose.msra.mxu0 %v2041
        %2089 = vmatprep.subr.mxu0 0.0
        %2090 = vmatpush1.xpose.msra.mxu0 %v2042
        %2091 = vmatprep.subr.mxu0 0.0
        %2092 = vmatpush1.xpose.msra.mxu0 %v2043
        %2093 = vmatprep.subr.mxu0 0.0
        %2094 = vmatpush1.xpose.msra.mxu0 %v2044
        %2095 = vmatprep.subr.mxu0 0.0
        %2096 = vmatpush1.xpose.msra.mxu0 %v2045
        %2097 = vmatprep.subr.mxu0 0.0
        %2098 = vmatpush1.xpose.msra.mxu0 %v2046
        %2099 = vmatprep.subr.mxu0 0.0
        %2100 = vmatpush1.xpose.msra.mxu0 %v2047
        %2101 = vmatprep.subr.mxu0 0.0
        %2102 = vmatpush1.xpose.msra.mxu0 %v2048
        %2103 = vmatprep.subr.mxu0 0.0
        %2104 = vmatpush1.xpose.msra.mxu0 %v2049
        %2105 = vmatprep.subr.mxu0 0.0
        %2106 = vmatpush1.xpose.msra.mxu0 %v2050
        %2107 = vmatprep.subr.mxu0 0.0
        %2108 = vmatpush1.xpose.msra.mxu0 0.0
        %2109 = vmatprep.subr.mxu0 0.0
        %2110 = vmatpush1.xpose.msra.mxu0 0.0
        %2111 = vmatprep.subr.mxu0 0.0
        %2112 = vmatpush1.xpose.msra.mxu0 0.0
        %2113 = vmatprep.subr.mxu0 0.0
        %2114 = vmatpush1.xpose.msra.mxu0 0.0
        %2115 = vmatprep.subr.mxu0 0.0
        %2116 = vmatpush1.xpose.msra.mxu0 0.0
        %2117 = vmatprep.subr.mxu0 0.0
        %2118 = vmatpush1.xpose.msra.mxu0 0.0
        %2119 = vmatprep.subr.mxu0 0.0
        %2120 = vmatpush1.xpose.msra.mxu0 0.0
        %2121 = vmatprep.subr.mxu0 0.0
        %2122 = vmatpush1.xpose.msra.mxu0 0.0
        %2123 = vmatprep.subr.mxu0 0.0
        %2124 = vmatpush1.xpose.msra.mxu0 0.0
        %2125 = vmatprep.subr.mxu0 0.0
        %2126 = vmatpush1.xpose.msra.mxu0 0.0
        %2127 = vmatprep.subr.mxu0 0.0
        %2128 = vmatpush1.xpose.msra.mxu0 0.0
        %2129 = vmatprep.subr.mxu0 0.0
        %2130 = vmatpush1.xpose.msra.mxu0 0.0
        %2131 = vmatprep.subr.mxu0 0.0
        %2132 = vmatpush1.xpose.msra.mxu0 0.0
        %2133 = vmatprep.subr.mxu0 0.0
        %2134 = vmatpush1.xpose.msra.mxu0 0.0
        %2135 = vmatprep.subr.mxu0 0.0
        %2136 = vmatpush1.xpose.msra.mxu0 0.0
        %2137 = vmatprep.subr.mxu0 0.0
        %2138 = vmatpush1.xpose.msra.mxu0 0.0
        %2139 = vmatprep.mubr.f32.mxu0 0.0
        %2140 = vmatmul.mubr.f32.gmra.mrb[0].mxu0 %v1735
        %v2141 = vpop.f32.mrb[0].mxu0
        %v2142 = vadd.f32 0.0, %v2141
        %v2143 = vpop.f32.mrb[0].mxu0
        %2144 = vdwg.mxu0
        %v2145 = vmul.f32 %v2142, 0.25
        %v2147 = vlaneseq
        %v2148 = vshrl.u32 %v2147, 7
        %v2149 = vsub.s32 0, %v2148
        %v2150 = vrot.slane %v680, %v2149
        %v2152 = vadd.f32 %v2145, %v2150
        %2153 = vmax.xlane.f32.xlu0 %v2152
        %v2154 = vpop.xlane.xlu0 %2153
        %v2155 = vsub.f32 %v2152, %v2154
        %v2156 = vmul.f32 %v2155, 1.442695
        %v2157 = vpow.pop %v2156
        %2158 = vmatprep.subr.mxu0 0.0
        %2159 = vmatpush1.msra.mxu0 %v1783
        %2160 = vmatprep.subr.mxu0 0.0
        %2161 = vmatpush1.msra.mxu0 %v1784
        %2162 = vmatprep.subr.mxu0 0.0
        %2163 = vmatpush1.msra.mxu0 %v1785
        %2164 = vmatprep.subr.mxu0 0.0
        %2165 = vmatpush1.msra.mxu0 %v1786
        %2166 = vmatprep.subr.mxu0 0.0
        %2167 = vmatpush1.msra.mxu0 %v1787
        %2168 = vmatprep.subr.mxu0 0.0
        %2169 = vmatpush1.msra.mxu0 %v1788
        %2170 = vmatprep.subr.mxu0 0.0
        %2171 = vmatpush1.msra.mxu0 %v1789
        %2172 = vmatprep.subr.mxu0 0.0
        %2173 = vmatpush1.msra.mxu0 %v1790
        %2174 = vmatprep.subr.mxu0 0.0
        %2175 = vmatpush1.msra.mxu0 %v1791
        %2176 = vmatprep.subr.mxu0 0.0
        %2177 = vmatpush1.msra.mxu0 %v1792
        %2178 = vmatprep.subr.mxu0 0.0
        %2179 = vmatpush1.msra.mxu0 %v1793
        %2180 = vmatprep.subr.mxu0 0.0
        %2181 = vmatpush1.msra.mxu0 %v1794
        %2182 = vmatprep.subr.mxu0 0.0
        %2183 = vmatpush1.msra.mxu0 %v1795
        %2184 = vmatprep.subr.mxu0 0.0
        %2185 = vmatpush1.msra.mxu0 %v1796
        %2186 = vmatprep.subr.mxu0 0.0
        %2187 = vmatpush1.msra.mxu0 %v1797
        %2188 = vmatprep.subr.mxu0 0.0
        %2189 = vmatpush1.msra.mxu0 %v1798
        %2190 = vmatprep.subr.mxu0 0.0
        %2191 = vmatpush1.msra.mxu0 0.0
        %2192 = vmatprep.subr.mxu0 0.0
        %2193 = vmatpush1.msra.mxu0 0.0
        %2194 = vmatprep.subr.mxu0 0.0
        %2195 = vmatpush1.msra.mxu0 0.0
        %2196 = vmatprep.subr.mxu0 0.0
        %2197 = vmatpush1.msra.mxu0 0.0
        %2198 = vmatprep.subr.mxu0 0.0
        %2199 = vmatpush1.msra.mxu0 0.0
        %2200 = vmatprep.subr.mxu0 0.0
        %2201 = vmatpush1.msra.mxu0 0.0
        %2202 = vmatprep.subr.mxu0 0.0
        %2203 = vmatpush1.msra.mxu0 0.0
        %2204 = vmatprep.subr.mxu0 0.0
        %2205 = vmatpush1.msra.mxu0 0.0
        %2206 = vmatprep.subr.mxu0 0.0
        %2207 = vmatpush1.msra.mxu0 0.0
        %2208 = vmatprep.subr.mxu0 0.0
        %2209 = vmatpush1.msra.mxu0 0.0
        %2210 = vmatprep.subr.mxu0 0.0
        %2211 = vmatpush1.msra.mxu0 0.0
        %2212 = vmatprep.subr.mxu0 0.0
        %2213 = vmatpush1.msra.mxu0 0.0
        %2214 = vmatprep.subr.mxu0 0.0
        %2215 = vmatpush1.msra.mxu0 0.0
        %2216 = vmatprep.subr.mxu0 0.0
        %2217 = vmatpush1.msra.mxu0 0.0
        %2218 = vmatprep.subr.mxu0 0.0
        %2219 = vmatpush1.msra.mxu0 0.0
        %2220 = vmatprep.subr.mxu0 0.0
        %2221 = vmatpush1.msra.mxu0 0.0
        %2222 = vmatprep.mubr.f32.mxu0 0.0
        %2223 = vmatmul.mubr.f32.gmra.mrb[0].mxu0 %v2157
        %v2224 = vpop.f32.mrb[0].mxu0
        %v2225 = vadd.f32 0.0, %v2224
        %v2226 = vpop.f32.mrb[0].mxu0
        %2227 = vdwg.mxu0
        %v2228 = vpack.c.bf16 %v2157, %v2157
        %2229 = vmatprep.subr.bf16.mxu0 0
        %2230 = vmatpush1.bf16.msra.mxu0 %v2067
        %2231 = vmatprep.subr.bf16.mxu0 0
        %2232 = vmatpush1.bf16.msra.mxu0 %v2068
        %2233 = vmatprep.subr.bf16.mxu0 0
        %2234 = vmatpush1.bf16.msra.mxu0 %v2069
        %2235 = vmatprep.subr.bf16.mxu0 0
        %2236 = vmatpush1.bf16.msra.mxu0 %v2070
        %2237 = vmatprep.subr.bf16.mxu0 0
        %2238 = vmatpush1.bf16.msra.mxu0 %v2071
        %2239 = vmatprep.subr.bf16.mxu0 0
        %2240 = vmatpush1.bf16.msra.mxu0 %v2072
        %2241 = vmatprep.subr.bf16.mxu0 0
        %2242 = vmatpush1.bf16.msra.mxu0 %v2073
        %2243 = vmatprep.subr.bf16.mxu0 0
        %2244 = vmatpush1.bf16.msra.mxu0 %v2074
        %2245 = vmatprep.subr.bf16.mxu0 0
        %2246 = vmatpush1.bf16.msra.mxu0 0
        %2247 = vmatprep.subr.bf16.mxu0 0
        %2248 = vmatpush1.bf16.msra.mxu0 0
        %2249 = vmatprep.subr.bf16.mxu0 0
        %2250 = vmatpush1.bf16.msra.mxu0 0
        %2251 = vmatprep.subr.bf16.mxu0 0
        %2252 = vmatpush1.bf16.msra.mxu0 0
        %2253 = vmatprep.subr.bf16.mxu0 0
        %2254 = vmatpush1.bf16.msra.mxu0 0
        %2255 = vmatprep.subr.bf16.mxu0 0
        %2256 = vmatpush1.bf16.msra.mxu0 0
        %2257 = vmatprep.subr.bf16.mxu0 0
        %2258 = vmatpush1.bf16.msra.mxu0 0
        %2259 = vmatprep.subr.bf16.mxu0 0
        %2260 = vmatpush1.bf16.msra.mxu0 0
        %2261 = vmatprep.mubr.bf16.mxu0 0
        %2262 = vmatmul.mubr.bf16.gmra.mrb[0].mxu0 %v2228
        %v2263 = vpop.f32.mrb[0].mxu0
        %v2264 = vadd.f32 0.0, %v2263
        %v2265 = vpop.f32.mrb[0].mxu0
        %v2266 = vpop.f32.mrb[0].mxu0
        %v2267 = vpop.f32.mrb[0].mxu0
        %2268 = vdwg.mxu0
        %v2269 = vrcp.pop %v2225
        %v2270 = vmul.f32 %v2264, %v2269
        %v2271 = vpack.c.bf16 %v2034, %v2034
        %s2272 = scalar_lea.vmem [#allocation8], 64
        %v2273 = vld [vmem:[%s2272] sm:$0xf]
        %v2274 = vld [vmem:[%s2272 + $0x4] sm:$0xf]
        %v2275 = vld [vmem:[%s2272 + $0x8] sm:$0xf]
        %v2276 = vld [vmem:[%s2272 + $0xc] sm:$0xf]
        %v2277 = vld [vmem:[%s2272 + $0x10] sm:$0xf]
        %v2278 = vld [vmem:[%s2272 + $0x14] sm:$0xf]
        %v2279 = vld [vmem:[%s2272 + $0x18] sm:$0xf]
        %v2280 = vld [vmem:[%s2272 + $0x1c] sm:$0xf]
        %v2281 = vld [vmem:[%s2272 + $0x20] sm:$0xf]
        %v2282 = vld [vmem:[%s2272 + $0x24] sm:$0xf]
        %v2283 = vld [vmem:[%s2272 + $0x28] sm:$0xf]
        %v2284 = vld [vmem:[%s2272 + $0x2c] sm:$0xf]
        %v2285 = vld [vmem:[%s2272 + $0x30] sm:$0xf]
        %v2286 = vld [vmem:[%s2272 + $0x34] sm:$0xf]
        %v2287 = vld [vmem:[%s2272 + $0x38] sm:$0xf]
        %v2288 = vld [vmem:[%s2272 + $0x3c] sm:$0xf]
        %v2289 = vlaneseq
        %v2290 = vshrl.u32 %v2289, 7
        %v2291 = vsub.s32 0, %v2290
        %v2292 = vrot.slane %v687, %v2291
        %v2309 = vunpack.c.l.b16 %v2273
        %v2310 = vunpack.c.l.b16 %v2274
        %v2311 = vunpack.c.l.b16 %v2275
        %v2312 = vunpack.c.l.b16 %v2276
        %v2313 = vunpack.c.l.b16 %v2277
        %v2314 = vunpack.c.l.b16 %v2278
        %v2315 = vunpack.c.l.b16 %v2279
        %v2316 = vunpack.c.l.b16 %v2280
        %v2317 = vunpack.c.l.b16 %v2281
        %v2318 = vunpack.c.l.b16 %v2282
        %v2319 = vunpack.c.l.b16 %v2283
        %v2320 = vunpack.c.l.b16 %v2284
        %v2321 = vunpack.c.l.b16 %v2285
        %v2322 = vunpack.c.l.b16 %v2286
        %v2323 = vunpack.c.l.b16 %v2287
        %v2324 = vunpack.c.l.b16 %v2288
        %v2325 = vpack.c.b16 %v2310, %v2309
        %v2326 = vpack.c.b16 %v2312, %v2311
        %v2327 = vpack.c.b16 %v2314, %v2313
        %v2328 = vpack.c.b16 %v2316, %v2315
        %v2329 = vpack.c.b16 %v2318, %v2317
        %v2330 = vpack.c.b16 %v2320, %v2319
        %v2331 = vpack.c.b16 %v2322, %v2321
        %v2332 = vpack.c.b16 %v2324, %v2323
        %2341 = vmatprep.subr.bf16.mxu0 0
        %2342 = vmatpush1.bf16.msra.mxu0 %v2325
        %2343 = vmatprep.subr.bf16.mxu0 0
        %2344 = vmatpush1.bf16.msra.mxu0 %v2326
        %2345 = vmatprep.subr.bf16.mxu0 0
        %2346 = vmatpush1.bf16.msra.mxu0 %v2327
        %2347 = vmatprep.subr.bf16.mxu0 0
        %2348 = vmatpush1.bf16.msra.mxu0 %v2328
        %2349 = vmatprep.subr.bf16.mxu0 0
        %2350 = vmatpush1.bf16.msra.mxu0 %v2329
        %2351 = vmatprep.subr.bf16.mxu0 0
        %2352 = vmatpush1.bf16.msra.mxu0 %v2330
        %2353 = vmatprep.subr.bf16.mxu0 0
        %2354 = vmatpush1.bf16.msra.mxu0 %v2331
        %2355 = vmatprep.subr.bf16.mxu0 0
        %2356 = vmatpush1.bf16.msra.mxu0 %v2332
        %2357 = vmatprep.subr.bf16.mxu0 0
        %2358 = vmatpush1.bf16.msra.mxu0 0
        %2359 = vmatprep.subr.bf16.mxu0 0
        %2360 = vmatpush1.bf16.msra.mxu0 0
        %2361 = vmatprep.subr.bf16.mxu0 0
        %2362 = vmatpush1.bf16.msra.mxu0 0
        %2363 = vmatprep.subr.bf16.mxu0 0
        %2364 = vmatpush1.bf16.msra.mxu0 0
        %2365 = vmatprep.subr.bf16.mxu0 0
        %2366 = vmatpush1.bf16.msra.mxu0 0
        %2367 = vmatprep.subr.bf16.mxu0 0
        %2368 = vmatpush1.bf16.msra.mxu0 0
        %2369 = vmatprep.subr.bf16.mxu0 0
        %2370 = vmatpush1.bf16.msra.mxu0 0
        %2371 = vmatprep.subr.bf16.mxu0 0
        %2372 = vmatpush1.bf16.msra.mxu0 0
        %2373 = vmatprep.mubr.bf16.mxu0 0
        %2374 = vmatmul.mubr.bf16.gmra.mrb[0].mxu0 %v2271
        %v2375 = vpop.f32.mrb[0].mxu0
        %v2376 = vadd.f32 %v2292, %v2375
        %v2377 = vpop.f32.mrb[0].mxu0
        %v2378 = vpop.f32.mrb[0].mxu0
        %v2379 = vpop.f32.mrb[0].mxu0
        %2380 = vdwg.mxu0
        %v2381 = vpack.c.bf16 %v2270, %v2270
        %s2382 = scalar_lea.vmem [#allocation8], 128
        %v2383 = vld [vmem:[%s2382] sm:$0xf]
        %v2384 = vld [vmem:[%s2382 + $0x4] sm:$0xf]
        %v2385 = vld [vmem:[%s2382 + $0x8] sm:$0xf]
        %v2386 = vld [vmem:[%s2382 + $0xc] sm:$0xf]
        %v2387 = vld [vmem:[%s2382 + $0x10] sm:$0xf]
        %v2388 = vld [vmem:[%s2382 + $0x14] sm:$0xf]
        %v2389 = vld [vmem:[%s2382 + $0x18] sm:$0xf]
        %v2390 = vld [vmem:[%s2382 + $0x1c] sm:$0xf]
        %v2391 = vld [vmem:[%s2382 + $0x20] sm:$0xf]
        %v2392 = vld [vmem:[%s2382 + $0x24] sm:$0xf]
        %v2393 = vld [vmem:[%s2382 + $0x28] sm:$0xf]
        %v2394 = vld [vmem:[%s2382 + $0x2c] sm:$0xf]
        %v2395 = vld [vmem:[%s2382 + $0x30] sm:$0xf]
        %v2396 = vld [vmem:[%s2382 + $0x34] sm:$0xf]
        %v2397 = vld [vmem:[%s2382 + $0x38] sm:$0xf]
        %v2398 = vld [vmem:[%s2382 + $0x3c] sm:$0xf]
        %v2399 = vlaneseq
        %v2400 = vshrl.u32 %v2399, 7
        %v2401 = vsub.s32 0, %v2400
        %v2402 = vrot.slane %v688, %v2401
        %v2419 = vunpack.c.l.b16 %v2383
        %v2420 = vunpack.c.l.b16 %v2384
        %v2421 = vunpack.c.l.b16 %v2385
        %v2422 = vunpack.c.l.b16 %v2386
        %v2423 = vunpack.c.l.b16 %v2387
        %v2424 = vunpack.c.l.b16 %v2388
        %v2425 = vunpack.c.l.b16 %v2389
        %v2426 = vunpack.c.l.b16 %v2390
        %v2427 = vunpack.c.l.b16 %v2391
        %v2428 = vunpack.c.l.b16 %v2392
        %v2429 = vunpack.c.l.b16 %v2393
        %v2430 = vunpack.c.l.b16 %v2394
        %v2431 = vunpack.c.l.b16 %v2395
        %v2432 = vunpack.c.l.b16 %v2396
        %v2433 = vunpack.c.l.b16 %v2397
        %v2434 = vunpack.c.l.b16 %v2398
        %v2435 = vpack.c.b16 %v2420, %v2419
        %v2436 = vpack.c.b16 %v2422, %v2421
        %v2437 = vpack.c.b16 %v2424, %v2423
        %v2438 = vpack.c.b16 %v2426, %v2425
        %v2439 = vpack.c.b16 %v2428, %v2427
        %v2440 = vpack.c.b16 %v2430, %v2429
        %v2441 = vpack.c.b16 %v2432, %v2431
        %v2442 = vpack.c.b16 %v2434, %v2433
        %2451 = vmatprep.subr.bf16.mxu0 0
        %2452 = vmatpush1.bf16.msra.mxu0 %v2435
        %2453 = vmatprep.subr.bf16.mxu0 0
        %2454 = vmatpush1.bf16.msra.mxu0 %v2436
        %2455 = vmatprep.subr.bf16.mxu0 0
        %2456 = vmatpush1.bf16.msra.mxu0 %v2437
        %2457 = vmatprep.subr.bf16.mxu0 0
        %2458 = vmatpush1.bf16.msra.mxu0 %v2438
        %2459 = vmatprep.subr.bf16.mxu0 0
        %2460 = vmatpush1.bf16.msra.mxu0 %v2439
        %2461 = vmatprep.subr.bf16.mxu0 0
        %2462 = vmatpush1.bf16.msra.mxu0 %v2440
        %2463 = vmatprep.subr.bf16.mxu0 0
        %2464 = vmatpush1.bf16.msra.mxu0 %v2441
        %2465 = vmatprep.subr.bf16.mxu0 0
        %2466 = vmatpush1.bf16.msra.mxu0 %v2442
        %2467 = vmatprep.subr.bf16.mxu0 0
        %2468 = vmatpush1.bf16.msra.mxu0 0
        %2469 = vmatprep.subr.bf16.mxu0 0
        %2470 = vmatpush1.bf16.msra.mxu0 0
        %2471 = vmatprep.subr.bf16.mxu0 0
        %2472 = vmatpush1.bf16.msra.mxu0 0
        %2473 = vmatprep.subr.bf16.mxu0 0
        %2474 = vmatpush1.bf16.msra.mxu0 0
        %2475 = vmatprep.subr.bf16.mxu0 0
        %2476 = vmatpush1.bf16.msra.mxu0 0
        %2477 = vmatprep.subr.bf16.mxu0 0
        %2478 = vmatpush1.bf16.msra.mxu0 0
        %2479 = vmatprep.subr.bf16.mxu0 0
        %2480 = vmatpush1.bf16.msra.mxu0 0
        %2481 = vmatprep.subr.bf16.mxu0 0
        %2482 = vmatpush1.bf16.msra.mxu0 0
        %2483 = vmatprep.mubr.bf16.mxu0 0
        %2484 = vmatmul.mubr.bf16.gmra.mrb[0].mxu0 %v2381
        %v2485 = vpop.f32.mrb[0].mxu0
        %v2486 = vadd.f32 %v2402, %v2485
        %v2487 = vpop.f32.mrb[0].mxu0
        %v2488 = vpop.f32.mrb[0].mxu0
        %v2489 = vpop.f32.mrb[0].mxu0
        %2490 = vdwg.mxu0
        %2492 = vset.pattern.permute.xlu0 0
        %2493 = vperm.xlu0 %2492, %v681
        %v2494 = vpop.permute.xlu0 %2493
        %v2496 = vmul.f32 %v2376, %v2494
        %v2497 = vadd.f32 %v1335, %v2496
        %2499 = vset.pattern.permute.xlu0 0
        %2500 = vperm.xlu0 %2499, %v682
        %v2501 = vpop.permute.xlu0 %2500
        %v2503 = vmul.f32 %v2486, %v2501
        %2505 = vset.pattern.permute.xlu0 0
        %2506 = vperm.xlu0 %2505, %v698
        %v2507 = vpop.permute.xlu0 %2506
        %v2509 = vmul.f32 %v2507, %v2503
        %v2510 = vadd.f32 %v2497, %v2509
        %2511 = vadd.xlane.f32.xlu0 %v2510
        %v2512 = vpop.xlane.xlu0 %2511
        %v2513 = vmul.f32 %v2512, %v701
        %v2514 = vsub.f32 %v2510, %v2513
        %v2515 = vmul.f32 %v2514, %v2514
        %2516 = vadd.xlane.f32.xlu0 %v2515
        %v2517 = vpop.xlane.xlu0 %2516
        %v2518 = vmul.f32 %v2517, %v701
        %v2519 = vadd.f32 %v2518, 1e-05
        %v2520 = vrsqrt.pop %v2519
        %v2521 = vmul.f32 %v2514, %v2520
        %v2522 = vlaneseq
        %v2523 = vshrl.u32 %v2522, 7
        %v2524 = vsub.s32 0, %v2523
        %v2525 = vrot.slane %v693, %v2524
        %v2526 = vmul.f32 %v2521, %v2525
        %v2527 = vlaneseq
        %v2528 = vshrl.u32 %v2527, 7
        %v2529 = vsub.s32 0, %v2528
        %v2530 = vrot.slane %v694, %v2529
        %v2531 = vadd.f32 %v2526, %v2530
        %v2532 = vpack.c.bf16 %v2531, %v2531
        %v2533 = vld [vmem:[#allocation10] sm:$0xff]
        %v2534 = vld [vmem:[#allocation10 + $0x8] sm:$0xff]
        %v2535 = vld [vmem:[#allocation10 + $0x10] sm:$0xff]
        %v2536 = vld [vmem:[#allocation10 + $0x18] sm:$0xff]
        %v2537 = vld [vmem:[#allocation10 + $0x20] sm:$0xff]
        %v2538 = vld [vmem:[#allocation10 + $0x28] sm:$0xff]
        %v2539 = vld [vmem:[#allocation10 + $0x30] sm:$0xff]
        %v2540 = vld [vmem:[#allocation10 + $0x38] sm:$0xff]
        %v2541 = vld [vmem:[#allocation10 + $0x40] sm:$0xff]
        %v2542 = vld [vmem:[#allocation10 + $0x48] sm:$0xff]
        %v2543 = vld [vmem:[#allocation10 + $0x50] sm:$0xff]
        %v2544 = vld [vmem:[#allocation10 + $0x58] sm:$0xff]
        %v2545 = vld [vmem:[#allocation10 + $0x60] sm:$0xff]
        %v2546 = vld [vmem:[#allocation10 + $0x68] sm:$0xff]
        %v2547 = vld [vmem:[#allocation10 + $0x70] sm:$0xff]
        %v2548 = vld [vmem:[#allocation10 + $0x78] sm:$0xff]
        %v2550 = vlaneseq
        %v2551 = vshrl.u32 %v2550, 7
        %v2552 = vsub.s32 0, %v2551
        %v2553 = vrot.slane %v696, %v2552
        %v2554 = vlaneseq
        %v2555 = vshrl.u32 %v2554, 7
        %v2556 = vsub.s32 1, %v2555
        %v2557 = vrot.slane %v696, %v2556
        %v2576 = vunpack.c.l.b16 %v2533
        %v2577 = vunpack.c.h.b16 %v2533
        %v2578 = vunpack.c.l.b16 %v2534
        %v2579 = vunpack.c.h.b16 %v2534
        %v2580 = vunpack.c.l.b16 %v2535
        %v2581 = vunpack.c.h.b16 %v2535
        %v2582 = vunpack.c.l.b16 %v2536
        %v2583 = vunpack.c.h.b16 %v2536
        %v2584 = vunpack.c.l.b16 %v2537
        %v2585 = vunpack.c.h.b16 %v2537
        %v2586 = vunpack.c.l.b16 %v2538
        %v2587 = vunpack.c.h.b16 %v2538
        %v2588 = vunpack.c.l.b16 %v2539
        %v2589 = vunpack.c.h.b16 %v2539
        %v2590 = vunpack.c.l.b16 %v2540
        %v2591 = vunpack.c.h.b16 %v2540
        %v2592 = vunpack.c.l.b16 %v2541
        %v2593 = vunpack.c.h.b16 %v2541
        %v2594 = vunpack.c.l.b16 %v2542
        %v2595 = vunpack.c.h.b16 %v2542
        %v2596 = vunpack.c.l.b16 %v2543
        %v2597 = vunpack.c.h.b16 %v2543
        %v2598 = vunpack.c.l.b16 %v2544
        %v2599 = vunpack.c.h.b16 %v2544
        %v2600 = vunpack.c.l.b16 %v2545
        %v2601 = vunpack.c.h.b16 %v2545
        %v2602 = vunpack.c.l.b16 %v2546
        %v2603 = vunpack.c.h.b16 %v2546
        %v2604 = vunpack.c.l.b16 %v2547
        %v2605 = vunpack.c.h.b16 %v2547
        %v2606 = vunpack.c.l.b16 %v2548
        %v2607 = vunpack.c.h.b16 %v2548
        %v2608 = vpack.c.b16 %v2578, %v2576
        %v2609 = vpack.c.b16 %v2579, %v2577
        %v2610 = vpack.c.b16 %v2582, %v2580
        %v2611 = vpack.c.b16 %v2583, %v2581
        %v2612 = vpack.c.b16 %v2586, %v2584
        %v2613 = vpack.c.b16 %v2587, %v2585
        %v2614 = vpack.c.b16 %v2590, %v2588
        %v2615 = vpack.c.b16 %v2591, %v2589
        %v2616 = vpack.c.b16 %v2594, %v2592
        %v2617 = vpack.c.b16 %v2595, %v2593
        %v2618 = vpack.c.b16 %v2598, %v2596
        %v2619 = vpack.c.b16 %v2599, %v2597
        %v2620 = vpack.c.b16 %v2602, %v2600
        %v2621 = vpack.c.b16 %v2603, %v2601
        %v2622 = vpack.c.b16 %v2606, %v2604
        %v2623 = vpack.c.b16 %v2607, %v2605
        %2640 = vmatprep.subr.bf16.mxu0 %v2609
        %2641 = vmatpush1.bf16.msra.mxu0 %v2608
        %2642 = vmatprep.subr.bf16.mxu0 %v2611
        %2643 = vmatpush1.bf16.msra.mxu0 %v2610
        %2644 = vmatprep.subr.bf16.mxu0 %v2613
        %2645 = vmatpush1.bf16.msra.mxu0 %v2612
        %2646 = vmatprep.subr.bf16.mxu0 %v2615
        %2647 = vmatpush1.bf16.msra.mxu0 %v2614
        %2648 = vmatprep.subr.bf16.mxu0 %v2617
        %2649 = vmatpush1.bf16.msra.mxu0 %v2616
        %2650 = vmatprep.subr.bf16.mxu0 %v2619
        %2651 = vmatpush1.bf16.msra.mxu0 %v2618
        %2652 = vmatprep.subr.bf16.mxu0 %v2621
        %2653 = vmatpush1.bf16.msra.mxu0 %v2620
        %2654 = vmatprep.subr.bf16.mxu0 %v2623
        %2655 = vmatpush1.bf16.msra.mxu0 %v2622
        %2656 = vmatprep.subr.bf16.mxu0 0
        %2657 = vmatpush1.bf16.msra.mxu0 0
        %2658 = vmatprep.subr.bf16.mxu0 0
        %2659 = vmatpush1.bf16.msra.mxu0 0
        %2660 = vmatprep.subr.bf16.mxu0 0
        %2661 = vmatpush1.bf16.msra.mxu0 0
        %2662 = vmatprep.subr.bf16.mxu0 0
        %2663 = vmatpush1.bf16.msra.mxu0 0
        %2664 = vmatprep.subr.bf16.mxu0 0
        %2665 = vmatpush1.bf16.msra.mxu0 0
        %2666 = vmatprep.subr.bf16.mxu0 0
        %2667 = vmatpush1.bf16.msra.mxu0 0
        %2668 = vmatprep.subr.bf16.mxu0 0
        %2669 = vmatpush1.bf16.msra.mxu0 0
        %2670 = vmatprep.subr.bf16.mxu0 0
        %2671 = vmatpush1.bf16.msra.mxu0 0
        %2672 = vmatprep.mubr.bf16.mxu0 0
        %2673 = vmatmul.mubr.bf16.gmra.mrb[0].mxu0 %v2532
        %v2674 = vpop.f32.mrb[0].mxu0
        %v2675 = vadd.f32 %v2553, %v2674
        %v2676 = vpop.f32.mrb[0].mxu0
        %v2677 = vadd.f32 %v2557, %v2676
        %v2678 = vpop.f32.mrb[0].mxu0
        %v2679 = vpop.f32.mrb[0].mxu0
        %2680 = vdwg.mxu0
        %v2681 = vmul.f32 %v2675, 0.5
        %v2682 = vmul.f32 %v2677, 0.5
        %v2683 = vmul.f32 %v2675, 0.70710677
        %v2684 = vmul.f32 %v2677, 0.70710677
        %vm2685 = vcmp.ge.f32.partialorder %v2683, 0.0
        %vm2686 = vcmp.ge.f32.partialorder %v2684, 0.0
        %v2687 = vsel %vm2685, 1.0, -1.0
        %v2688 = vsel %vm2686, 1.0, -1.0
        %v2689 = vand.u32 2147483647, %v2683
        %v2690 = vand.u32 2147483647, %v2684
        %v2691 = vmul.f32 %v2689, 0.3275911
        %v2692 = vmul.f32 %v2690, 0.3275911
        %v2693 = vadd.f32 %v2691, 1.0
        %v2694 = vadd.f32 %v2692, 1.0
        %v2695 = vrcp.pop %v2693
        %v2696 = vmul.f32 1.0, %v2695
        %v2697 = vrcp.pop %v2694
        %v2698 = vmul.f32 1.0, %v2697
        %v2699 = vmul.f32 %v2696, 1.0614054
        %v2700 = vmul.f32 %v2698, 1.0614054
        %v2701 = vadd.f32 %v2699, -1.4531521
        %v2702 = vadd.f32 %v2700, -1.4531521
        %v2703 = vmul.f32 %v2701, %v2696
        %v2704 = vmul.f32 %v2702, %v2698
        %v2705 = vadd.f32 %v2703, 1.4214138
        %v2706 = vadd.f32 %v2704, 1.4214138
        %v2707 = vmul.f32 %v2705, %v2696
        %v2708 = vmul.f32 %v2706, %v2698
        %v2709 = vadd.f32 %v2707, -0.28449672
        %v2710 = vadd.f32 %v2708, -0.28449672
        %v2711 = vmul.f32 %v2709, %v2696
        %v2712 = vmul.f32 %v2710, %v2698
        %v2713 = vadd.f32 %v2711, 0.2548296
        %v2714 = vadd.f32 %v2712, 0.2548296
        %v2715 = vmul.f32 %v2713, %v2696
        %v2716 = vmul.f32 %v2714, %v2698
        %v2717 = vsub.f32 0.0, %v2689
        %v2718 = vsub.f32 0.0, %v2690
        %v2719 = vmul.f32 %v2717, %v2689
        %v2720 = vmul.f32 %v2718, %v2690
        %v2721 = vmul.f32 %v2719, 1.442695
        %v2722 = vpow.pop %v2721
        %v2723 = vmul.f32 %v2720, 1.442695
        %v2724 = vpow.pop %v2723
        %v2725 = vmul.f32 %v2715, %v2722
        %v2726 = vmul.f32 %v2716, %v2724
        %v2727 = vsub.f32 1.0, %v2725
        %v2728 = vsub.f32 1.0, %v2726
        %v2729 = vmul.f32 %v2687, %v2727
        %v2730 = vmul.f32 %v2688, %v2728
        %v2731 = vadd.f32 %v2729, 1.0
        %v2732 = vadd.f32 %v2730, 1.0
        %v2733 = vmul.f32 %v2681, %v2731
        %v2734 = vmul.f32 %v2682, %v2732
        %v2735 = vpack.c.bf16 %v2733, %v2733
        %v2736 = vpack.c.bf16 %v2734, %v2734
        %v2737 = vld [vmem:[#allocation11] sm:$0xf]
        %v2738 = vld [vmem:[#allocation11 + $0x4] sm:$0xf]
        %v2739 = vld [vmem:[#allocation11 + $0x8] sm:$0xf]
        %v2740 = vld [vmem:[#allocation11 + $0xc] sm:$0xf]
        %v2741 = vld [vmem:[#allocation11 + $0x10] sm:$0xf]
        %v2742 = vld [vmem:[#allocation11 + $0x14] sm:$0xf]
        %v2743 = vld [vmem:[#allocation11 + $0x18] sm:$0xf]
        %v2744 = vld [vmem:[#allocation11 + $0x1c] sm:$0xf]
        %v2745 = vld [vmem:[#allocation11 + $0x20] sm:$0xf]
        %v2746 = vld [vmem:[#allocation11 + $0x24] sm:$0xf]
        %v2747 = vld [vmem:[#allocation11 + $0x28] sm:$0xf]
        %v2748 = vld [vmem:[#allocation11 + $0x2c] sm:$0xf]
        %v2749 = vld [vmem:[#allocation11 + $0x30] sm:$0xf]
        %v2750 = vld [vmem:[#allocation11 + $0x34] sm:$0xf]
        %v2751 = vld [vmem:[#allocation11 + $0x38] sm:$0xf]
        %v2752 = vld [vmem:[#allocation11 + $0x3c] sm:$0xf]
        %v2753 = vld [vmem:[#allocation11 + $0x40] sm:$0xf]
        %v2754 = vld [vmem:[#allocation11 + $0x44] sm:$0xf]
        %v2755 = vld [vmem:[#allocation11 + $0x48] sm:$0xf]
        %v2756 = vld [vmem:[#allocation11 + $0x4c] sm:$0xf]
        %v2757 = vld [vmem:[#allocation11 + $0x50] sm:$0xf]
        %v2758 = vld [vmem:[#allocation11 + $0x54] sm:$0xf]
        %v2759 = vld [vmem:[#allocation11 + $0x58] sm:$0xf]
        %v2760 = vld [vmem:[#allocation11 + $0x5c] sm:$0xf]
        %v2761 = vld [vmem:[#allocation11 + $0x60] sm:$0xf]
        %v2762 = vld [vmem:[#allocation11 + $0x64] sm:$0xf]
        %v2763 = vld [vmem:[#allocation11 + $0x68] sm:$0xf]
        %v2764 = vld [vmem:[#allocation11 + $0x6c] sm:$0xf]
        %v2765 = vld [vmem:[#allocation11 + $0x70] sm:$0xf]
        %v2766 = vld [vmem:[#allocation11 + $0x74] sm:$0xf]
        %v2767 = vld [vmem:[#allocation11 + $0x78] sm:$0xf]
        %v2768 = vld [vmem:[#allocation11 + $0x7c] sm:$0xf]
        %v2801 = vunpack.c.l.b16 %v2737
        %v2802 = vunpack.c.l.b16 %v2738
        %v2803 = vunpack.c.l.b16 %v2739
        %v2804 = vunpack.c.l.b16 %v2740
        %v2805 = vunpack.c.l.b16 %v2741
        %v2806 = vunpack.c.l.b16 %v2742
        %v2807 = vunpack.c.l.b16 %v2743
        %v2808 = vunpack.c.l.b16 %v2744
        %v2809 = vunpack.c.l.b16 %v2745
        %v2810 = vunpack.c.l.b16 %v2746
        %v2811 = vunpack.c.l.b16 %v2747
        %v2812 = vunpack.c.l.b16 %v2748
        %v2813 = vunpack.c.l.b16 %v2749
        %v2814 = vunpack.c.l.b16 %v2750
        %v2815 = vunpack.c.l.b16 %v2751
        %v2816 = vunpack.c.l.b16 %v2752
        %v2817 = vunpack.c.l.b16 %v2753
        %v2818 = vunpack.c.l.b16 %v2754
        %v2819 = vunpack.c.l.b16 %v2755
        %v2820 = vunpack.c.l.b16 %v2756
        %v2821 = vunpack.c.l.b16 %v2757
        %v2822 = vunpack.c.l.b16 %v2758
        %v2823 = vunpack.c.l.b16 %v2759
        %v2824 = vunpack.c.l.b16 %v2760
        %v2825 = vunpack.c.l.b16 %v2761
        %v2826 = vunpack.c.l.b16 %v2762
        %v2827 = vunpack.c.l.b16 %v2763
        %v2828 = vunpack.c.l.b16 %v2764
        %v2829 = vunpack.c.l.b16 %v2765
        %v2830 = vunpack.c.l.b16 %v2766
        %v2831 = vunpack.c.l.b16 %v2767
        %v2832 = vunpack.c.l.b16 %v2768
        %v2833 = vpack.c.b16 %v2802, %v2801
        %v2834 = vpack.c.b16 %v2804, %v2803
        %v2835 = vpack.c.b16 %v2806, %v2805
        %v2836 = vpack.c.b16 %v2808, %v2807
        %v2837 = vpack.c.b16 %v2810, %v2809
        %v2838 = vpack.c.b16 %v2812, %v2811
        %v2839 = vpack.c.b16 %v2814, %v2813
        %v2840 = vpack.c.b16 %v2816, %v2815
        %v2841 = vpack.c.b16 %v2818, %v2817
        %v2842 = vpack.c.b16 %v2820, %v2819
        %v2843 = vpack.c.b16 %v2822, %v2821
        %v2844 = vpack.c.b16 %v2824, %v2823
        %v2845 = vpack.c.b16 %v2826, %v2825
        %v2846 = vpack.c.b16 %v2828, %v2827
        %v2847 = vpack.c.b16 %v2830, %v2829
        %v2848 = vpack.c.b16 %v2832, %v2831
        %2865 = vmatprep.subr.bf16.mxu0 0
        %2866 = vmatpush1.bf16.msra.mxu0 %v2833
        %2867 = vmatprep.subr.bf16.mxu0 0
        %2868 = vmatpush1.bf16.msra.mxu0 %v2834
        %2869 = vmatprep.subr.bf16.mxu0 0
        %2870 = vmatpush1.bf16.msra.mxu0 %v2835
        %2871 = vmatprep.subr.bf16.mxu0 0
        %2872 = vmatpush1.bf16.msra.mxu0 %v2836
        %2873 = vmatprep.subr.bf16.mxu0 0
        %2874 = vmatpush1.bf16.msra.mxu0 %v2837
        %2875 = vmatprep.subr.bf16.mxu0 0
        %2876 = vmatpush1.bf16.msra.mxu0 %v2838
        %2877 = vmatprep.subr.bf16.mxu0 0
        %2878 = vmatpush1.bf16.msra.mxu0 %v2839
        %2879 = vmatprep.subr.bf16.mxu0 0
        %2880 = vmatpush1.bf16.msra.mxu0 %v2840
        %2881 = vmatprep.subr.bf16.mxu0 0
        %2882 = vmatpush1.bf16.msra.mxu0 %v2841
        %2883 = vmatprep.subr.bf16.mxu0 0
        %2884 = vmatpush1.bf16.msra.mxu0 %v2842
        %2885 = vmatprep.subr.bf16.mxu0 0
        %2886 = vmatpush1.bf16.msra.mxu0 %v2843
        %2887 = vmatprep.subr.bf16.mxu0 0
        %2888 = vmatpush1.bf16.msra.mxu0 %v2844
        %2889 = vmatprep.subr.bf16.mxu0 0
        %2890 = vmatpush1.bf16.msra.mxu0 %v2845
        %2891 = vmatprep.subr.bf16.mxu0 0
        %2892 = vmatpush1.bf16.msra.mxu0 %v2846
        %2893 = vmatprep.subr.bf16.mxu0 0
        %2894 = vmatpush1.bf16.msra.mxu0 %v2847
        %2895 = vmatprep.subr.bf16.mxu0 0
        %2896 = vmatpush1.bf16.msra.mxu0 %v2848
        %2897 = vmatprep.mubr.bf16.mxu0 %v2736
        %2898 = vmatmul.mubr.bf16.gmra.mrb[0].mxu0 %v2735
        %v2899 = vpop.f32.mrb[0].mxu0
        %v2900 = vadd.f32 0.0, %v2899
        %v2901 = vpop.f32.mrb[0].mxu0
        %v2902 = vpop.f32.mrb[0].mxu0
        %v2903 = vpop.f32.mrb[0].mxu0
        %2904 = vdwg.mxu0
        %v2905 = vadd.f32 %v2510, %v2900
        %v2906 = vlaneseq
        %v2907 = vshrl.u32 %v2906, 7
        %v2908 = vsub.s32 0, %v2907
        %v2909 = vrot.slane %v697, %v2908
        %v2910 = vadd.f32 %v2905, %v2909
        %s2911 = scalar_lea.vmem [#allocation13], 24
        %v2912 = vld [vmem:[%s2911] ss:$4 sm:$0x3f]
        %s2913 = scalar_lea.vmem %s2911, 1 [#allocation13]
        %v2914 = vld [vmem:[%s2913] ss:$4 sm:$0x7]
        %v2915 = vld [vmem:[%s2911 + $0xd] sm:$0x1]
        %v2916 = vld [vmem:[%s2911 + $0x11] sm:$0x1]
        %v2917 = vld [vmem:[%s2911 + $0x15] sm:$0x1]
        %v2918 = vld [vmem:[%s2911 + $0x2] sm:$0x1]
        %v2919 = vld [vmem:[%s2911 + $0x6] sm:$0x1]
        %v2920 = vld [vmem:[%s2911 + $0xa] sm:$0x1]
        %v2921 = vld [vmem:[%s2911 + $0xe] sm:$0x1]
        %v2922 = vld [vmem:[%s2911 + $0x12] sm:$0x1]
        %v2923 = vld [vmem:[%s2911 + $0x16] sm:$0x1]
        %s2924 = scalar_lea.vmem %s2911, 3 [#allocation13]
        %v2925 = vld [vmem:[%s2924] ss:$4 sm:$0x3]
        %v2926 = vld [vmem:[%s2911 + $0xb] sm:$0x1]
        %s2927 = scalar_lea.vmem %s14, 8
        %v2928 = vld [vmem:[%s2927] sm:$0xff]
        %2929 = vadd.xlane.f32.xlu0 %v2910
        %v2930 = vpop.xlane.xlu0 %2929
        %v2931 = vmul.f32 %v2930, %v701
        %v2932 = vsub.f32 %v2910, %v2931
        %v2933 = vmul.f32 %v2932, %v2932
        %2934 = vadd.xlane.f32.xlu0 %v2933
        %v2935 = vpop.xlane.xlu0 %2934
        %v2936 = vmul.f32 %v2935, %v701
        %v2937 = vadd.f32 %v2936, 1e-05
        %v2938 = vrsqrt.pop %v2937
        %v2939 = vmul.f32 %v2932, %v2938
        %v2940 = vlaneseq
        %v2941 = vshrl.u32 %v2940, 7
        %v2942 = vsub.s32 0, %v2941
        %v2943 = vrot.slane %v2918, %v2942
        %v2944 = vmul.f32 %v2939, %v2943
        %v2945 = vlaneseq
        %v2946 = vshrl.u32 %v2945, 7
        %v2947 = vsub.s32 0, %v2946
        %v2948 = vrot.slane %v2919, %v2947
        %v2949 = vadd.f32 %v2944, %v2948
        %v2950 = vpack.c.bf16 %v2949, %v2949
        %s2951 = scalar_lea.vmem [#allocation5], 192
        %v2952 = vld [vmem:[%s2951] sm:$0xff]
        %v2953 = vld [vmem:[%s2951 + $0x8] sm:$0xf]
        %v2954 = vld [vmem:[%s2951 + $0xc] sm:$0xff]
        %v2955 = vld [vmem:[%s2951 + $0x14] sm:$0xf]
        %v2956 = vld [vmem:[%s2951 + $0x18] sm:$0xff]
        %v2957 = vld [vmem:[%s2951 + $0x20] sm:$0xf]
        %v2958 = vld [vmem:[%s2951 + $0x24] sm:$0xff]
        %v2959 = vld [vmem:[%s2951 + $0x2c] sm:$0xf]
        %v2960 = vld [vmem:[%s2951 + $0x30] sm:$0xff]
        %v2961 = vld [vmem:[%s2951 + $0x38] sm:$0xf]
        %v2962 = vld [vmem:[%s2951 + $0x3c] sm:$0xff]
        %v2963 = vld [vmem:[%s2951 + $0x44] sm:$0xf]
        %v2964 = vld [vmem:[%s2951 + $0x48] sm:$0xff]
        %v2965 = vld [vmem:[%s2951 + $0x50] sm:$0xf]
        %v2966 = vld [vmem:[%s2951 + $0x54] sm:$0xff]
        %v2967 = vld [vmem:[%s2951 + $0x5c] sm:$0xf]
        %v2968 = vld [vmem:[%s2951 + $0x60] sm:$0xff]
        %v2969 = vld [vmem:[%s2951 + $0x68] sm:$0xf]
        %v2970 = vld [vmem:[%s2951 + $0x6c] sm:$0xff]
        %v2971 = vld [vmem:[%s2951 + $0x74] sm:$0xf]
        %v2972 = vld [vmem:[%s2951 + $0x78] sm:$0xff]
        %v2973 = vld [vmem:[%s2951 + $0x80] sm:$0xf]
        %v2974 = vld [vmem:[%s2951 + $0x84] sm:$0xff]
        %v2975 = vld [vmem:[%s2951 + $0x8c] sm:$0xf]
        %v2976 = vld [vmem:[%s2951 + $0x90] sm:$0xff]
        %v2977 = vld [vmem:[%s2951 + $0x98] sm:$0xf]
        %v2978 = vld [vmem:[%s2951 + $0x9c] sm:$0xff]
        %v2979 = vld [vmem:[%s2951 + $0xa4] sm:$0xf]
        %v2980 = vld [vmem:[%s2951 + $0xa8] sm:$0xff]
        %v2981 = vld [vmem:[%s2951 + $0xb0] sm:$0xf]
        %v2982 = vld [vmem:[%s2951 + $0xb4] sm:$0xff]
        %v2983 = vld [vmem:[%s2951 + $0xbc] sm:$0xf]
        %v2985 = vlaneseq
        %v2986 = vshrl.u32 %v2985, 7
        %v2987 = vsub.s32 0, %v2986
        %v2988 = vrot.slane %v2914, %v2987
        %v2989 = vlaneseq
        %v2990 = vshrl.u32 %v2989, 7
        %v2991 = vsub.s32 1, %v2990
        %v2992 = vrot.slane %v2914, %v2991
        %v2993 = vlaneseq
        %v2994 = vshrl.u32 %v2993, 7
        %v2995 = vsub.s32 2, %v2994
        %v2996 = vrot.slane %v2914, %v2995
        %v3032 = vunpack.c.l.b16 %v2952
        %v3033 = vunpack.c.h.b16 %v2952
        %v3034 = vunpack.c.l.b16 %v2953
        %v3035 = vunpack.c.l.b16 %v2954
        %v3036 = vunpack.c.h.b16 %v2954
        %v3037 = vunpack.c.l.b16 %v2955
        %v3038 = vunpack.c.l.b16 %v2956
        %v3039 = vunpack.c.h.b16 %v2956
        %v3040 = vunpack.c.l.b16 %v2957
        %v3041 = vunpack.c.l.b16 %v2958
        %v3042 = vunpack.c.h.b16 %v2958
        %v3043 = vunpack.c.l.b16 %v2959
        %v3044 = vunpack.c.l.b16 %v2960
        %v3045 = vunpack.c.h.b16 %v2960
        %v3046 = vunpack.c.l.b16 %v2961
        %v3047 = vunpack.c.l.b16 %v2962
        %v3048 = vunpack.c.h.b16 %v2962
        %v3049 = vunpack.c.l.b16 %v2963
        %v3050 = vunpack.c.l.b16 %v2964
        %v3051 = vunpack.c.h.b16 %v2964
        %v3052 = vunpack.c.l.b16 %v2965
        %v3053 = vunpack.c.l.b16 %v2966
        %v3054 = vunpack.c.h.b16 %v2966
        %v3055 = vunpack.c.l.b16 %v2967
        %v3056 = vunpack.c.l.b16 %v2968
        %v3057 = vunpack.c.h.b16 %v2968
        %v3058 = vunpack.c.l.b16 %v2969
        %v3059 = vunpack.c.l.b16 %v2970
        %v3060 = vunpack.c.h.b16 %v2970
        %v3061 = vunpack.c.l.b16 %v2971
        %v3062 = vunpack.c.l.b16 %v2972
        %v3063 = vunpack.c.h.b16 %v2972
        %v3064 = vunpack.c.l.b16 %v2973
        %v3065 = vunpack.c.l.b16 %v2974
        %v3066 = vunpack.c.h.b16 %v2974
        %v3067 = vunpack.c.l.b16 %v2975
        %v3068 = vunpack.c.l.b16 %v2976
        %v3069 = vunpack.c.h.b16 %v2976
        %v3070 = vunpack.c.l.b16 %v2977
        %v3071 = vunpack.c.l.b16 %v2978
        %v3072 = vunpack.c.h.b16 %v2978
        %v3073 = vunpack.c.l.b16 %v2979
        %v3074 = vunpack.c.l.b16 %v2980
        %v3075 = vunpack.c.h.b16 %v2980
        %v3076 = vunpack.c.l.b16 %v2981
        %v3077 = vunpack.c.l.b16 %v2982
        %v3078 = vunpack.c.h.b16 %v2982
        %v3079 = vunpack.c.l.b16 %v2983
        %v3080 = vpack.c.b16 %v3035, %v3032
        %v3081 = vpack.c.b16 %v3036, %v3033
        %v3082 = vpack.c.b16 %v3037, %v3034
        %v3083 = vpack.c.b16 %v3041, %v3038
        %v3084 = vpack.c.b16 %v3042, %v3039
        %v3085 = vpack.c.b16 %v3043, %v3040
        %v3086 = vpack.c.b16 %v3047, %v3044
        %v3087 = vpack.c.b16 %v3048, %v3045
        %v3088 = vpack.c.b16 %v3049, %v3046
        %v3089 = vpack.c.b16 %v3053, %v3050
        %v3090 = vpack.c.b16 %v3054, %v3051
        %v3091 = vpack.c.b16 %v3055, %v3052
        %v3092 = vpack.c.b16 %v3059, %v3056
        %v3093 = vpack.c.b16 %v3060, %v3057
        %v3094 = vpack.c.b16 %v3061, %v3058
        %v3095 = vpack.c.b16 %v3065, %v3062
        %v3096 = vpack.c.b16 %v3066, %v3063
        %v3097 = vpack.c.b16 %v3067, %v3064
        %v3098 = vpack.c.b16 %v3071, %v3068
        %v3099 = vpack.c.b16 %v3072, %v3069
        %v3100 = vpack.c.b16 %v3073, %v3070
        %v3101 = vpack.c.b16 %v3077, %v3074
        %v3102 = vpack.c.b16 %v3078, %v3075
        %v3103 = vpack.c.b16 %v3079, %v3076
        %3128 = vmatprep.subr.bf16.mxu0 %v3081
        %3129 = vmatpush1.bf16.msra.mxu0 %v3080
        %3130 = vmatprep.subr.bf16.mxu0 %v3084
        %3131 = vmatpush1.bf16.msra.mxu0 %v3083
        %3132 = vmatprep.subr.bf16.mxu0 %v3087
        %3133 = vmatpush1.bf16.msra.mxu0 %v3086
        %3134 = vmatprep.subr.bf16.mxu0 %v3090
        %3135 = vmatpush1.bf16.msra.mxu0 %v3089
        %3136 = vmatprep.subr.bf16.mxu0 %v3093
        %3137 = vmatpush1.bf16.msra.mxu0 %v3092
        %3138 = vmatprep.subr.bf16.mxu0 %v3096
        %3139 = vmatpush1.bf16.msra.mxu0 %v3095
        %3140 = vmatprep.subr.bf16.mxu0 %v3099
        %3141 = vmatpush1.bf16.msra.mxu0 %v3098
        %3142 = vmatprep.subr.bf16.mxu0 %v3102
        %3143 = vmatpush1.bf16.msra.mxu0 %v3101
        %3144 = vmatprep.subr.bf16.mxu0 0
        %3145 = vmatpush1.bf16.msra.mxu0 0
        %3146 = vmatprep.subr.bf16.mxu0 0
        %3147 = vmatpush1.bf16.msra.mxu0 0
        %3148 = vmatprep.subr.bf16.mxu0 0
        %3149 = vmatpush1.bf16.msra.mxu0 0
        %3150 = vmatprep.subr.bf16.mxu0 0
        %3151 = vmatpush1.bf16.msra.mxu0 0
        %3152 = vmatprep.subr.bf16.mxu0 0
        %3153 = vmatpush1.bf16.msra.mxu0 0
        %3154 = vmatprep.subr.bf16.mxu0 0
        %3155 = vmatpush1.bf16.msra.mxu0 0
        %3156 = vmatprep.subr.bf16.mxu0 0
        %3157 = vmatpush1.bf16.msra.mxu0 0
        %3158 = vmatprep.subr.bf16.mxu0 0
        %3159 = vmatpush1.bf16.msra.mxu0 0
        %3160 = vmatprep.mubr.bf16.mxu0 0
        %3161 = vmatmul.mubr.bf16.gmra.mrb[0].mxu0 %v2950
        %v3162 = vpop.f32.mrb[0].mxu0
        %v3163 = vadd.f32 %v2988, %v3162
        %v3164 = vpop.f32.mrb[0].mxu0
        %v3165 = vadd.f32 %v2992, %v3164
        %v3166 = vpop.f32.mrb[0].mxu0
        %v3167 = vpop.f32.mrb[0].mxu0
        %3168 = vdwg.mxu0
        %3169 = vmatprep.subr.bf16.mxu0 0
        %3170 = vmatpush1.bf16.msra.mxu0 %v3082
        %3171 = vmatprep.subr.bf16.mxu0 0
        %3172 = vmatpush1.bf16.msra.mxu0 %v3085
        %3173 = vmatprep.subr.bf16.mxu0 0
        %3174 = vmatpush1.bf16.msra.mxu0 %v3088
        %3175 = vmatprep.subr.bf16.mxu0 0
        %3176 = vmatpush1.bf16.msra.mxu0 %v3091
        %3177 = vmatprep.subr.bf16.mxu0 0
        %3178 = vmatpush1.bf16.msra.mxu0 %v3094
        %3179 = vmatprep.subr.bf16.mxu0 0
        %3180 = vmatpush1.bf16.msra.mxu0 %v3097
        %3181 = vmatprep.subr.bf16.mxu0 0
        %3182 = vmatpush1.bf16.msra.mxu0 %v3100
        %3183 = vmatprep.subr.bf16.mxu0 0
        %3184 = vmatpush1.bf16.msra.mxu0 %v3103
        %3185 = vmatprep.subr.bf16.mxu0 0
        %3186 = vmatpush1.bf16.msra.mxu0 0
        %3187 = vmatprep.subr.bf16.mxu0 0
        %3188 = vmatpush1.bf16.msra.mxu0 0
        %3189 = vmatprep.subr.bf16.mxu0 0
        %3190 = vmatpush1.bf16.msra.mxu0 0
        %3191 = vmatprep.subr.bf16.mxu0 0
        %3192 = vmatpush1.bf16.msra.mxu0 0
        %3193 = vmatprep.subr.bf16.mxu0 0
        %3194 = vmatpush1.bf16.msra.mxu0 0
        %3195 = vmatprep.subr.bf16.mxu0 0
        %3196 = vmatpush1.bf16.msra.mxu0 0
        %3197 = vmatprep.subr.bf16.mxu0 0
        %3198 = vmatpush1.bf16.msra.mxu0 0
        %3199 = vmatprep.subr.bf16.mxu0 0
        %3200 = vmatpush1.bf16.msra.mxu0 0
        %3201 = vmatprep.mubr.bf16.mxu0 0
        %3202 = vmatmul.mubr.bf16.gmra.mrb[0].mxu0 %v2950
        %v3203 = vpop.f32.mrb[0].mxu0
        %v3204 = vadd.f32 %v2996, %v3203
        %v3205 = vpop.f32.mrb[0].mxu0
        %v3206 = vpop.f32.mrb[0].mxu0
        %v3207 = vpop.f32.mrb[0].mxu0
        %3208 = vdwg.mxu0
        %v3209 = vmul.f32 %v3165, %v979
        %v3210 = vmul.f32 %v3165, %v980
        %v3211 = vmul.f32 %v3165, %v981
        %v3212 = vmul.f32 %v3165, %v982
        %v3213 = vmul.f32 %v3165, %v983
        %v3214 = vmul.f32 %v3165, %v984
        %v3215 = vmul.f32 %v3165, %v985
        %v3216 = vmul.f32 %v3165, %v986
        %v3217 = vmul.f32 %v3204, %v979
        %v3218 = vmul.f32 %v3204, %v980
        %v3219 = vmul.f32 %v3204, %v981
        %v3220 = vmul.f32 %v3204, %v982
        %v3221 = vmul.f32 %v3204, %v983
        %v3222 = vmul.f32 %v3204, %v984
        %v3223 = vmul.f32 %v3204, %v985
        %v3224 = vmul.f32 %v3204, %v986
        %v3225 = vpack.c.bf16 %v3218, %v3217
        %v3226 = vpack.c.bf16 %v3220, %v3219
        %v3227 = vpack.c.bf16 %v3222, %v3221
        %v3228 = vpack.c.bf16 %v3224, %v3223
        %3229 = vmatprep.subr.mxu0 0.0
        %3230 = vmatpush1.xpose.msra.mxu0 %v3209
        %3231 = vmatprep.subr.mxu0 0.0
        %3232 = vmatpush1.xpose.msra.mxu0 %v3210
        %3233 = vmatprep.subr.mxu0 0.0
        %3234 = vmatpush1.xpose.msra.mxu0 %v3211
        %3235 = vmatprep.subr.mxu0 0.0
        %3236 = vmatpush1.xpose.msra.mxu0 %v3212
        %3237 = vmatprep.subr.mxu0 0.0
        %3238 = vmatpush1.xpose.msra.mxu0 %v3213
        %3239 = vmatprep.subr.mxu0 0.0
        %3240 = vmatpush1.xpose.msra.mxu0 %v3214
        %3241 = vmatprep.subr.mxu0 0.0
        %3242 = vmatpush1.xpose.msra.mxu0 %v3215
        %3243 = vmatprep.subr.mxu0 0.0
        %3244 = vmatpush1.xpose.msra.mxu0 %v3216
        %3245 = vmatprep.subr.mxu0 0.0
        %3246 = vmatpush1.xpose.msra.mxu0 0.0
        %3247 = vmatprep.subr.mxu0 0.0
        %3248 = vmatpush1.xpose.msra.mxu0 0.0
        %3249 = vmatprep.subr.mxu0 0.0
        %3250 = vmatpush1.xpose.msra.mxu0 0.0
        %3251 = vmatprep.subr.mxu0 0.0
        %3252 = vmatpush1.xpose.msra.mxu0 0.0
        %3253 = vmatprep.subr.mxu0 0.0
        %3254 = vmatpush1.xpose.msra.mxu0 0.0
        %3255 = vmatprep.subr.mxu0 0.0
        %3256 = vmatpush1.xpose.msra.mxu0 0.0
        %3257 = vmatprep.subr.mxu0 0.0
        %3258 = vmatpush1.xpose.msra.mxu0 0.0
        %3259 = vmatprep.subr.mxu0 0.0
        %3260 = vmatpush1.xpose.msra.mxu0 0.0
        %3261 = vmatprep.subr.mxu0 0.0
        %3262 = vmatpush1.xpose.msra.mxu0 0.0
        %3263 = vmatprep.subr.mxu0 0.0
        %3264 = vmatpush1.xpose.msra.mxu0 0.0
        %3265 = vmatprep.subr.mxu0 0.0
        %3266 = vmatpush1.xpose.msra.mxu0 0.0
        %3267 = vmatprep.subr.mxu0 0.0
        %3268 = vmatpush1.xpose.msra.mxu0 0.0
        %3269 = vmatprep.subr.mxu0 0.0
        %3270 = vmatpush1.xpose.msra.mxu0 0.0
        %3271 = vmatprep.subr.mxu0 0.0
        %3272 = vmatpush1.xpose.msra.mxu0 0.0
        %3273 = vmatprep.subr.mxu0 0.0
        %3274 = vmatpush1.xpose.msra.mxu0 0.0
        %3275 = vmatprep.subr.mxu0 0.0
        %3276 = vmatpush1.xpose.msra.mxu0 0.0
        %3277 = vmatprep.subr.mxu0 0.0
        %3278 = vmatpush1.xpose.msra.mxu0 0.0
        %3279 = vmatprep.subr.mxu0 0.0
        %3280 = vmatpush1.xpose.msra.mxu0 0.0
        %3281 = vmatprep.subr.mxu0 0.0
        %3282 = vmatpush1.xpose.msra.mxu0 0.0
        %3283 = vmatprep.subr.mxu0 0.0
        %3284 = vmatpush1.xpose.msra.mxu0 0.0
        %3285 = vmatprep.subr.mxu0 0.0
        %3286 = vmatpush1.xpose.msra.mxu0 0.0
        %3287 = vmatprep.subr.mxu0 0.0
        %3288 = vmatpush1.xpose.msra.mxu0 0.0
        %3289 = vmatprep.subr.mxu0 0.0
        %3290 = vmatpush1.xpose.msra.mxu0 0.0
        %3291 = vmatprep.subr.mxu0 0.0
        %3292 = vmatpush1.xpose.msra.mxu0 0.0
        %3293 = vmatprep.mubr.f32.mxu0 0.0
        %3294 = vmatmul.mubr.f32.gmra.mrb[0].mxu0 %v3163
        %v3295 = vpop.f32.mrb[0].mxu0
        %v3296 = vadd.f32 0.0, %v3295
        %v3297 = vpop.f32.mrb[0].mxu0
        %3298 = vdwg.mxu0
        %v3299 = vmul.f32 %v3296, 0.25
        %v3300 = vsel %vm1078, %v3299, -inf
        %3301 = vmax.xlane.f32.xlu0 %v3300
        %v3302 = vpop.xlane.xlu0 %3301
        %v3303 = vsub.f32 %v3299, %v3302
        %v3304 = vmul.f32 %v3303, 1.442695
        %v3305 = vpow.pop %v3304
        %v3307 = vsel %vm1078, %v3305, 0
        %3309 = vmatprep.subr.mxu0 0.0
        %3310 = vmatpush1.msra.mxu0 %v979
        %3311 = vmatprep.subr.mxu0 0.0
        %3312 = vmatpush1.msra.mxu0 %v980
        %3313 = vmatprep.subr.mxu0 0.0
        %3314 = vmatpush1.msra.mxu0 %v981
        %3315 = vmatprep.subr.mxu0 0.0
        %3316 = vmatpush1.msra.mxu0 %v982
        %3317 = vmatprep.subr.mxu0 0.0
        %3318 = vmatpush1.msra.mxu0 %v983
        %3319 = vmatprep.subr.mxu0 0.0
        %3320 = vmatpush1.msra.mxu0 %v984
        %3321 = vmatprep.subr.mxu0 0.0
        %3322 = vmatpush1.msra.mxu0 %v985
        %3323 = vmatprep.subr.mxu0 0.0
        %3324 = vmatpush1.msra.mxu0 %v986
        %3325 = vmatprep.subr.mxu0 0.0
        %3326 = vmatpush1.msra.mxu0 0.0
        %3327 = vmatprep.subr.mxu0 0.0
        %3328 = vmatpush1.msra.mxu0 0.0
        %3329 = vmatprep.subr.mxu0 0.0
        %3330 = vmatpush1.msra.mxu0 0.0
        %3331 = vmatprep.subr.mxu0 0.0
        %3332 = vmatpush1.msra.mxu0 0.0
        %3333 = vmatprep.subr.mxu0 0.0
        %3334 = vmatpush1.msra.mxu0 0.0
        %3335 = vmatprep.subr.mxu0 0.0
        %3336 = vmatpush1.msra.mxu0 0.0
        %3337 = vmatprep.subr.mxu0 0.0
        %3338 = vmatpush1.msra.mxu0 0.0
        %3339 = vmatprep.subr.mxu0 0.0
        %3340 = vmatpush1.msra.mxu0 0.0
        %3341 = vmatprep.subr.mxu0 0.0
        %3342 = vmatpush1.msra.mxu0 0.0
        %3343 = vmatprep.subr.mxu0 0.0
        %3344 = vmatpush1.msra.mxu0 0.0
        %3345 = vmatprep.subr.mxu0 0.0
        %3346 = vmatpush1.msra.mxu0 0.0
        %3347 = vmatprep.subr.mxu0 0.0
        %3348 = vmatpush1.msra.mxu0 0.0
        %3349 = vmatprep.subr.mxu0 0.0
        %3350 = vmatpush1.msra.mxu0 0.0
        %3351 = vmatprep.subr.mxu0 0.0
        %3352 = vmatpush1.msra.mxu0 0.0
        %3353 = vmatprep.subr.mxu0 0.0
        %3354 = vmatpush1.msra.mxu0 0.0
        %3355 = vmatprep.subr.mxu0 0.0
        %3356 = vmatpush1.msra.mxu0 0.0
        %3357 = vmatprep.subr.mxu0 0.0
        %3358 = vmatpush1.msra.mxu0 0.0
        %3359 = vmatprep.subr.mxu0 0.0
        %3360 = vmatpush1.msra.mxu0 0.0
        %3361 = vmatprep.subr.mxu0 0.0
        %3362 = vmatpush1.msra.mxu0 0.0
        %3363 = vmatprep.subr.mxu0 0.0
        %3364 = vmatpush1.msra.mxu0 0.0
        %3365 = vmatprep.subr.mxu0 0.0
        %3366 = vmatpush1.msra.mxu0 0.0
        %3367 = vmatprep.subr.mxu0 0.0
        %3368 = vmatpush1.msra.mxu0 0.0
        %3369 = vmatprep.subr.mxu0 0.0
        %3370 = vmatpush1.msra.mxu0 0.0
        %3371 = vmatprep.subr.mxu0 0.0
        %3372 = vmatpush1.msra.mxu0 0.0
        %3373 = vmatprep.mubr.f32.mxu0 0.0
        %3374 = vmatmul.mubr.f32.gmra.mrb[0].mxu0 %v3307
        %v3375 = vpop.f32.mrb[0].mxu0
        %v3376 = vadd.f32 0.0, %v3375
        %v3377 = vpop.f32.mrb[0].mxu0
        %3378 = vdwg.mxu0
        %v3379 = vpack.c.bf16 %v3305, %v3305
        %v3381 = vsel %vm1078, %v3379, 0
        %3383 = vmatprep.subr.bf16.mxu0 0
        %3384 = vmatpush1.bf16.msra.mxu0 %v3225
        %3385 = vmatprep.subr.bf16.mxu0 0
        %3386 = vmatpush1.bf16.msra.mxu0 %v3226
        %3387 = vmatprep.subr.bf16.mxu0 0
        %3388 = vmatpush1.bf16.msra.mxu0 %v3227
        %3389 = vmatprep.subr.bf16.mxu0 0
        %3390 = vmatpush1.bf16.msra.mxu0 %v3228
        %3391 = vmatprep.subr.bf16.mxu0 0
        %3392 = vmatpush1.bf16.msra.mxu0 0
        %3393 = vmatprep.subr.bf16.mxu0 0
        %3394 = vmatpush1.bf16.msra.mxu0 0
        %3395 = vmatprep.subr.bf16.mxu0 0
        %3396 = vmatpush1.bf16.msra.mxu0 0
        %3397 = vmatprep.subr.bf16.mxu0 0
        %3398 = vmatpush1.bf16.msra.mxu0 0
        %3399 = vmatprep.subr.bf16.mxu0 0
        %3400 = vmatpush1.bf16.msra.mxu0 0
        %3401 = vmatprep.subr.bf16.mxu0 0
        %3402 = vmatpush1.bf16.msra.mxu0 0
        %3403 = vmatprep.subr.bf16.mxu0 0
        %3404 = vmatpush1.bf16.msra.mxu0 0
        %3405 = vmatprep.subr.bf16.mxu0 0
        %3406 = vmatpush1.bf16.msra.mxu0 0
        %3407 = vmatprep.subr.bf16.mxu0 0
        %3408 = vmatpush1.bf16.msra.mxu0 0
        %3409 = vmatprep.subr.bf16.mxu0 0
        %3410 = vmatpush1.bf16.msra.mxu0 0
        %3411 = vmatprep.subr.bf16.mxu0 0
        %3412 = vmatpush1.bf16.msra.mxu0 0
        %3413 = vmatprep.subr.bf16.mxu0 0
        %3414 = vmatpush1.bf16.msra.mxu0 0
        %3415 = vmatprep.mubr.bf16.mxu0 0
        %3416 = vmatmul.mubr.bf16.gmra.mrb[0].mxu0 %v3381
        %v3417 = vpop.f32.mrb[0].mxu0
        %v3418 = vadd.f32 0.0, %v3417
        %v3419 = vpop.f32.mrb[0].mxu0
        %v3420 = vpop.f32.mrb[0].mxu0
        %v3421 = vpop.f32.mrb[0].mxu0
        %3422 = vdwg.mxu0
        %v3423 = vrcp.pop %v3376
        %v3424 = vmul.f32 %v3418, %v3423
        %v3425 = vpack.c.bf16 %v3424, %v3424
        %s3426 = scalar_lea.vmem [#allocation8], 192
        %v3427 = vld [vmem:[%s3426] sm:$0xf]
        %v3428 = vld [vmem:[%s3426 + $0x4] sm:$0xf]
        %v3429 = vld [vmem:[%s3426 + $0x8] sm:$0xf]
        %v3430 = vld [vmem:[%s3426 + $0xc] sm:$0xf]
        %v3431 = vld [vmem:[%s3426 + $0x10] sm:$0xf]
        %v3432 = vld [vmem:[%s3426 + $0x14] sm:$0xf]
        %v3433 = vld [vmem:[%s3426 + $0x18] sm:$0xf]
        %v3434 = vld [vmem:[%s3426 + $0x1c] sm:$0xf]
        %v3435 = vld [vmem:[%s3426 + $0x20] sm:$0xf]
        %v3436 = vld [vmem:[%s3426 + $0x24] sm:$0xf]
        %v3437 = vld [vmem:[%s3426 + $0x28] sm:$0xf]
        %v3438 = vld [vmem:[%s3426 + $0x2c] sm:$0xf]
        %v3439 = vld [vmem:[%s3426 + $0x30] sm:$0xf]
        %v3440 = vld [vmem:[%s3426 + $0x34] sm:$0xf]
        %v3441 = vld [vmem:[%s3426 + $0x38] sm:$0xf]
        %v3442 = vld [vmem:[%s3426 + $0x3c] sm:$0xf]
        %v3459 = vunpack.c.l.b16 %v3427
        %v3460 = vunpack.c.l.b16 %v3428
        %v3461 = vunpack.c.l.b16 %v3429
        %v3462 = vunpack.c.l.b16 %v3430
        %v3463 = vunpack.c.l.b16 %v3431
        %v3464 = vunpack.c.l.b16 %v3432
        %v3465 = vunpack.c.l.b16 %v3433
        %v3466 = vunpack.c.l.b16 %v3434
        %v3467 = vunpack.c.l.b16 %v3435
        %v3468 = vunpack.c.l.b16 %v3436
        %v3469 = vunpack.c.l.b16 %v3437
        %v3470 = vunpack.c.l.b16 %v3438
        %v3471 = vunpack.c.l.b16 %v3439
        %v3472 = vunpack.c.l.b16 %v3440
        %v3473 = vunpack.c.l.b16 %v3441
        %v3474 = vunpack.c.l.b16 %v3442
        %v3475 = vpack.c.b16 %v3460, %v3459
        %v3476 = vpack.c.b16 %v3462, %v3461
        %v3477 = vpack.c.b16 %v3464, %v3463
        %v3478 = vpack.c.b16 %v3466, %v3465
        %v3479 = vpack.c.b16 %v3468, %v3467
        %v3480 = vpack.c.b16 %v3470, %v3469
        %v3481 = vpack.c.b16 %v3472, %v3471
        %v3482 = vpack.c.b16 %v3474, %v3473
        %3491 = vmatprep.subr.bf16.mxu0 0
        %3492 = vmatpush1.bf16.msra.mxu0 %v3475
        %3493 = vmatprep.subr.bf16.mxu0 0
        %3494 = vmatpush1.bf16.msra.mxu0 %v3476
        %3495 = vmatprep.subr.bf16.mxu0 0
        %3496 = vmatpush1.bf16.msra.mxu0 %v3477
        %3497 = vmatprep.subr.bf16.mxu0 0
        %3498 = vmatpush1.bf16.msra.mxu0 %v3478
        %3499 = vmatprep.subr.bf16.mxu0 0
        %3500 = vmatpush1.bf16.msra.mxu0 %v3479
        %3501 = vmatprep.subr.bf16.mxu0 0
        %3502 = vmatpush1.bf16.msra.mxu0 %v3480
        %3503 = vmatprep.subr.bf16.mxu0 0
        %3504 = vmatpush1.bf16.msra.mxu0 %v3481
        %3505 = vmatprep.subr.bf16.mxu0 0
        %3506 = vmatpush1.bf16.msra.mxu0 %v3482
        %3507 = vmatprep.subr.bf16.mxu0 0
        %3508 = vmatpush1.bf16.msra.mxu0 0
        %3509 = vmatprep.subr.bf16.mxu0 0
        %3510 = vmatpush1.bf16.msra.mxu0 0
        %3511 = vmatprep.subr.bf16.mxu0 0
        %3512 = vmatpush1.bf16.msra.mxu0 0
        %3513 = vmatprep.subr.bf16.mxu0 0
        %3514 = vmatpush1.bf16.msra.mxu0 0
        %3515 = vmatprep.subr.bf16.mxu0 0
        %3516 = vmatpush1.bf16.msra.mxu0 0
        %3517 = vmatprep.subr.bf16.mxu0 0
        %3518 = vmatpush1.bf16.msra.mxu0 0
        %3519 = vmatprep.subr.bf16.mxu0 0
        %3520 = vmatpush1.bf16.msra.mxu0 0
        %3521 = vmatprep.subr.bf16.mxu0 0
        %3522 = vmatpush1.bf16.msra.mxu0 0
        %3523 = vmatprep.mubr.bf16.mxu0 0
        %3524 = vmatmul.mubr.bf16.gmra.mrb[0].mxu0 %v3425
        %v3525 = vpop.f32.mrb[0].mxu0
        %v3526 = vadd.f32 0.0, %v3525
        %v3527 = vpop.f32.mrb[0].mxu0
        %v3528 = vpop.f32.mrb[0].mxu0
        %v3529 = vpop.f32.mrb[0].mxu0
        %3530 = vdwg.mxu0
        %v3531 = vadd.f32 %v2910, %v3526
        %v3532 = vlaneseq
        %v3533 = vshrl.u32 %v3532, 7
        %v3534 = vsub.s32 0, %v3533
        %v3535 = vrot.slane %v2915, %v3534
        %v3536 = vadd.f32 %v3531, %v3535
        %3537 = vadd.xlane.f32.xlu0 %v3536
        %v3538 = vpop.xlane.xlu0 %3537
        %v3539 = vmul.f32 %v3538, %v701
        %v3540 = vsub.f32 %v3536, %v3539
        %v3541 = vmul.f32 %v3540, %v3540
        %3542 = vadd.xlane.f32.xlu0 %v3541
        %v3543 = vpop.xlane.xlu0 %3542
        %v3544 = vmul.f32 %v3543, %v701
        %v3545 = vadd.f32 %v3544, 1e-05
        %v3546 = vrsqrt.pop %v3545
        %v3547 = vmul.f32 %v3540, %v3546
        %v3548 = vlaneseq
        %v3549 = vshrl.u32 %v3548, 7
        %v3550 = vsub.s32 0, %v3549
        %v3551 = vrot.slane %v2920, %v3550
        %v3552 = vmul.f32 %v3547, %v3551
        %v3553 = vlaneseq
        %v3554 = vshrl.u32 %v3553, 7
        %v3555 = vsub.s32 0, %v3554
        %v3556 = vrot.slane %v2921, %v3555
        %v3557 = vadd.f32 %v3552, %v3556
        %v3558 = vpack.c.bf16 %v678, %v3557
        %s3559 = scalar_lea.vmem [#allocation7], 384
        %v3560 = vld [vmem:[%s3559] sm:$0xff]
        %v3561 = vld [vmem:[%s3559 + $0x8] sm:$0xff]
        %v3562 = vld [vmem:[%s3559 + $0x10] sm:$0xff]
        %v3563 = vld [vmem:[%s3559 + $0x18] sm:$0xff]
        %v3564 = vld [vmem:[%s3559 + $0x20] sm:$0xff]
        %v3565 = vld [vmem:[%s3559 + $0x28] sm:$0xff]
        %v3566 = vld [vmem:[%s3559 + $0x30] sm:$0xff]
        %v3567 = vld [vmem:[%s3559 + $0x38] sm:$0xff]
        %v3568 = vld [vmem:[%s3559 + $0x40] sm:$0xff]
        %v3569 = vld [vmem:[%s3559 + $0x48] sm:$0xff]
        %v3570 = vld [vmem:[%s3559 + $0x50] sm:$0xff]
        %v3571 = vld [vmem:[%s3559 + $0x58] sm:$0xff]
        %v3572 = vld [vmem:[%s3559 + $0x60] sm:$0xff]
        %v3573 = vld [vmem:[%s3559 + $0x68] sm:$0xff]
        %v3574 = vld [vmem:[%s3559 + $0x70] sm:$0xff]
        %v3575 = vld [vmem:[%s3559 + $0x78] sm:$0xff]
        %v3576 = vld [vmem:[%s3559 + $0x80] sm:$0xff]
        %v3577 = vld [vmem:[%s3559 + $0x88] sm:$0xff]
        %v3578 = vld [vmem:[%s3559 + $0x90] sm:$0xff]
        %v3579 = vld [vmem:[%s3559 + $0x98] sm:$0xff]
        %v3580 = vld [vmem:[%s3559 + $0xa0] sm:$0xff]
        %v3581 = vld [vmem:[%s3559 + $0xa8] sm:$0xff]
        %v3582 = vld [vmem:[%s3559 + $0xb0] sm:$0xff]
        %v3583 = vld [vmem:[%s3559 + $0xb8] sm:$0xff]
        %v3584 = vld [vmem:[%s3559 + $0xc0] sm:$0xff]
        %v3585 = vld [vmem:[%s3559 + $0xc8] sm:$0xff]
        %v3586 = vld [vmem:[%s3559 + $0xd0] sm:$0xff]
        %v3587 = vld [vmem:[%s3559 + $0xd8] sm:$0xff]
        %v3588 = vld [vmem:[%s3559 + $0xe0] sm:$0xff]
        %v3589 = vld [vmem:[%s3559 + $0xe8] sm:$0xff]
        %v3590 = vld [vmem:[%s3559 + $0xf0] sm:$0xff]
        %v3591 = vld [vmem:[%s3559 + $0xf8] sm:$0xff]
        %v3592 = vld [vmem:[%s3559 + $0x100] sm:$0xff]
        %v3593 = vld [vmem:[%s3559 + $0x108] sm:$0xff]
        %v3594 = vld [vmem:[%s3559 + $0x110] sm:$0xff]
        %v3595 = vld [vmem:[%s3559 + $0x118] sm:$0xff]
        %v3596 = vld [vmem:[%s3559 + $0x120] sm:$0xff]
        %v3597 = vld [vmem:[%s3559 + $0x128] sm:$0xff]
        %v3598 = vld [vmem:[%s3559 + $0x130] sm:$0xff]
        %v3599 = vld [vmem:[%s3559 + $0x138] sm:$0xff]
        %v3600 = vld [vmem:[%s3559 + $0x140] sm:$0xff]
        %v3601 = vld [vmem:[%s3559 + $0x148] sm:$0xff]
        %v3602 = vld [vmem:[%s3559 + $0x150] sm:$0xff]
        %v3603 = vld [vmem:[%s3559 + $0x158] sm:$0xff]
        %v3604 = vld [vmem:[%s3559 + $0x160] sm:$0xff]
        %v3605 = vld [vmem:[%s3559 + $0x168] sm:$0xff]
        %v3606 = vld [vmem:[%s3559 + $0x170] sm:$0xff]
        %v3607 = vld [vmem:[%s3559 + $0x178] sm:$0xff]
        %v3609 = vlaneseq
        %v3610 = vshrl.u32 %v3609, 7
        %v3611 = vsub.s32 0, %v3610
        %v3612 = vrot.slane %v2912, %v3611
        %v3613 = vlaneseq
        %v3614 = vshrl.u32 %v3613, 7
        %v3615 = vsub.s32 1, %v3614
        %v3616 = vrot.slane %v2912, %v3615
        %v3617 = vlaneseq
        %v3618 = vshrl.u32 %v3617, 7
        %v3619 = vsub.s32 2, %v3618
        %v3620 = vrot.slane %v2912, %v3619
        %v3621 = vlaneseq
        %v3622 = vshrl.u32 %v3621, 7
        %v3623 = vsub.s32 3, %v3622
        %v3624 = vrot.slane %v2912, %v3623
        %v3625 = vlaneseq
        %v3626 = vshrl.u32 %v3625, 7
        %v3627 = vsub.s32 4, %v3626
        %v3628 = vrot.slane %v2912, %v3627
        %v3629 = vlaneseq
        %v3630 = vshrl.u32 %v3629, 7
        %v3631 = vsub.s32 5, %v3630
        %v3632 = vrot.slane %v2912, %v3631
        %v3687 = vunpack.c.l.b16 %v3560
        %v3688 = vunpack.c.h.b16 %v3560
        %v3689 = vunpack.c.l.b16 %v3561
        %v3690 = vunpack.c.h.b16 %v3561
        %v3691 = vunpack.c.l.b16 %v3562
        %v3692 = vunpack.c.h.b16 %v3562
        %v3693 = vunpack.c.l.b16 %v3563
        %v3694 = vunpack.c.h.b16 %v3563
        %v3695 = vunpack.c.l.b16 %v3564
        %v3696 = vunpack.c.h.b16 %v3564
        %v3697 = vunpack.c.l.b16 %v3565
        %v3698 = vunpack.c.h.b16 %v3565
        %v3699 = vunpack.c.l.b16 %v3566
        %v3700 = vunpack.c.h.b16 %v3566
        %v3701 = vunpack.c.l.b16 %v3567
        %v3702 = vunpack.c.h.b16 %v3567
        %v3703 = vunpack.c.l.b16 %v3568
        %v3704 = vunpack.c.h.b16 %v3568
        %v3705 = vunpack.c.l.b16 %v3569
        %v3706 = vunpack.c.h.b16 %v3569
        %v3707 = vunpack.c.l.b16 %v3570
        %v3708 = vunpack.c.h.b16 %v3570
        %v3709 = vunpack.c.l.b16 %v3571
        %v3710 = vunpack.c.h.b16 %v3571
        %v3711 = vunpack.c.l.b16 %v3572
        %v3712 = vunpack.c.h.b16 %v3572
        %v3713 = vunpack.c.l.b16 %v3573
        %v3714 = vunpack.c.h.b16 %v3573
        %v3715 = vunpack.c.l.b16 %v3574
        %v3716 = vunpack.c.h.b16 %v3574
        %v3717 = vunpack.c.l.b16 %v3575
        %v3718 = vunpack.c.h.b16 %v3575
        %v3719 = vunpack.c.l.b16 %v3576
        %v3720 = vunpack.c.h.b16 %v3576
        %v3721 = vunpack.c.l.b16 %v3577
        %v3722 = vunpack.c.h.b16 %v3577
        %v3723 = vunpack.c.l.b16 %v3578
        %v3724 = vunpack.c.h.b16 %v3578
        %v3725 = vunpack.c.l.b16 %v3579
        %v3726 = vunpack.c.h.b16 %v3579
        %v3727 = vunpack.c.l.b16 %v3580
        %v3728 = vunpack.c.h.b16 %v3580
        %v3729 = vunpack.c.l.b16 %v3581
        %v3730 = vunpack.c.h.b16 %v3581
        %v3731 = vunpack.c.l.b16 %v3582
        %v3732 = vunpack.c.h.b16 %v3582
        %v3733 = vunpack.c.l.b16 %v3583
        %v3734 = vunpack.c.h.b16 %v3583
        %v3735 = vunpack.c.l.b16 %v3584
        %v3736 = vunpack.c.h.b16 %v3584
        %v3737 = vunpack.c.l.b16 %v3585
        %v3738 = vunpack.c.h.b16 %v3585
        %v3739 = vunpack.c.l.b16 %v3586
        %v3740 = vunpack.c.h.b16 %v3586
        %v3741 = vunpack.c.l.b16 %v3587
        %v3742 = vunpack.c.h.b16 %v3587
        %v3743 = vunpack.c.l.b16 %v3588
        %v3744 = vunpack.c.h.b16 %v3588
        %v3745 = vunpack.c.l.b16 %v3589
        %v3746 = vunpack.c.h.b16 %v3589
        %v3747 = vunpack.c.l.b16 %v3590
        %v3748 = vunpack.c.h.b16 %v3590
        %v3749 = vunpack.c.l.b16 %v3591
        %v3750 = vunpack.c.h.b16 %v3591
        %v3751 = vunpack.c.l.b16 %v3592
        %v3752 = vunpack.c.h.b16 %v3592
        %v3753 = vunpack.c.l.b16 %v3593
        %v3754 = vunpack.c.h.b16 %v3593
        %v3755 = vunpack.c.l.b16 %v3594
        %v3756 = vunpack.c.h.b16 %v3594
        %v3757 = vunpack.c.l.b16 %v3595
        %v3758 = vunpack.c.h.b16 %v3595
        %v3759 = vunpack.c.l.b16 %v3596
        %v3760 = vunpack.c.h.b16 %v3596
        %v3761 = vunpack.c.l.b16 %v3597
        %v3762 = vunpack.c.h.b16 %v3597
        %v3763 = vunpack.c.l.b16 %v3598
        %v3764 = vunpack.c.h.b16 %v3598
        %v3765 = vunpack.c.l.b16 %v3599
        %v3766 = vunpack.c.h.b16 %v3599
        %v3767 = vunpack.c.l.b16 %v3600
        %v3768 = vunpack.c.h.b16 %v3600
        %v3769 = vunpack.c.l.b16 %v3601
        %v3770 = vunpack.c.h.b16 %v3601
        %v3771 = vunpack.c.l.b16 %v3602
        %v3772 = vunpack.c.h.b16 %v3602
        %v3773 = vunpack.c.l.b16 %v3603
        %v3774 = vunpack.c.h.b16 %v3603
        %v3775 = vunpack.c.l.b16 %v3604
        %v3776 = vunpack.c.h.b16 %v3604
        %v3777 = vunpack.c.l.b16 %v3605
        %v3778 = vunpack.c.h.b16 %v3605
        %v3779 = vunpack.c.l.b16 %v3606
        %v3780 = vunpack.c.h.b16 %v3606
        %v3781 = vunpack.c.l.b16 %v3607
        %v3782 = vunpack.c.h.b16 %v3607
        %v3783 = vpack.c.b16 %v3693, %v3687
        %v3784 = vpack.c.b16 %v3694, %v3688
        %v3785 = vpack.c.b16 %v3695, %v3689
        %v3786 = vpack.c.b16 %v3696, %v3690
        %v3787 = vpack.c.b16 %v3697, %v3691
        %v3788 = vpack.c.b16 %v3698, %v3692
        %v3789 = vpack.c.b16 %v3705, %v3699
        %v3790 = vpack.c.b16 %v3706, %v3700
        %v3791 = vpack.c.b16 %v3707, %v3701
        %v3792 = vpack.c.b16 %v3708, %v3702
        %v3793 = vpack.c.b16 %v3709, %v3703
        %v3794 = vpack.c.b16 %v3710, %v3704
        %v3795 = vpack.c.b16 %v3717, %v3711
        %v3796 = vpack.c.b16 %v3718, %v3712
        %v3797 = vpack.c.b16 %v3719, %v3713
        %v3798 = vpack.c.b16 %v3720, %v3714
        %v3799 = vpack.c.b16 %v3721, %v3715
        %v3800 = vpack.c.b16 %v3722, %v3716
        %v3801 = vpack.c.b16 %v3729, %v3723
        %v3802 = vpack.c.b16 %v3730, %v3724
        %v3803 = vpack.c.b16 %v3731, %v3725
        %v3804 = vpack.c.b16 %v3732, %v3726
        %v3805 = vpack.c.b16 %v3733, %v3727
        %v3806 = vpack.c.b16 %v3734, %v3728
        %v3807 = vpack.c.b16 %v3741, %v3735
        %v3808 = vpack.c.b16 %v3742, %v3736
        %v3809 = vpack.c.b16 %v3743, %v3737
        %v3810 = vpack.c.b16 %v3744, %v3738
        %v3811 = vpack.c.b16 %v3745, %v3739
        %v3812 = vpack.c.b16 %v3746, %v3740
        %v3813 = vpack.c.b16 %v3753, %v3747
        %v3814 = vpack.c.b16 %v3754, %v3748
        %v3815 = vpack.c.b16 %v3755, %v3749
        %v3816 = vpack.c.b16 %v3756, %v3750
        %v3817 = vpack.c.b16 %v3757, %v3751
        %v3818 = vpack.c.b16 %v3758, %v3752
        %v3819 = vpack.c.b16 %v3765, %v3759
        %v3820 = vpack.c.b16 %v3766, %v3760
        %v3821 = vpack.c.b16 %v3767, %v3761
        %v3822 = vpack.c.b16 %v3768, %v3762
        %v3823 = vpack.c.b16 %v3769, %v3763
        %v3824 = vpack.c.b16 %v3770, %v3764
        %v3825 = vpack.c.b16 %v3777, %v3771
        %v3826 = vpack.c.b16 %v3778, %v3772
        %v3827 = vpack.c.b16 %v3779, %v3773
        %v3828 = vpack.c.b16 %v3780, %v3774
        %v3829 = vpack.c.b16 %v3781, %v3775
        %v3830 = vpack.c.b16 %v3782, %v3776
        %3879 = vmatprep.subr.bf16.mxu0 %v3784
        %3880 = vmatpush1.bf16.msra.mxu0 %v3783
        %3881 = vmatprep.subr.bf16.mxu0 %v3790
        %3882 = vmatpush1.bf16.msra.mxu0 %v3789
        %3883 = vmatprep.subr.bf16.mxu0 %v3796
        %3884 = vmatpush1.bf16.msra.mxu0 %v3795
        %3885 = vmatprep.subr.bf16.mxu0 %v3802
        %3886 = vmatpush1.bf16.msra.mxu0 %v3801
        %3887 = vmatprep.subr.bf16.mxu0 %v3808
        %3888 = vmatpush1.bf16.msra.mxu0 %v3807
        %3889 = vmatprep.subr.bf16.mxu0 %v3814
        %3890 = vmatpush1.bf16.msra.mxu0 %v3813
        %3891 = vmatprep.subr.bf16.mxu0 %v3820
        %3892 = vmatpush1.bf16.msra.mxu0 %v3819
        %3893 = vmatprep.subr.bf16.mxu0 %v3826
        %3894 = vmatpush1.bf16.msra.mxu0 %v3825
        %3895 = vmatprep.subr.bf16.mxu0 0
        %3896 = vmatpush1.bf16.msra.mxu0 0
        %3897 = vmatprep.subr.bf16.mxu0 0
        %3898 = vmatpush1.bf16.msra.mxu0 0
        %3899 = vmatprep.subr.bf16.mxu0 0
        %3900 = vmatpush1.bf16.msra.mxu0 0
        %3901 = vmatprep.subr.bf16.mxu0 0
        %3902 = vmatpush1.bf16.msra.mxu0 0
        %3903 = vmatprep.subr.bf16.mxu0 0
        %3904 = vmatpush1.bf16.msra.mxu0 0
        %3905 = vmatprep.subr.bf16.mxu0 0
        %3906 = vmatpush1.bf16.msra.mxu0 0
        %3907 = vmatprep.subr.bf16.mxu0 0
        %3908 = vmatpush1.bf16.msra.mxu0 0
        %3909 = vmatprep.subr.bf16.mxu0 0
        %3910 = vmatpush1.bf16.msra.mxu0 0
        %3911 = vmatprep.mubr.bf16.mxu0 0
        %3912 = vmatmul.mubr.bf16.gmra.mrb[0].mxu0 %v3558
        %v3913 = vpop.f32.mrb[0].mxu0
        %v3914 = vadd.f32 %v3612, %v3913
        %v3915 = vpop.f32.mrb[0].mxu0
        %v3916 = vadd.f32 %v3616, %v3915
        %v3917 = vpop.f32.mrb[0].mxu0
        %v3918 = vpop.f32.mrb[0].mxu0
        %v3919 = vadd.f32 %v3616, %v3918
        %3920 = vdwg.mxu0
        %3921 = vmatprep.subr.bf16.mxu0 %v3786
        %3922 = vmatpush1.bf16.msra.mxu0 %v3785
        %3923 = vmatprep.subr.bf16.mxu0 %v3792
        %3924 = vmatpush1.bf16.msra.mxu0 %v3791
        %3925 = vmatprep.subr.bf16.mxu0 %v3798
        %3926 = vmatpush1.bf16.msra.mxu0 %v3797
        %3927 = vmatprep.subr.bf16.mxu0 %v3804
        %3928 = vmatpush1.bf16.msra.mxu0 %v3803
        %3929 = vmatprep.subr.bf16.mxu0 %v3810
        %3930 = vmatpush1.bf16.msra.mxu0 %v3809
        %3931 = vmatprep.subr.bf16.mxu0 %v3816
        %3932 = vmatpush1.bf16.msra.mxu0 %v3815
        %3933 = vmatprep.subr.bf16.mxu0 %v3822
        %3934 = vmatpush1.bf16.msra.mxu0 %v3821
        %3935 = vmatprep.subr.bf16.mxu0 %v3828
        %3936 = vmatpush1.bf16.msra.mxu0 %v3827
        %3937 = vmatprep.subr.bf16.mxu0 0
        %3938 = vmatpush1.bf16.msra.mxu0 0
        %3939 = vmatprep.subr.bf16.mxu0 0
        %3940 = vmatpush1.bf16.msra.mxu0 0
        %3941 = vmatprep.subr.bf16.mxu0 0
        %3942 = vmatpush1.bf16.msra.mxu0 0
        %3943 = vmatprep.subr.bf16.mxu0 0
        %3944 = vmatpush1.bf16.msra.mxu0 0
        %3945 = vmatprep.subr.bf16.mxu0 0
        %3946 = vmatpush1.bf16.msra.mxu0 0
        %3947 = vmatprep.subr.bf16.mxu0 0
        %3948 = vmatpush1.bf16.msra.mxu0 0
        %3949 = vmatprep.subr.bf16.mxu0 0
        %3950 = vmatpush1.bf16.msra.mxu0 0
        %3951 = vmatprep.subr.bf16.mxu0 0
        %3952 = vmatpush1.bf16.msra.mxu0 0
        %3953 = vmatprep.mubr.bf16.mxu0 0
        %3954 = vmatmul.mubr.bf16.gmra.mrb[0].mxu0 %v3558
        %v3955 = vpop.f32.mrb[0].mxu0
        %v3956 = vadd.f32 %v3620, %v3955
        %v3957 = vpop.f32.mrb[0].mxu0
        %v3958 = vadd.f32 %v3624, %v3957
        %v3959 = vpop.f32.mrb[0].mxu0
        %v3960 = vadd.f32 %v3620, %v3959
        %v3961 = vpop.f32.mrb[0].mxu0
        %3962 = vdwg.mxu0
        %3963 = vmatprep.subr.bf16.mxu0 %v3788
        %3964 = vmatpush1.bf16.msra.mxu0 %v3787
        %3965 = vmatprep.subr.bf16.mxu0 %v3794
        %3966 = vmatpush1.bf16.msra.mxu0 %v3793
        %3967 = vmatprep.subr.bf16.mxu0 %v3800
        %3968 = vmatpush1.bf16.msra.mxu0 %v3799
        %3969 = vmatprep.subr.bf16.mxu0 %v3806
        %3970 = vmatpush1.bf16.msra.mxu0 %v3805
        %3971 = vmatprep.subr.bf16.mxu0 %v3812
        %3972 = vmatpush1.bf16.msra.mxu0 %v3811
        %3973 = vmatprep.subr.bf16.mxu0 %v3818
        %3974 = vmatpush1.bf16.msra.mxu0 %v3817
        %3975 = vmatprep.subr.bf16.mxu0 %v3824
        %3976 = vmatpush1.bf16.msra.mxu0 %v3823
        %3977 = vmatprep.subr.bf16.mxu0 %v3830
        %3978 = vmatpush1.bf16.msra.mxu0 %v3829
        %3979 = vmatprep.subr.bf16.mxu0 0
        %3980 = vmatpush1.bf16.msra.mxu0 0
        %3981 = vmatprep.subr.bf16.mxu0 0
        %3982 = vmatpush1.bf16.msra.mxu0 0
        %3983 = vmatprep.subr.bf16.mxu0 0
        %3984 = vmatpush1.bf16.msra.mxu0 0
        %3985 = vmatprep.subr.bf16.mxu0 0
        %3986 = vmatpush1.bf16.msra.mxu0 0
        %3987 = vmatprep.subr.bf16.mxu0 0
        %3988 = vmatpush1.bf16.msra.mxu0 0
        %3989 = vmatprep.subr.bf16.mxu0 0
        %3990 = vmatpush1.bf16.msra.mxu0 0
        %3991 = vmatprep.subr.bf16.mxu0 0
        %3992 = vmatpush1.bf16.msra.mxu0 0
        %3993 = vmatprep.subr.bf16.mxu0 0
        %3994 = vmatpush1.bf16.msra.mxu0 0
        %3995 = vmatprep.mubr.bf16.mxu0 0
        %3996 = vmatmul.mubr.bf16.gmra.mrb[0].mxu0 %v3558
        %v3997 = vpop.f32.mrb[0].mxu0
        %v3998 = vadd.f32 %v3628, %v3997
        %v3999 = vpop.f32.mrb[0].mxu0
        %v4000 = vadd.f32 %v3632, %v3999
        %v4001 = vpop.f32.mrb[0].mxu0
        %v4002 = vadd.f32 %v3628, %v4001
        %v4003 = vpop.f32.mrb[0].mxu0
        %v4004 = vadd.f32 %v3632, %v4003
        %4005 = vdwg.mxu0
        %v4006 = vmul.f32 %v3916, %v1783
        %v4007 = vmul.f32 %v3919, %v1784
        %v4008 = vmul.f32 %v3916, %v1785
        %v4009 = vmul.f32 %v3919, %v1786
        %v4010 = vmul.f32 %v3916, %v1787
        %v4011 = vmul.f32 %v3919, %v1788
        %v4012 = vmul.f32 %v3916, %v1789
        %v4013 = vmul.f32 %v3919, %v1790
        %v4014 = vmul.f32 %v3916, %v1791
        %v4015 = vmul.f32 %v3919, %v1792
        %v4016 = vmul.f32 %v3916, %v1793
        %v4017 = vmul.f32 %v3919, %v1794
        %v4018 = vmul.f32 %v3916, %v1795
        %v4019 = vmul.f32 %v3919, %v1796
        %v4020 = vmul.f32 %v3916, %v1797
        %v4021 = vmul.f32 %v3919, %v1798
        %v4022 = vmul.f32 %v3956, %v1783
        %v4023 = vmul.f32 %v3960, %v1784
        %v4024 = vmul.f32 %v3956, %v1785
        %v4025 = vmul.f32 %v3960, %v1786
        %v4026 = vmul.f32 %v3956, %v1787
        %v4027 = vmul.f32 %v3960, %v1788
        %v4028 = vmul.f32 %v3956, %v1789
        %v4029 = vmul.f32 %v3960, %v1790
        %v4030 = vmul.f32 %v3956, %v1791
        %v4031 = vmul.f32 %v3960, %v1792
        %v4032 = vmul.f32 %v3956, %v1793
        %v4033 = vmul.f32 %v3960, %v1794
        %v4034 = vmul.f32 %v3956, %v1795
        %v4035 = vmul.f32 %v3960, %v1796
        %v4036 = vmul.f32 %v3956, %v1797
        %v4037 = vmul.f32 %v3960, %v1798
        %v4038 = vpack.c.bf16 %v4023, %v4022
        %v4039 = vpack.c.bf16 %v4025, %v4024
        %v4040 = vpack.c.bf16 %v4027, %v4026
        %v4041 = vpack.c.bf16 %v4029, %v4028
        %v4042 = vpack.c.bf16 %v4031, %v4030
        %v4043 = vpack.c.bf16 %v4033, %v4032
        %v4044 = vpack.c.bf16 %v4035, %v4034
        %v4045 = vpack.c.bf16 %v4037, %v4036
        %4046 = vmatprep.subr.mxu0 0.0
        %4047 = vmatpush1.xpose.msra.mxu0 %v4006
        %4048 = vmatprep.subr.mxu0 0.0
        %4049 = vmatpush1.xpose.msra.mxu0 %v4007
        %4050 = vmatprep.subr.mxu0 0.0
        %4051 = vmatpush1.xpose.msra.mxu0 %v4008
        %4052 = vmatprep.subr.mxu0 0.0
        %4053 = vmatpush1.xpose.msra.mxu0 %v4009
        %4054 = vmatprep.subr.mxu0 0.0
        %4055 = vmatpush1.xpose.msra.mxu0 %v4010
        %4056 = vmatprep.subr.mxu0 0.0
        %4057 = vmatpush1.xpose.msra.mxu0 %v4011
        %4058 = vmatprep.subr.mxu0 0.0
        %4059 = vmatpush1.xpose.msra.mxu0 %v4012
        %4060 = vmatprep.subr.mxu0 0.0
        %4061 = vmatpush1.xpose.msra.mxu0 %v4013
        %4062 = vmatprep.subr.mxu0 0.0
        %4063 = vmatpush1.xpose.msra.mxu0 %v4014
        %4064 = vmatprep.subr.mxu0 0.0
        %4065 = vmatpush1.xpose.msra.mxu0 %v4015
        %4066 = vmatprep.subr.mxu0 0.0
        %4067 = vmatpush1.xpose.msra.mxu0 %v4016
        %4068 = vmatprep.subr.mxu0 0.0
        %4069 = vmatpush1.xpose.msra.mxu0 %v4017
        %4070 = vmatprep.subr.mxu0 0.0
        %4071 = vmatpush1.xpose.msra.mxu0 %v4018
        %4072 = vmatprep.subr.mxu0 0.0
        %4073 = vmatpush1.xpose.msra.mxu0 %v4019
        %4074 = vmatprep.subr.mxu0 0.0
        %4075 = vmatpush1.xpose.msra.mxu0 %v4020
        %4076 = vmatprep.subr.mxu0 0.0
        %4077 = vmatpush1.xpose.msra.mxu0 %v4021
        %4078 = vmatprep.subr.mxu0 0.0
        %4079 = vmatpush1.xpose.msra.mxu0 0.0
        %4080 = vmatprep.subr.mxu0 0.0
        %4081 = vmatpush1.xpose.msra.mxu0 0.0
        %4082 = vmatprep.subr.mxu0 0.0
        %4083 = vmatpush1.xpose.msra.mxu0 0.0
        %4084 = vmatprep.subr.mxu0 0.0
        %4085 = vmatpush1.xpose.msra.mxu0 0.0
        %4086 = vmatprep.subr.mxu0 0.0
        %4087 = vmatpush1.xpose.msra.mxu0 0.0
        %4088 = vmatprep.subr.mxu0 0.0
        %4089 = vmatpush1.xpose.msra.mxu0 0.0
        %4090 = vmatprep.subr.mxu0 0.0
        %4091 = vmatpush1.xpose.msra.mxu0 0.0
        %4092 = vmatprep.subr.mxu0 0.0
        %4093 = vmatpush1.xpose.msra.mxu0 0.0
        %4094 = vmatprep.subr.mxu0 0.0
        %4095 = vmatpush1.xpose.msra.mxu0 0.0
        %4096 = vmatprep.subr.mxu0 0.0
        %4097 = vmatpush1.xpose.msra.mxu0 0.0
        %4098 = vmatprep.subr.mxu0 0.0
        %4099 = vmatpush1.xpose.msra.mxu0 0.0
        %4100 = vmatprep.subr.mxu0 0.0
        %4101 = vmatpush1.xpose.msra.mxu0 0.0
        %4102 = vmatprep.subr.mxu0 0.0
        %4103 = vmatpush1.xpose.msra.mxu0 0.0
        %4104 = vmatprep.subr.mxu0 0.0
        %4105 = vmatpush1.xpose.msra.mxu0 0.0
        %4106 = vmatprep.subr.mxu0 0.0
        %4107 = vmatpush1.xpose.msra.mxu0 0.0
        %4108 = vmatprep.subr.mxu0 0.0
        %4109 = vmatpush1.xpose.msra.mxu0 0.0
        %4110 = vmatprep.mubr.f32.mxu0 0.0
        %4111 = vmatmul.mubr.f32.gmra.mrb[0].mxu0 %v3914
        %v4112 = vpop.f32.mrb[0].mxu0
        %v4113 = vadd.f32 0.0, %v4112
        %v4114 = vpop.f32.mrb[0].mxu0
        %4115 = vdwg.mxu0
        %v4116 = vmul.f32 %v4113, 0.25
        %v4117 = vadd.f32 %v4116, %v1914
        %4118 = vmax.xlane.f32.xlu0 %v4117
        %v4119 = vpop.xlane.xlu0 %4118
        %v4120 = vsub.f32 %v4117, %v4119
        %v4121 = vmul.f32 %v4120, 1.442695
        %v4122 = vpow.pop %v4121
        %4123 = vmatprep.subr.mxu0 0.0
        %4124 = vmatpush1.msra.mxu0 %v1783
        %4125 = vmatprep.subr.mxu0 0.0
        %4126 = vmatpush1.msra.mxu0 %v1784
        %4127 = vmatprep.subr.mxu0 0.0
        %4128 = vmatpush1.msra.mxu0 %v1785
        %4129 = vmatprep.subr.mxu0 0.0
        %4130 = vmatpush1.msra.mxu0 %v1786
        %4131 = vmatprep.subr.mxu0 0.0
        %4132 = vmatpush1.msra.mxu0 %v1787
        %4133 = vmatprep.subr.mxu0 0.0
        %4134 = vmatpush1.msra.mxu0 %v1788
        %4135 = vmatprep.subr.mxu0 0.0
        %4136 = vmatpush1.msra.mxu0 %v1789
        %4137 = vmatprep.subr.mxu0 0.0
        %4138 = vmatpush1.msra.mxu0 %v1790
        %4139 = vmatprep.subr.mxu0 0.0
        %4140 = vmatpush1.msra.mxu0 %v1791
        %4141 = vmatprep.subr.mxu0 0.0
        %4142 = vmatpush1.msra.mxu0 %v1792
        %4143 = vmatprep.subr.mxu0 0.0
        %4144 = vmatpush1.msra.mxu0 %v1793
        %4145 = vmatprep.subr.mxu0 0.0
        %4146 = vmatpush1.msra.mxu0 %v1794
        %4147 = vmatprep.subr.mxu0 0.0
        %4148 = vmatpush1.msra.mxu0 %v1795
        %4149 = vmatprep.subr.mxu0 0.0
        %4150 = vmatpush1.msra.mxu0 %v1796
        %4151 = vmatprep.subr.mxu0 0.0
        %4152 = vmatpush1.msra.mxu0 %v1797
        %4153 = vmatprep.subr.mxu0 0.0
        %4154 = vmatpush1.msra.mxu0 %v1798
        %4155 = vmatprep.subr.mxu0 0.0
        %4156 = vmatpush1.msra.mxu0 0.0
        %4157 = vmatprep.subr.mxu0 0.0
        %4158 = vmatpush1.msra.mxu0 0.0
        %4159 = vmatprep.subr.mxu0 0.0
        %4160 = vmatpush1.msra.mxu0 0.0
        %4161 = vmatprep.subr.mxu0 0.0
        %4162 = vmatpush1.msra.mxu0 0.0
        %4163 = vmatprep.subr.mxu0 0.0
        %4164 = vmatpush1.msra.mxu0 0.0
        %4165 = vmatprep.subr.mxu0 0.0
        %4166 = vmatpush1.msra.mxu0 0.0
        %4167 = vmatprep.subr.mxu0 0.0
        %4168 = vmatpush1.msra.mxu0 0.0
        %4169 = vmatprep.subr.mxu0 0.0
        %4170 = vmatpush1.msra.mxu0 0.0
        %4171 = vmatprep.subr.mxu0 0.0
        %4172 = vmatpush1.msra.mxu0 0.0
        %4173 = vmatprep.subr.mxu0 0.0
        %4174 = vmatpush1.msra.mxu0 0.0
        %4175 = vmatprep.subr.mxu0 0.0
        %4176 = vmatpush1.msra.mxu0 0.0
        %4177 = vmatprep.subr.mxu0 0.0
        %4178 = vmatpush1.msra.mxu0 0.0
        %4179 = vmatprep.subr.mxu0 0.0
        %4180 = vmatpush1.msra.mxu0 0.0
        %4181 = vmatprep.subr.mxu0 0.0
        %4182 = vmatpush1.msra.mxu0 0.0
        %4183 = vmatprep.subr.mxu0 0.0
        %4184 = vmatpush1.msra.mxu0 0.0
        %4185 = vmatprep.subr.mxu0 0.0
        %4186 = vmatpush1.msra.mxu0 0.0
        %4187 = vmatprep.mubr.f32.mxu0 0.0
        %4188 = vmatmul.mubr.f32.gmra.mrb[0].mxu0 %v4122
        %v4189 = vpop.f32.mrb[0].mxu0
        %v4190 = vadd.f32 0.0, %v4189
        %v4191 = vpop.f32.mrb[0].mxu0
        %4192 = vdwg.mxu0
        %v4193 = vpack.c.bf16 %v4122, %v4122
        %4194 = vmatprep.subr.bf16.mxu0 0
        %4195 = vmatpush1.bf16.msra.mxu0 %v4038
        %4196 = vmatprep.subr.bf16.mxu0 0
        %4197 = vmatpush1.bf16.msra.mxu0 %v4039
        %4198 = vmatprep.subr.bf16.mxu0 0
        %4199 = vmatpush1.bf16.msra.mxu0 %v4040
        %4200 = vmatprep.subr.bf16.mxu0 0
        %4201 = vmatpush1.bf16.msra.mxu0 %v4041
        %4202 = vmatprep.subr.bf16.mxu0 0
        %4203 = vmatpush1.bf16.msra.mxu0 %v4042
        %4204 = vmatprep.subr.bf16.mxu0 0
        %4205 = vmatpush1.bf16.msra.mxu0 %v4043
        %4206 = vmatprep.subr.bf16.mxu0 0
        %4207 = vmatpush1.bf16.msra.mxu0 %v4044
        %4208 = vmatprep.subr.bf16.mxu0 0
        %4209 = vmatpush1.bf16.msra.mxu0 %v4045
        %4210 = vmatprep.subr.bf16.mxu0 0
        %4211 = vmatpush1.bf16.msra.mxu0 0
        %4212 = vmatprep.subr.bf16.mxu0 0
        %4213 = vmatpush1.bf16.msra.mxu0 0
        %4214 = vmatprep.subr.bf16.mxu0 0
        %4215 = vmatpush1.bf16.msra.mxu0 0
        %4216 = vmatprep.subr.bf16.mxu0 0
        %4217 = vmatpush1.bf16.msra.mxu0 0
        %4218 = vmatprep.subr.bf16.mxu0 0
        %4219 = vmatpush1.bf16.msra.mxu0 0
        %4220 = vmatprep.subr.bf16.mxu0 0
        %4221 = vmatpush1.bf16.msra.mxu0 0
        %4222 = vmatprep.subr.bf16.mxu0 0
        %4223 = vmatpush1.bf16.msra.mxu0 0
        %4224 = vmatprep.subr.bf16.mxu0 0
        %4225 = vmatpush1.bf16.msra.mxu0 0
        %4226 = vmatprep.mubr.bf16.mxu0 0
        %4227 = vmatmul.mubr.bf16.gmra.mrb[0].mxu0 %v4193
        %v4228 = vpop.f32.mrb[0].mxu0
        %v4229 = vadd.f32 0.0, %v4228
        %v4230 = vpop.f32.mrb[0].mxu0
        %v4231 = vpop.f32.mrb[0].mxu0
        %v4232 = vpop.f32.mrb[0].mxu0
        %4233 = vdwg.mxu0
        %v4234 = vrcp.pop %v4190
        %v4235 = vmul.f32 %v4229, %v4234
        %v4236 = vmul.f32 %v3998, %v1783
        %v4237 = vmul.f32 %v4002, %v1784
        %v4238 = vmul.f32 %v3998, %v1785
        %v4239 = vmul.f32 %v4002, %v1786
        %v4240 = vmul.f32 %v3998, %v1787
        %v4241 = vmul.f32 %v4002, %v1788
        %v4242 = vmul.f32 %v3998, %v1789
        %v4243 = vmul.f32 %v4002, %v1790
        %v4244 = vmul.f32 %v3998, %v1791
        %v4245 = vmul.f32 %v4002, %v1792
        %v4246 = vmul.f32 %v3998, %v1793
        %v4247 = vmul.f32 %v4002, %v1794
        %v4248 = vmul.f32 %v3998, %v1795
        %v4249 = vmul.f32 %v4002, %v1796
        %v4250 = vmul.f32 %v3998, %v1797
        %v4251 = vmul.f32 %v4002, %v1798
        %v4252 = vmul.f32 %v4000, %v1783
        %v4253 = vmul.f32 %v4004, %v1784
        %v4254 = vmul.f32 %v4000, %v1785
        %v4255 = vmul.f32 %v4004, %v1786
        %v4256 = vmul.f32 %v4000, %v1787
        %v4257 = vmul.f32 %v4004, %v1788
        %v4258 = vmul.f32 %v4000, %v1789
        %v4259 = vmul.f32 %v4004, %v1790
        %v4260 = vmul.f32 %v4000, %v1791
        %v4261 = vmul.f32 %v4004, %v1792
        %v4262 = vmul.f32 %v4000, %v1793
        %v4263 = vmul.f32 %v4004, %v1794
        %v4264 = vmul.f32 %v4000, %v1795
        %v4265 = vmul.f32 %v4004, %v1796
        %v4266 = vmul.f32 %v4000, %v1797
        %v4267 = vmul.f32 %v4004, %v1798
        %v4268 = vpack.c.bf16 %v4253, %v4252
        %v4269 = vpack.c.bf16 %v4255, %v4254
        %v4270 = vpack.c.bf16 %v4257, %v4256
        %v4271 = vpack.c.bf16 %v4259, %v4258
        %v4272 = vpack.c.bf16 %v4261, %v4260
        %v4273 = vpack.c.bf16 %v4263, %v4262
        %v4274 = vpack.c.bf16 %v4265, %v4264
        %v4275 = vpack.c.bf16 %v4267, %v4266
        %4276 = vmatprep.subr.mxu0 0.0
        %4277 = vmatpush1.xpose.msra.mxu0 %v4236
        %4278 = vmatprep.subr.mxu0 0.0
        %4279 = vmatpush1.xpose.msra.mxu0 %v4237
        %4280 = vmatprep.subr.mxu0 0.0
        %4281 = vmatpush1.xpose.msra.mxu0 %v4238
        %4282 = vmatprep.subr.mxu0 0.0
        %4283 = vmatpush1.xpose.msra.mxu0 %v4239
        %4284 = vmatprep.subr.mxu0 0.0
        %4285 = vmatpush1.xpose.msra.mxu0 %v4240
        %4286 = vmatprep.subr.mxu0 0.0
        %4287 = vmatpush1.xpose.msra.mxu0 %v4241
        %4288 = vmatprep.subr.mxu0 0.0
        %4289 = vmatpush1.xpose.msra.mxu0 %v4242
        %4290 = vmatprep.subr.mxu0 0.0
        %4291 = vmatpush1.xpose.msra.mxu0 %v4243
        %4292 = vmatprep.subr.mxu0 0.0
        %4293 = vmatpush1.xpose.msra.mxu0 %v4244
        %4294 = vmatprep.subr.mxu0 0.0
        %4295 = vmatpush1.xpose.msra.mxu0 %v4245
        %4296 = vmatprep.subr.mxu0 0.0
        %4297 = vmatpush1.xpose.msra.mxu0 %v4246
        %4298 = vmatprep.subr.mxu0 0.0
        %4299 = vmatpush1.xpose.msra.mxu0 %v4247
        %4300 = vmatprep.subr.mxu0 0.0
        %4301 = vmatpush1.xpose.msra.mxu0 %v4248
        %4302 = vmatprep.subr.mxu0 0.0
        %4303 = vmatpush1.xpose.msra.mxu0 %v4249
        %4304 = vmatprep.subr.mxu0 0.0
        %4305 = vmatpush1.xpose.msra.mxu0 %v4250
        %4306 = vmatprep.subr.mxu0 0.0
        %4307 = vmatpush1.xpose.msra.mxu0 %v4251
        %4308 = vmatprep.subr.mxu0 0.0
        %4309 = vmatpush1.xpose.msra.mxu0 0.0
        %4310 = vmatprep.subr.mxu0 0.0
        %4311 = vmatpush1.xpose.msra.mxu0 0.0
        %4312 = vmatprep.subr.mxu0 0.0
        %4313 = vmatpush1.xpose.msra.mxu0 0.0
        %4314 = vmatprep.subr.mxu0 0.0
        %4315 = vmatpush1.xpose.msra.mxu0 0.0
        %4316 = vmatprep.subr.mxu0 0.0
        %4317 = vmatpush1.xpose.msra.mxu0 0.0
        %4318 = vmatprep.subr.mxu0 0.0
        %4319 = vmatpush1.xpose.msra.mxu0 0.0
        %4320 = vmatprep.subr.mxu0 0.0
        %4321 = vmatpush1.xpose.msra.mxu0 0.0
        %4322 = vmatprep.subr.mxu0 0.0
        %4323 = vmatpush1.xpose.msra.mxu0 0.0
        %4324 = vmatprep.subr.mxu0 0.0
        %4325 = vmatpush1.xpose.msra.mxu0 0.0
        %4326 = vmatprep.subr.mxu0 0.0
        %4327 = vmatpush1.xpose.msra.mxu0 0.0
        %4328 = vmatprep.subr.mxu0 0.0
        %4329 = vmatpush1.xpose.msra.mxu0 0.0
        %4330 = vmatprep.subr.mxu0 0.0
        %4331 = vmatpush1.xpose.msra.mxu0 0.0
        %4332 = vmatprep.subr.mxu0 0.0
        %4333 = vmatpush1.xpose.msra.mxu0 0.0
        %4334 = vmatprep.subr.mxu0 0.0
        %4335 = vmatpush1.xpose.msra.mxu0 0.0
        %4336 = vmatprep.subr.mxu0 0.0
        %4337 = vmatpush1.xpose.msra.mxu0 0.0
        %4338 = vmatprep.subr.mxu0 0.0
        %4339 = vmatpush1.xpose.msra.mxu0 0.0
        %4340 = vmatprep.mubr.f32.mxu0 0.0
        %4341 = vmatmul.mubr.f32.gmra.mrb[0].mxu0 %v3958
        %v4342 = vpop.f32.mrb[0].mxu0
        %v4343 = vadd.f32 0.0, %v4342
        %v4344 = vpop.f32.mrb[0].mxu0
        %4345 = vdwg.mxu0
        %v4346 = vmul.f32 %v4343, 0.25
        %v4347 = vadd.f32 %v4346, %v2150
        %4348 = vmax.xlane.f32.xlu0 %v4347
        %v4349 = vpop.xlane.xlu0 %4348
        %v4350 = vsub.f32 %v4347, %v4349
        %v4351 = vmul.f32 %v4350, 1.442695
        %v4352 = vpow.pop %v4351
        %4353 = vmatprep.subr.mxu0 0.0
        %4354 = vmatpush1.msra.mxu0 %v1783
        %4355 = vmatprep.subr.mxu0 0.0
        %4356 = vmatpush1.msra.mxu0 %v1784
        %4357 = vmatprep.subr.mxu0 0.0
        %4358 = vmatpush1.msra.mxu0 %v1785
        %4359 = vmatprep.subr.mxu0 0.0
        %4360 = vmatpush1.msra.mxu0 %v1786
        %4361 = vmatprep.subr.mxu0 0.0
        %4362 = vmatpush1.msra.mxu0 %v1787
        %4363 = vmatprep.subr.mxu0 0.0
        %4364 = vmatpush1.msra.mxu0 %v1788
        %4365 = vmatprep.subr.mxu0 0.0
        %4366 = vmatpush1.msra.mxu0 %v1789
        %4367 = vmatprep.subr.mxu0 0.0
        %4368 = vmatpush1.msra.mxu0 %v1790
        %4369 = vmatprep.subr.mxu0 0.0
        %4370 = vmatpush1.msra.mxu0 %v1791
        %4371 = vmatprep.subr.mxu0 0.0
        %4372 = vmatpush1.msra.mxu0 %v1792
        %4373 = vmatprep.subr.mxu0 0.0
        %4374 = vmatpush1.msra.mxu0 %v1793
        %4375 = vmatprep.subr.mxu0 0.0
        %4376 = vmatpush1.msra.mxu0 %v1794
        %4377 = vmatprep.subr.mxu0 0.0
        %4378 = vmatpush1.msra.mxu0 %v1795
        %4379 = vmatprep.subr.mxu0 0.0
        %4380 = vmatpush1.msra.mxu0 %v1796
        %4381 = vmatprep.subr.mxu0 0.0
        %4382 = vmatpush1.msra.mxu0 %v1797
        %4383 = vmatprep.subr.mxu0 0.0
        %4384 = vmatpush1.msra.mxu0 %v1798
        %4385 = vmatprep.subr.mxu0 0.0
        %4386 = vmatpush1.msra.mxu0 0.0
        %4387 = vmatprep.subr.mxu0 0.0
        %4388 = vmatpush1.msra.mxu0 0.0
        %4389 = vmatprep.subr.mxu0 0.0
        %4390 = vmatpush1.msra.mxu0 0.0
        %4391 = vmatprep.subr.mxu0 0.0
        %4392 = vmatpush1.msra.mxu0 0.0
        %4393 = vmatprep.subr.mxu0 0.0
        %4394 = vmatpush1.msra.mxu0 0.0
        %4395 = vmatprep.subr.mxu0 0.0
        %4396 = vmatpush1.msra.mxu0 0.0
        %4397 = vmatprep.subr.mxu0 0.0
        %4398 = vmatpush1.msra.mxu0 0.0
        %4399 = vmatprep.subr.mxu0 0.0
        %4400 = vmatpush1.msra.mxu0 0.0
        %4401 = vmatprep.subr.mxu0 0.0
        %4402 = vmatpush1.msra.mxu0 0.0
        %4403 = vmatprep.subr.mxu0 0.0
        %4404 = vmatpush1.msra.mxu0 0.0
        %4405 = vmatprep.subr.mxu0 0.0
        %4406 = vmatpush1.msra.mxu0 0.0
        %4407 = vmatprep.subr.mxu0 0.0
        %4408 = vmatpush1.msra.mxu0 0.0
        %4409 = vmatprep.subr.mxu0 0.0
        %4410 = vmatpush1.msra.mxu0 0.0
        %4411 = vmatprep.subr.mxu0 0.0
        %4412 = vmatpush1.msra.mxu0 0.0
        %4413 = vmatprep.subr.mxu0 0.0
        %4414 = vmatpush1.msra.mxu0 0.0
        %4415 = vmatprep.subr.mxu0 0.0
        %4416 = vmatpush1.msra.mxu0 0.0
        %4417 = vmatprep.mubr.f32.mxu0 0.0
        %4418 = vmatmul.mubr.f32.gmra.mrb[0].mxu0 %v4352
        %v4419 = vpop.f32.mrb[0].mxu0
        %v4420 = vadd.f32 0.0, %v4419
        %v4421 = vpop.f32.mrb[0].mxu0
        %4422 = vdwg.mxu0
        %v4423 = vpack.c.bf16 %v4352, %v4352
        %4424 = vmatprep.subr.bf16.mxu0 0
        %4425 = vmatpush1.bf16.msra.mxu0 %v4268
        %4426 = vmatprep.subr.bf16.mxu0 0
        %4427 = vmatpush1.bf16.msra.mxu0 %v4269
        %4428 = vmatprep.subr.bf16.mxu0 0
        %4429 = vmatpush1.bf16.msra.mxu0 %v4270
        %4430 = vmatprep.subr.bf16.mxu0 0
        %4431 = vmatpush1.bf16.msra.mxu0 %v4271
        %4432 = vmatprep.subr.bf16.mxu0 0
        %4433 = vmatpush1.bf16.msra.mxu0 %v4272
        %4434 = vmatprep.subr.bf16.mxu0 0
        %4435 = vmatpush1.bf16.msra.mxu0 %v4273
        %4436 = vmatprep.subr.bf16.mxu0 0
        %4437 = vmatpush1.bf16.msra.mxu0 %v4274
        %4438 = vmatprep.subr.bf16.mxu0 0
        %4439 = vmatpush1.bf16.msra.mxu0 %v4275
        %4440 = vmatprep.subr.bf16.mxu0 0
        %4441 = vmatpush1.bf16.msra.mxu0 0
        %4442 = vmatprep.subr.bf16.mxu0 0
        %4443 = vmatpush1.bf16.msra.mxu0 0
        %4444 = vmatprep.subr.bf16.mxu0 0
        %4445 = vmatpush1.bf16.msra.mxu0 0
        %4446 = vmatprep.subr.bf16.mxu0 0
        %4447 = vmatpush1.bf16.msra.mxu0 0
        %4448 = vmatprep.subr.bf16.mxu0 0
        %4449 = vmatpush1.bf16.msra.mxu0 0
        %4450 = vmatprep.subr.bf16.mxu0 0
        %4451 = vmatpush1.bf16.msra.mxu0 0
        %4452 = vmatprep.subr.bf16.mxu0 0
        %4453 = vmatpush1.bf16.msra.mxu0 0
        %4454 = vmatprep.subr.bf16.mxu0 0
        %4455 = vmatpush1.bf16.msra.mxu0 0
        %4456 = vmatprep.mubr.bf16.mxu0 0
        %4457 = vmatmul.mubr.bf16.gmra.mrb[0].mxu0 %v4423
        %v4458 = vpop.f32.mrb[0].mxu0
        %v4459 = vadd.f32 0.0, %v4458
        %v4460 = vpop.f32.mrb[0].mxu0
        %v4461 = vpop.f32.mrb[0].mxu0
        %v4462 = vpop.f32.mrb[0].mxu0
        %4463 = vdwg.mxu0
        %v4464 = vrcp.pop %v4420
        %v4465 = vmul.f32 %v4459, %v4464
        %v4466 = vpack.c.bf16 %v4235, %v4235
        %s4467 = scalar_lea.vmem [#allocation8], 256
        %v4468 = vld [vmem:[%s4467] sm:$0xf]
        %v4469 = vld [vmem:[%s4467 + $0x4] sm:$0xf]
        %v4470 = vld [vmem:[%s4467 + $0x8] sm:$0xf]
        %v4471 = vld [vmem:[%s4467 + $0xc] sm:$0xf]
        %v4472 = vld [vmem:[%s4467 + $0x10] sm:$0xf]
        %v4473 = vld [vmem:[%s4467 + $0x14] sm:$0xf]
        %v4474 = vld [vmem:[%s4467 + $0x18] sm:$0xf]
        %v4475 = vld [vmem:[%s4467 + $0x1c] sm:$0xf]
        %v4476 = vld [vmem:[%s4467 + $0x20] sm:$0xf]
        %v4477 = vld [vmem:[%s4467 + $0x24] sm:$0xf]
        %v4478 = vld [vmem:[%s4467 + $0x28] sm:$0xf]
        %v4479 = vld [vmem:[%s4467 + $0x2c] sm:$0xf]
        %v4480 = vld [vmem:[%s4467 + $0x30] sm:$0xf]
        %v4481 = vld [vmem:[%s4467 + $0x34] sm:$0xf]
        %v4482 = vld [vmem:[%s4467 + $0x38] sm:$0xf]
        %v4483 = vld [vmem:[%s4467 + $0x3c] sm:$0xf]
        %v4484 = vlaneseq
        %v4485 = vshrl.u32 %v4484, 7
        %v4486 = vsub.s32 0, %v4485
        %v4487 = vrot.slane %v2916, %v4486
        %v4504 = vunpack.c.l.b16 %v4468
        %v4505 = vunpack.c.l.b16 %v4469
        %v4506 = vunpack.c.l.b16 %v4470
        %v4507 = vunpack.c.l.b16 %v4471
        %v4508 = vunpack.c.l.b16 %v4472
        %v4509 = vunpack.c.l.b16 %v4473
        %v4510 = vunpack.c.l.b16 %v4474
        %v4511 = vunpack.c.l.b16 %v4475
        %v4512 = vunpack.c.l.b16 %v4476
        %v4513 = vunpack.c.l.b16 %v4477
        %v4514 = vunpack.c.l.b16 %v4478
        %v4515 = vunpack.c.l.b16 %v4479
        %v4516 = vunpack.c.l.b16 %v4480
        %v4517 = vunpack.c.l.b16 %v4481
        %v4518 = vunpack.c.l.b16 %v4482
        %v4519 = vunpack.c.l.b16 %v4483
        %v4520 = vpack.c.b16 %v4505, %v4504
        %v4521 = vpack.c.b16 %v4507, %v4506
        %v4522 = vpack.c.b16 %v4509, %v4508
        %v4523 = vpack.c.b16 %v4511, %v4510
        %v4524 = vpack.c.b16 %v4513, %v4512
        %v4525 = vpack.c.b16 %v4515, %v4514
        %v4526 = vpack.c.b16 %v4517, %v4516
        %v4527 = vpack.c.b16 %v4519, %v4518
        %4536 = vmatprep.subr.bf16.mxu0 0
        %4537 = vmatpush1.bf16.msra.mxu0 %v4520
        %4538 = vmatprep.subr.bf16.mxu0 0
        %4539 = vmatpush1.bf16.msra.mxu0 %v4521
        %4540 = vmatprep.subr.bf16.mxu0 0
        %4541 = vmatpush1.bf16.msra.mxu0 %v4522
        %4542 = vmatprep.subr.bf16.mxu0 0
        %4543 = vmatpush1.bf16.msra.mxu0 %v4523
        %4544 = vmatprep.subr.bf16.mxu0 0
        %4545 = vmatpush1.bf16.msra.mxu0 %v4524
        %4546 = vmatprep.subr.bf16.mxu0 0
        %4547 = vmatpush1.bf16.msra.mxu0 %v4525
        %4548 = vmatprep.subr.bf16.mxu0 0
        %4549 = vmatpush1.bf16.msra.mxu0 %v4526
        %4550 = vmatprep.subr.bf16.mxu0 0
        %4551 = vmatpush1.bf16.msra.mxu0 %v4527
        %4552 = vmatprep.subr.bf16.mxu0 0
        %4553 = vmatpush1.bf16.msra.mxu0 0
        %4554 = vmatprep.subr.bf16.mxu0 0
        %4555 = vmatpush1.bf16.msra.mxu0 0
        %4556 = vmatprep.subr.bf16.mxu0 0
        %4557 = vmatpush1.bf16.msra.mxu0 0
        %4558 = vmatprep.subr.bf16.mxu0 0
        %4559 = vmatpush1.bf16.msra.mxu0 0
        %4560 = vmatprep.subr.bf16.mxu0 0
        %4561 = vmatpush1.bf16.msra.mxu0 0
        %4562 = vmatprep.subr.bf16.mxu0 0
        %4563 = vmatpush1.bf16.msra.mxu0 0
        %4564 = vmatprep.subr.bf16.mxu0 0
        %4565 = vmatpush1.bf16.msra.mxu0 0
        %4566 = vmatprep.subr.bf16.mxu0 0
        %4567 = vmatpush1.bf16.msra.mxu0 0
        %4568 = vmatprep.mubr.bf16.mxu0 0
        %4569 = vmatmul.mubr.bf16.gmra.mrb[0].mxu0 %v4466
        %v4570 = vpop.f32.mrb[0].mxu0
        %v4571 = vadd.f32 %v4487, %v4570
        %v4572 = vpop.f32.mrb[0].mxu0
        %v4573 = vpop.f32.mrb[0].mxu0
        %v4574 = vpop.f32.mrb[0].mxu0
        %4575 = vdwg.mxu0
        %v4576 = vpack.c.bf16 %v4465, %v4465
        %s4577 = scalar_lea.vmem [#allocation8], 320
        %v4578 = vld [vmem:[%s4577] sm:$0xf]
        %v4579 = vld [vmem:[%s4577 + $0x4] sm:$0xf]
        %v4580 = vld [vmem:[%s4577 + $0x8] sm:$0xf]
        %v4581 = vld [vmem:[%s4577 + $0xc] sm:$0xf]
        %v4582 = vld [vmem:[%s4577 + $0x10] sm:$0xf]
        %v4583 = vld [vmem:[%s4577 + $0x14] sm:$0xf]
        %v4584 = vld [vmem:[%s4577 + $0x18] sm:$0xf]
        %v4585 = vld [vmem:[%s4577 + $0x1c] sm:$0xf]
        %v4586 = vld [vmem:[%s4577 + $0x20] sm:$0xf]
        %v4587 = vld [vmem:[%s4577 + $0x24] sm:$0xf]
        %v4588 = vld [vmem:[%s4577 + $0x28] sm:$0xf]
        %v4589 = vld [vmem:[%s4577 + $0x2c] sm:$0xf]
        %v4590 = vld [vmem:[%s4577 + $0x30] sm:$0xf]
        %v4591 = vld [vmem:[%s4577 + $0x34] sm:$0xf]
        %v4592 = vld [vmem:[%s4577 + $0x38] sm:$0xf]
        %v4593 = vld [vmem:[%s4577 + $0x3c] sm:$0xf]
        %v4594 = vlaneseq
        %v4595 = vshrl.u32 %v4594, 7
        %v4596 = vsub.s32 0, %v4595
        %v4597 = vrot.slane %v2917, %v4596
        %v4614 = vunpack.c.l.b16 %v4578
        %v4615 = vunpack.c.l.b16 %v4579
        %v4616 = vunpack.c.l.b16 %v4580
        %v4617 = vunpack.c.l.b16 %v4581
        %v4618 = vunpack.c.l.b16 %v4582
        %v4619 = vunpack.c.l.b16 %v4583
        %v4620 = vunpack.c.l.b16 %v4584
        %v4621 = vunpack.c.l.b16 %v4585
        %v4622 = vunpack.c.l.b16 %v4586
        %v4623 = vunpack.c.l.b16 %v4587
        %v4624 = vunpack.c.l.b16 %v4588
        %v4625 = vunpack.c.l.b16 %v4589
        %v4626 = vunpack.c.l.b16 %v4590
        %v4627 = vunpack.c.l.b16 %v4591
        %v4628 = vunpack.c.l.b16 %v4592
        %v4629 = vunpack.c.l.b16 %v4593
        %v4630 = vpack.c.b16 %v4615, %v4614
        %v4631 = vpack.c.b16 %v4617, %v4616
        %v4632 = vpack.c.b16 %v4619, %v4618
        %v4633 = vpack.c.b16 %v4621, %v4620
        %v4634 = vpack.c.b16 %v4623, %v4622
        %v4635 = vpack.c.b16 %v4625, %v4624
        %v4636 = vpack.c.b16 %v4627, %v4626
        %v4637 = vpack.c.b16 %v4629, %v4628
        %4646 = vmatprep.subr.bf16.mxu0 0
        %4647 = vmatpush1.bf16.msra.mxu0 %v4630
        %4648 = vmatprep.subr.bf16.mxu0 0
        %4649 = vmatpush1.bf16.msra.mxu0 %v4631
        %4650 = vmatprep.subr.bf16.mxu0 0
        %4651 = vmatpush1.bf16.msra.mxu0 %v4632
        %4652 = vmatprep.subr.bf16.mxu0 0
        %4653 = vmatpush1.bf16.msra.mxu0 %v4633
        %4654 = vmatprep.subr.bf16.mxu0 0
        %4655 = vmatpush1.bf16.msra.mxu0 %v4634
        %4656 = vmatprep.subr.bf16.mxu0 0
        %4657 = vmatpush1.bf16.msra.mxu0 %v4635
        %4658 = vmatprep.subr.bf16.mxu0 0
        %4659 = vmatpush1.bf16.msra.mxu0 %v4636
        %4660 = vmatprep.subr.bf16.mxu0 0
        %4661 = vmatpush1.bf16.msra.mxu0 %v4637
        %4662 = vmatprep.subr.bf16.mxu0 0
        %4663 = vmatpush1.bf16.msra.mxu0 0
        %4664 = vmatprep.subr.bf16.mxu0 0
        %4665 = vmatpush1.bf16.msra.mxu0 0
        %4666 = vmatprep.subr.bf16.mxu0 0
        %4667 = vmatpush1.bf16.msra.mxu0 0
        %4668 = vmatprep.subr.bf16.mxu0 0
        %4669 = vmatpush1.bf16.msra.mxu0 0
        %4670 = vmatprep.subr.bf16.mxu0 0
        %4671 = vmatpush1.bf16.msra.mxu0 0
        %4672 = vmatprep.subr.bf16.mxu0 0
        %4673 = vmatpush1.bf16.msra.mxu0 0
        %4674 = vmatprep.subr.bf16.mxu0 0
        %4675 = vmatpush1.bf16.msra.mxu0 0
        %4676 = vmatprep.subr.bf16.mxu0 0
        %4677 = vmatpush1.bf16.msra.mxu0 0
        %4678 = vmatprep.mubr.bf16.mxu0 0
        %4679 = vmatmul.mubr.bf16.gmra.mrb[0].mxu0 %v4576
        %v4680 = vpop.f32.mrb[0].mxu0
        %v4681 = vadd.f32 %v4597, %v4680
        %v4682 = vpop.f32.mrb[0].mxu0
        %v4683 = vpop.f32.mrb[0].mxu0
        %v4684 = vpop.f32.mrb[0].mxu0
        %4685 = vdwg.mxu0
        %v4686 = vmul.f32 %v4571, %v2494
        %v4687 = vadd.f32 %v3557, %v4686
        %v4688 = vmul.f32 %v4681, %v2501
        %4690 = vset.pattern.permute.xlu0 0
        %4691 = vperm.xlu0 %4690, %v2928
        %v4692 = vpop.permute.xlu0 %4691
        %v4694 = vmul.f32 %v4692, %v4688
        %v4695 = vadd.f32 %v4687, %v4694
        %4696 = vadd.xlane.f32.xlu0 %v4695
        %v4697 = vpop.xlane.xlu0 %4696
        %v4698 = vmul.f32 %v4697, %v701
        %v4699 = vsub.f32 %v4695, %v4698
        %v4700 = vmul.f32 %v4699, %v4699
        %4701 = vadd.xlane.f32.xlu0 %v4700
        %v4702 = vpop.xlane.xlu0 %4701
        %v4703 = vmul.f32 %v4702, %v701
        %v4704 = vadd.f32 %v4703, 1e-05
        %v4705 = vrsqrt.pop %v4704
        %v4706 = vmul.f32 %v4699, %v4705
        %v4707 = vlaneseq
        %v4708 = vshrl.u32 %v4707, 7
        %v4709 = vsub.s32 0, %v4708
        %v4710 = vrot.slane %v2922, %v4709
        %v4711 = vmul.f32 %v4706, %v4710
        %v4712 = vlaneseq
        %v4713 = vshrl.u32 %v4712, 7
        %v4714 = vsub.s32 0, %v4713
        %v4715 = vrot.slane %v2923, %v4714
        %v4716 = vadd.f32 %v4711, %v4715
        %v4717 = vpack.c.bf16 %v4716, %v4716
        %s4718 = scalar_lea.vmem [#allocation10], 128
        %v4719 = vld [vmem:[%s4718] sm:$0xff]
        %v4720 = vld [vmem:[%s4718 + $0x8] sm:$0xff]
        %v4721 = vld [vmem:[%s4718 + $0x10] sm:$0xff]
        %v4722 = vld [vmem:[%s4718 + $0x18] sm:$0xff]
        %v4723 = vld [vmem:[%s4718 + $0x20] sm:$0xff]
        %v4724 = vld [vmem:[%s4718 + $0x28] sm:$0xff]
        %v4725 = vld [vmem:[%s4718 + $0x30] sm:$0xff]
        %v4726 = vld [vmem:[%s4718 + $0x38] sm:$0xff]
        %v4727 = vld [vmem:[%s4718 + $0x40] sm:$0xff]
        %v4728 = vld [vmem:[%s4718 + $0x48] sm:$0xff]
        %v4729 = vld [vmem:[%s4718 + $0x50] sm:$0xff]
        %v4730 = vld [vmem:[%s4718 + $0x58] sm:$0xff]
        %v4731 = vld [vmem:[%s4718 + $0x60] sm:$0xff]
        %v4732 = vld [vmem:[%s4718 + $0x68] sm:$0xff]
        %v4733 = vld [vmem:[%s4718 + $0x70] sm:$0xff]
        %v4734 = vld [vmem:[%s4718 + $0x78] sm:$0xff]
        %v4736 = vlaneseq
        %v4737 = vshrl.u32 %v4736, 7
        %v4738 = vsub.s32 0, %v4737
        %v4739 = vrot.slane %v2925, %v4738
        %v4740 = vlaneseq
        %v4741 = vshrl.u32 %v4740, 7
        %v4742 = vsub.s32 1, %v4741
        %v4743 = vrot.slane %v2925, %v4742
        %v4762 = vunpack.c.l.b16 %v4719
        %v4763 = vunpack.c.h.b16 %v4719
        %v4764 = vunpack.c.l.b16 %v4720
        %v4765 = vunpack.c.h.b16 %v4720
        %v4766 = vunpack.c.l.b16 %v4721
        %v4767 = vunpack.c.h.b16 %v4721
        %v4768 = vunpack.c.l.b16 %v4722
        %v4769 = vunpack.c.h.b16 %v4722
        %v4770 = vunpack.c.l.b16 %v4723
        %v4771 = vunpack.c.h.b16 %v4723
        %v4772 = vunpack.c.l.b16 %v4724
        %v4773 = vunpack.c.h.b16 %v4724
        %v4774 = vunpack.c.l.b16 %v4725
        %v4775 = vunpack.c.h.b16 %v4725
        %v4776 = vunpack.c.l.b16 %v4726
        %v4777 = vunpack.c.h.b16 %v4726
        %v4778 = vunpack.c.l.b16 %v4727
        %v4779 = vunpack.c.h.b16 %v4727
        %v4780 = vunpack.c.l.b16 %v4728
        %v4781 = vunpack.c.h.b16 %v4728
        %v4782 = vunpack.c.l.b16 %v4729
        %v4783 = vunpack.c.h.b16 %v4729
        %v4784 = vunpack.c.l.b16 %v4730
        %v4785 = vunpack.c.h.b16 %v4730
        %v4786 = vunpack.c.l.b16 %v4731
        %v4787 = vunpack.c.h.b16 %v4731
        %v4788 = vunpack.c.l.b16 %v4732
        %v4789 = vunpack.c.h.b16 %v4732
        %v4790 = vunpack.c.l.b16 %v4733
        %v4791 = vunpack.c.h.b16 %v4733
        %v4792 = vunpack.c.l.b16 %v4734
        %v4793 = vunpack.c.h.b16 %v4734
        %v4794 = vpack.c.b16 %v4764, %v4762
        %v4795 = vpack.c.b16 %v4765, %v4763
        %v4796 = vpack.c.b16 %v4768, %v4766
        %v4797 = vpack.c.b16 %v4769, %v4767
        %v4798 = vpack.c.b16 %v4772, %v4770
        %v4799 = vpack.c.b16 %v4773, %v4771
        %v4800 = vpack.c.b16 %v4776, %v4774
        %v4801 = vpack.c.b16 %v4777, %v4775
        %v4802 = vpack.c.b16 %v4780, %v4778
        %v4803 = vpack.c.b16 %v4781, %v4779
        %v4804 = vpack.c.b16 %v4784, %v4782
        %v4805 = vpack.c.b16 %v4785, %v4783
        %v4806 = vpack.c.b16 %v4788, %v4786
        %v4807 = vpack.c.b16 %v4789, %v4787
        %v4808 = vpack.c.b16 %v4792, %v4790
        %v4809 = vpack.c.b16 %v4793, %v4791
        %4826 = vmatprep.subr.bf16.mxu0 %v4795
        %4827 = vmatpush1.bf16.msra.mxu0 %v4794
        %4828 = vmatprep.subr.bf16.mxu0 %v4797
        %4829 = vmatpush1.bf16.msra.mxu0 %v4796
        %4830 = vmatprep.subr.bf16.mxu0 %v4799
        %4831 = vmatpush1.bf16.msra.mxu0 %v4798
        %4832 = vmatprep.subr.bf16.mxu0 %v4801
        %4833 = vmatpush1.bf16.msra.mxu0 %v4800
        %4834 = vmatprep.subr.bf16.mxu0 %v4803
        %4835 = vmatpush1.bf16.msra.mxu0 %v4802
        %4836 = vmatprep.subr.bf16.mxu0 %v4805
        %4837 = vmatpush1.bf16.msra.mxu0 %v4804
        %4838 = vmatprep.subr.bf16.mxu0 %v4807
        %4839 = vmatpush1.bf16.msra.mxu0 %v4806
        %4840 = vmatprep.subr.bf16.mxu0 %v4809
        %4841 = vmatpush1.bf16.msra.mxu0 %v4808
        %4842 = vmatprep.subr.bf16.mxu0 0
        %4843 = vmatpush1.bf16.msra.mxu0 0
        %4844 = vmatprep.subr.bf16.mxu0 0
        %4845 = vmatpush1.bf16.msra.mxu0 0
        %4846 = vmatprep.subr.bf16.mxu0 0
        %4847 = vmatpush1.bf16.msra.mxu0 0
        %4848 = vmatprep.subr.bf16.mxu0 0
        %4849 = vmatpush1.bf16.msra.mxu0 0
        %4850 = vmatprep.subr.bf16.mxu0 0
        %4851 = vmatpush1.bf16.msra.mxu0 0
        %4852 = vmatprep.subr.bf16.mxu0 0
        %4853 = vmatpush1.bf16.msra.mxu0 0
        %4854 = vmatprep.subr.bf16.mxu0 0
        %4855 = vmatpush1.bf16.msra.mxu0 0
        %4856 = vmatprep.subr.bf16.mxu0 0
        %4857 = vmatpush1.bf16.msra.mxu0 0
        %4858 = vmatprep.mubr.bf16.mxu0 0
        %4859 = vmatmul.mubr.bf16.gmra.mrb[0].mxu0 %v4717
        %v4860 = vpop.f32.mrb[0].mxu0
        %v4861 = vadd.f32 %v4739, %v4860
        %v4862 = vpop.f32.mrb[0].mxu0
        %v4863 = vadd.f32 %v4743, %v4862
        %v4864 = vpop.f32.mrb[0].mxu0
        %v4865 = vpop.f32.mrb[0].mxu0
        %4866 = vdwg.mxu0
        %v4867 = vmul.f32 %v4861, 0.5
        %v4868 = vmul.f32 %v4863, 0.5
        %v4869 = vmul.f32 %v4861, 0.70710677
        %v4870 = vmul.f32 %v4863, 0.70710677
        %vm4871 = vcmp.ge.f32.partialorder %v4869, 0.0
        %vm4872 = vcmp.ge.f32.partialorder %v4870, 0.0
        %v4873 = vsel %vm4871, 1.0, -1.0
        %v4874 = vsel %vm4872, 1.0, -1.0
        %v4875 = vand.u32 2147483647, %v4869
        %v4876 = vand.u32 2147483647, %v4870
        %v4877 = vmul.f32 %v4875, 0.3275911
        %v4878 = vmul.f32 %v4876, 0.3275911
        %v4879 = vadd.f32 %v4877, 1.0
        %v4880 = vadd.f32 %v4878, 1.0
        %v4881 = vrcp.pop %v4879
        %v4882 = vmul.f32 1.0, %v4881
        %v4883 = vrcp.pop %v4880
        %v4884 = vmul.f32 1.0, %v4883
        %v4885 = vmul.f32 %v4882, 1.0614054
        %v4886 = vmul.f32 %v4884, 1.0614054
        %v4887 = vadd.f32 %v4885, -1.4531521
        %v4888 = vadd.f32 %v4886, -1.4531521
        %v4889 = vmul.f32 %v4887, %v4882
        %v4890 = vmul.f32 %v4888, %v4884
        %v4891 = vadd.f32 %v4889, 1.4214138
        %v4892 = vadd.f32 %v4890, 1.4214138
        %v4893 = vmul.f32 %v4891, %v4882
        %v4894 = vmul.f32 %v4892, %v4884
        %v4895 = vadd.f32 %v4893, -0.28449672
        %v4896 = vadd.f32 %v4894, -0.28449672
        %v4897 = vmul.f32 %v4895, %v4882
        %v4898 = vmul.f32 %v4896, %v4884
        %v4899 = vadd.f32 %v4897, 0.2548296
        %v4900 = vadd.f32 %v4898, 0.2548296
        %v4901 = vmul.f32 %v4899, %v4882
        %v4902 = vmul.f32 %v4900, %v4884
        %v4903 = vsub.f32 0.0, %v4875
        %v4904 = vsub.f32 0.0, %v4876
        %v4905 = vmul.f32 %v4903, %v4875
        %v4906 = vmul.f32 %v4904, %v4876
        %v4907 = vmul.f32 %v4905, 1.442695
        %v4908 = vpow.pop %v4907
        %v4909 = vmul.f32 %v4906, 1.442695
        %v4910 = vpow.pop %v4909
        %v4911 = vmul.f32 %v4901, %v4908
        %v4912 = vmul.f32 %v4902, %v4910
        %v4913 = vsub.f32 1.0, %v4911
        %v4914 = vsub.f32 1.0, %v4912
        %v4915 = vmul.f32 %v4873, %v4913
        %v4916 = vmul.f32 %v4874, %v4914
        %v4917 = vadd.f32 %v4915, 1.0
        %v4918 = vadd.f32 %v4916, 1.0
        %v4919 = vmul.f32 %v4867, %v4917
        %v4920 = vmul.f32 %v4868, %v4918
        %v4921 = vpack.c.bf16 %v4919, %v4919
        %v4922 = vpack.c.bf16 %v4920, %v4920
        %s4923 = scalar_lea.vmem [#allocation11], 128
        %v4924 = vld [vmem:[%s4923] sm:$0xf]
        %v4925 = vld [vmem:[%s4923 + $0x4] sm:$0xf]
        %v4926 = vld [vmem:[%s4923 + $0x8] sm:$0xf]
        %v4927 = vld [vmem:[%s4923 + $0xc] sm:$0xf]
        %v4928 = vld [vmem:[%s4923 + $0x10] sm:$0xf]
        %v4929 = vld [vmem:[%s4923 + $0x14] sm:$0xf]
        %v4930 = vld [vmem:[%s4923 + $0x18] sm:$0xf]
        %v4931 = vld [vmem:[%s4923 + $0x1c] sm:$0xf]
        %v4932 = vld [vmem:[%s4923 + $0x20] sm:$0xf]
        %v4933 = vld [vmem:[%s4923 + $0x24] sm:$0xf]
        %v4934 = vld [vmem:[%s4923 + $0x28] sm:$0xf]
        %v4935 = vld [vmem:[%s4923 + $0x2c] sm:$0xf]
        %v4936 = vld [vmem:[%s4923 + $0x30] sm:$0xf]
        %v4937 = vld [vmem:[%s4923 + $0x34] sm:$0xf]
        %v4938 = vld [vmem:[%s4923 + $0x38] sm:$0xf]
        %v4939 = vld [vmem:[%s4923 + $0x3c] sm:$0xf]
        %v4940 = vld [vmem:[%s4923 + $0x40] sm:$0xf]
        %v4941 = vld [vmem:[%s4923 + $0x44] sm:$0xf]
        %v4942 = vld [vmem:[%s4923 + $0x48] sm:$0xf]
        %v4943 = vld [vmem:[%s4923 + $0x4c] sm:$0xf]
        %v4944 = vld [vmem:[%s4923 + $0x50] sm:$0xf]
        %v4945 = vld [vmem:[%s4923 + $0x54] sm:$0xf]
        %v4946 = vld [vmem:[%s4923 + $0x58] sm:$0xf]
        %v4947 = vld [vmem:[%s4923 + $0x5c] sm:$0xf]
        %v4948 = vld [vmem:[%s4923 + $0x60] sm:$0xf]
        %v4949 = vld [vmem:[%s4923 + $0x64] sm:$0xf]
        %v4950 = vld [vmem:[%s4923 + $0x68] sm:$0xf]
        %v4951 = vld [vmem:[%s4923 + $0x6c] sm:$0xf]
        %v4952 = vld [vmem:[%s4923 + $0x70] sm:$0xf]
        %v4953 = vld [vmem:[%s4923 + $0x74] sm:$0xf]
        %v4954 = vld [vmem:[%s4923 + $0x78] sm:$0xf]
        %v4955 = vld [vmem:[%s4923 + $0x7c] sm:$0xf]
        %v4988 = vunpack.c.l.b16 %v4924
        %v4989 = vunpack.c.l.b16 %v4925
        %v4990 = vunpack.c.l.b16 %v4926
        %v4991 = vunpack.c.l.b16 %v4927
        %v4992 = vunpack.c.l.b16 %v4928
        %v4993 = vunpack.c.l.b16 %v4929
        %v4994 = vunpack.c.l.b16 %v4930
        %v4995 = vunpack.c.l.b16 %v4931
        %v4996 = vunpack.c.l.b16 %v4932
        %v4997 = vunpack.c.l.b16 %v4933
        %v4998 = vunpack.c.l.b16 %v4934
        %v4999 = vunpack.c.l.b16 %v4935
        %v5000 = vunpack.c.l.b16 %v4936
        %v5001 = vunpack.c.l.b16 %v4937
        %v5002 = vunpack.c.l.b16 %v4938
        %v5003 = vunpack.c.l.b16 %v4939
        %v5004 = vunpack.c.l.b16 %v4940
        %v5005 = vunpack.c.l.b16 %v4941
        %v5006 = vunpack.c.l.b16 %v4942
        %v5007 = vunpack.c.l.b16 %v4943
        %v5008 = vunpack.c.l.b16 %v4944
        %v5009 = vunpack.c.l.b16 %v4945
        %v5010 = vunpack.c.l.b16 %v4946
        %v5011 = vunpack.c.l.b16 %v4947
        %v5012 = vunpack.c.l.b16 %v4948
        %v5013 = vunpack.c.l.b16 %v4949
        %v5014 = vunpack.c.l.b16 %v4950
        %v5015 = vunpack.c.l.b16 %v4951
        %v5016 = vunpack.c.l.b16 %v4952
        %v5017 = vunpack.c.l.b16 %v4953
        %v5018 = vunpack.c.l.b16 %v4954
        %v5019 = vunpack.c.l.b16 %v4955
        %v5020 = vpack.c.b16 %v4989, %v4988
        %v5021 = vpack.c.b16 %v4991, %v4990
        %v5022 = vpack.c.b16 %v4993, %v4992
        %v5023 = vpack.c.b16 %v4995, %v4994
        %v5024 = vpack.c.b16 %v4997, %v4996
        %v5025 = vpack.c.b16 %v4999, %v4998
        %v5026 = vpack.c.b16 %v5001, %v5000
        %v5027 = vpack.c.b16 %v5003, %v5002
        %v5028 = vpack.c.b16 %v5005, %v5004
        %v5029 = vpack.c.b16 %v5007, %v5006
        %v5030 = vpack.c.b16 %v5009, %v5008
        %v5031 = vpack.c.b16 %v5011, %v5010
        %v5032 = vpack.c.b16 %v5013, %v5012
        %v5033 = vpack.c.b16 %v5015, %v5014
        %v5034 = vpack.c.b16 %v5017, %v5016
        %v5035 = vpack.c.b16 %v5019, %v5018
        %5052 = vmatprep.subr.bf16.mxu0 0
        %5053 = vmatpush1.bf16.msra.mxu0 %v5020
        %5054 = vmatprep.subr.bf16.mxu0 0
        %5055 = vmatpush1.bf16.msra.mxu0 %v5021
        %5056 = vmatprep.subr.bf16.mxu0 0
        %5057 = vmatpush1.bf16.msra.mxu0 %v5022
        %5058 = vmatprep.subr.bf16.mxu0 0
        %5059 = vmatpush1.bf16.msra.mxu0 %v5023
        %5060 = vmatprep.subr.bf16.mxu0 0
        %5061 = vmatpush1.bf16.msra.mxu0 %v5024
        %5062 = vmatprep.subr.bf16.mxu0 0
        %5063 = vmatpush1.bf16.msra.mxu0 %v5025
        %5064 = vmatprep.subr.bf16.mxu0 0
        %5065 = vmatpush1.bf16.msra.mxu0 %v5026
        %5066 = vmatprep.subr.bf16.mxu0 0
        %5067 = vmatpush1.bf16.msra.mxu0 %v5027
        %5068 = vmatprep.subr.bf16.mxu0 0
        %5069 = vmatpush1.bf16.msra.mxu0 %v5028
        %5070 = vmatprep.subr.bf16.mxu0 0
        %5071 = vmatpush1.bf16.msra.mxu0 %v5029
        %5072 = vmatprep.subr.bf16.mxu0 0
        %5073 = vmatpush1.bf16.msra.mxu0 %v5030
        %5074 = vmatprep.subr.bf16.mxu0 0
        %5075 = vmatpush1.bf16.msra.mxu0 %v5031
        %5076 = vmatprep.subr.bf16.mxu0 0
        %5077 = vmatpush1.bf16.msra.mxu0 %v5032
        %5078 = vmatprep.subr.bf16.mxu0 0
        %5079 = vmatpush1.bf16.msra.mxu0 %v5033
        %5080 = vmatprep.subr.bf16.mxu0 0
        %5081 = vmatpush1.bf16.msra.mxu0 %v5034
        %5082 = vmatprep.subr.bf16.mxu0 0
        %5083 = vmatpush1.bf16.msra.mxu0 %v5035
        %5084 = vmatprep.mubr.bf16.mxu0 %v4922
        %5085 = vmatmul.mubr.bf16.gmra.mrb[0].mxu0 %v4921
        %v5086 = vpop.f32.mrb[0].mxu0
        %v5087 = vadd.f32 0.0, %v5086
        %v5088 = vpop.f32.mrb[0].mxu0
        %v5089 = vpop.f32.mrb[0].mxu0
        %v5090 = vpop.f32.mrb[0].mxu0
        %5091 = vdwg.mxu0
        %v5092 = vadd.f32 %v4695, %v5087
        %v5093 = vlaneseq
        %v5094 = vshrl.u32 %v5093, 7
        %v5095 = vsub.s32 0, %v5094
        %v5096 = vrot.slane %v2926, %v5095
        %v5097 = vadd.f32 %v5092, %v5096
        %5098 = vst [vmem:[%s657] sm:$0xff] %v5097
        %s5099 = sand.u32 %s388, 1
        %s5100 = scalar_lea.sflag [#allocation4], %s5099
        %s5101 = sand.u32 %s388, 1
        %s5102 = smul.addr %s5101, 8
        %s5103 = scalar_lea.vmem [#allocation14], %s5102
        // Predicated region
        $region109: #{encoder_forward.1} parent=79 // pred_check
          %p5104 = pneg %p398
        $region110: #{encoder_forward.1} parent=79 // pred_check_branch
          %5106 = sbr.rel (%p5104) target = $region112
        $region111: #{encoder_forward.1} parent=79 // pred_region
          %s5108 = ssub.s32 128, 128
          %5109 = vsyncadd %s5100, %s5108
          %s5110 = smul.addr %s35, 128
          %s5111 = scalar_lea.hbm %s15, %s5110
          %s5113 = sshll.u32 %s5103, 4
          %s5114 = int_to_ptr.vmem [resolvable:$true] %s5113
          %5116 = dma.vmem_to_hbm [thread:$0]  %s5114, 128, %s5111, %s5100
        $region112: #{encoder_forward.1} parent=79 // pred_fallthru
          _
      $region80: #{encoder_forward.1} parent=5 // pred_fallthru
        _
      %p5117 = scmp.le.s32.totalorder 2, %s30
      // Predicated region
      $region113: #{encoder_forward.1} parent=5 // pred_check
        %p5118 = pneg %p5117
      $region114: #{encoder_forward.1} parent=5 // pred_check_branch
        %5120 = sbr.rel (%p5118) target = $region116
      $region115: #{encoder_forward.1} parent=5 // pred_region
        %s5121 = ssub.s32 %s30, 2
        // Predicated region
        $region117: #{encoder_forward.1} parent=115 // pred_check
          %p5122 = pneg %p404
        $region118: #{encoder_forward.1} parent=115 // pred_check_branch
          %5124 = sbr.rel (%p5122) target = $region120
        $region119: #{encoder_forward.1} parent=115 // pred_region
          %s5125 = sand.u32 %s389, 1
          %s5126 = scalar_lea.sflag [#allocation4], %s5125
          %s5127 = sand.u32 %s389, 1
          %s5128 = smul.addr %s5127, 8
          %s5129 = scalar_lea.vmem [#allocation14], %s5128
          %5130 = dma.done %s5126, 128
        $region120: #{encoder_forward.1} parent=115 // pred_fallthru
          _
      $region116: #{encoder_forward.1} parent=5 // pred_fallthru
        _
    $region6: #{encoder_forward.1} parent=1 // loop_footer
      %s34 = sadd.s32 1, %s30
    $region7: #{encoder_forward.1} parent=1 // loop_footer_branch
      %29 = sbr.rel target = $region3
    $region8: #{encoder_forward.1} parent=1 // loop_exit
      _
    %5131 = vsyncpa [#allocation3], 1
    %s5132 = scalar_lea.sflag [#allocation3], 1
    %5133 = vsyncpa %s5132, 1
    %5134 = vsyncpa [#allocation6], 1
    %5135 = vsyncpa [#allocation9], 1
    %5136 = vsyncpa [#allocation12], 1
    %5137 = vsyncpa [#allocation4], 1
    %s5138 = scalar_lea.sflag [#allocation4], 1
    %5139 = vsyncpa %s5138, 1

</llo_original>
